<compile_context>
chip_gen: v7x
topology: tpu7x:2x2x1
jax: 0.10.0
libtpu: 0.0.40
codegen_flags: <defaults>
</compile_context>

<pallas_src>
import math

import jax
import jax.numpy as jnp
from jax.experimental import pallas as pl
from jax.experimental.pallas import tpu as pltpu

SIZE = 784        # flattened input size (28*28)
HID = 400         # fc1 / fc3 hidden width
LAT = 20          # latent dim

SIZE_P = 896      # 784 padded to a multiple of 128 (output side only)
HID_P = 512       # 400 padded to a multiple of 128
LAT_P = 128       # latent dim padded to one full vreg lane width
STAT_P = 2 * LAT_P  # packed [mu(0:128) | logvar(128:256)] slab width


def _round_up(n, m):
    return ((n + m - 1) // m) * m


def _choose_tiling(B, max_tb):
    """Balanced batch tiling: TB multiple of 16, avoid pathological tail
    padding, and prefer an even grid (>=2) so v7x's two TCs both get work."""
    num_tiles = max(1, math.ceil(B / max_tb))
    if num_tiles == 1:
        if B > 16:                       # enough real rows for two tiles
            num_tiles = 2
    elif num_tiles % 2 == 1:
        num_tiles += 1
    TB = _round_up(math.ceil(B / num_tiles), 16)
    B_pad = TB * num_tiles
    return TB, num_tiles, B_pad


def vae_kernel(x_ref, eps_ref,
               w1_ref, b1_ref,
               wh_ref, bh_ref,
               w3_ref, b3_ref,
               w4_ref, b4_ref,
               recon_ref, stats_ref):
    # ---- encode: h1 = relu(fc1(x)) --------------------------------------
    # x arrives as f32 (TB, 784); cast to bf16 in-kernel (K=784 is MXU-legal).
    x = x_ref[...].astype(jnp.bfloat16)
    h1 = jnp.dot(x, w1_ref[...], preferred_element_type=jnp.float32) + b1_ref[...]
    h1 = jnp.maximum(h1, 0.0)                                        # (TB, HID_P) f32

    # ---- fused mu/logvar heads, lane-dense slab --------------------------
    # mu in lanes 0:128, logvar in lanes 128:256 (only lanes 0:20 of each half
    # carry real weights; the rest are zero).
    stats = jnp.dot(h1.astype(jnp.bfloat16), wh_ref[...],
                    preferred_element_type=jnp.float32) + bh_ref[...]  # (TB, 256)
    stats_ref[...] = stats

    mu = stats[:, :LAT_P]        # (TB, 128) — split at a vreg boundary (free)
    logvar = stats[:, LAT_P:]    # (TB, 128)

    # ---- reparameterize: z = mu + eps * exp(0.5 * logvar) ----------------
    # Padded lanes stay exactly 0:  0 + 0 * exp(0.5*0) = 0.
    z = mu + eps_ref[...] * jnp.exp(0.5 * logvar)                    # (TB, 128) f32

    # ---- decode: h3 = relu(fc3(z)); recon = sigmoid(fc4(h3)) --------------
    # W3 is (128, HID_P) with rows 20:127 zeroed -> aligned K=128 matmul.
    h3 = jnp.dot(z.astype(jnp.bfloat16), w3_ref[...],
                 preferred_element_type=jnp.float32) + b3_ref[...]
    h3 = jnp.maximum(h3, 0.0)                                        # (TB, HID_P) f32
    logits = jnp.dot(h3.astype(jnp.bfloat16), w4_ref[...],
                     preferred_element_type=jnp.float32) + b4_ref[...]
    recon_ref[...] = jax.nn.sigmoid(logits).astype(recon_ref.dtype)  # (TB, SIZE_P)


def vae_forward(x_nchw, eps, kernel_params, *, max_tb=1024,
                recon_dtype=jnp.bfloat16):
    """x_nchw: (B, C, H, W) with C*H*W == SIZE. eps: (B, LAT) standard normal.
    kernel_params: output of pack_params()."""
    B = x_nchw.shape[0]
    x = x_nchw.reshape(B, -1).astype(jnp.float32)                    # flatten(1, -1)
    assert x.shape[1] == SIZE

    TB, num_tiles, B_pad = _choose_tiling(B, max_tb)

    # Batch pad only; feature pad and bf16 cast happen inside the kernel.
    x_p = jnp.pad(x, ((0, B_pad - B), (0, 0)))
    # eps zero-padded in lanes 20:128 so padded z lanes stay exactly 0.
    eps_p = jnp.pad(eps.astype(jnp.float32), ((0, B_pad - B), (0, LAT_P - LAT)))

    batch_map = lambda i: (i, 0)   # tiled along batch
    pinned = lambda i: (0, 0)      # weights resident across all grid steps

    in_specs = [
        pl.BlockSpec((TB, SIZE), batch_map),      # x (full 784-wide block)
        pl.BlockSpec((TB, LAT_P), batch_map),     # eps (lane-dense 128)
    ] + [pl.BlockSpec(p.shape, pinned) for p in kernel_params]

    out_specs = (
        pl.BlockSpec((TB, SIZE_P), batch_map),    # recon (lane-dense, padded)
        pl.BlockSpec((TB, STAT_P), batch_map),    # [mu | logvar] slab
    )

    recon_p, stats_p = pl.pallas_call(
        vae_kernel,
        out_shape=(
            jax.ShapeDtypeStruct((B_pad, SIZE_P), recon_dtype),
            jax.ShapeDtypeStruct((B_pad, STAT_P), jnp.float32),
        ),
        grid=(num_tiles,),
        in_specs=in_specs,
        out_specs=out_specs,
        compiler_params=pltpu.CompilerParams(
            dimension_semantics=("parallel",),
            vmem_limit_bytes=48 << 20,
        ),
    )(x_p, eps_p, *kernel_params)

    recon = recon_p[:B, :SIZE]
    mu = stats_p[:B, :LAT]
    logvar = stats_p[:B, LAT_P:LAT_P + LAT]
    return recon, mu, logvar


def init_params(key):
    """PyTorch nn.Linear-like init: U(-1/sqrt(fan_in), 1/sqrt(fan_in)).
    Weights stored transposed as (in, out); biases as (1, out). f32 (reference)."""
    def linear(k, fan_in, fan_out):
        kw, kb = jax.random.split(k)
        bound = 1.0 / math.sqrt(fan_in)
        w = jax.random.uniform(kw, (fan_in, fan_out), jnp.float32, -bound, bound)
        b = jax.random.uniform(kb, (1, fan_out), jnp.float32, -bound, bound)
        return w, b

    k1, k21, k22, k3, k4 = jax.random.split(key, 5)
    w1, b1 = linear(k1, SIZE, HID)
    w21, b21 = linear(k21, HID, LAT)
    w22, b22 = linear(k22, HID, LAT)
    w3, b3 = linear(k3, LAT, HID)
    w4, b4 = linear(k4, HID, SIZE)
    return (w1, b1, w21, b21, w22, b22, w3, b3, w4, b4)


def pack_params(params_f32):
    """Zero-pad to lane-friendly shapes, fuse mu/logvar heads into a lane-dense
    (HID_P, 256) weight, cast weights to bf16 (biases stay f32)."""
    w1, b1, w21, b21, w22, b22, w3, b3, w4, b4 = params_f32

    def pad2(a, r, c):
        return jnp.pad(a, ((0, r - a.shape[0]), (0, c - a.shape[1])))

    W1 = pad2(w1, SIZE, HID_P).astype(jnp.bfloat16)            # (784, 512)
    B1 = pad2(b1, 1, HID_P)                                    # f32
    WH = jnp.concatenate([pad2(w21, HID, LAT_P),
                          pad2(w22, HID, LAT_P)], axis=1)      # (400, 256)
    WH = pad2(WH, HID_P, STAT_P).astype(jnp.bfloat16)          # (512, 256)
    BH = jnp.concatenate([pad2(b21, 1, LAT_P),
                          pad2(b22, 1, LAT_P)], axis=1)        # (1, 256) f32
    W3 = pad2(w3, LAT_P, HID_P).astype(jnp.bfloat16)           # (128, 512), rows 20: zero
    B3 = pad2(b3, 1, HID_P)                                    # f32
    W4 = pad2(w4, HID_P, SIZE_P).astype(jnp.bfloat16)          # (512, 896)
    B4 = pad2(b4, 1, SIZE_P)                                   # f32
    return (W1, B1, WH, BH, W3, B3, W4, B4)


def vae_reference(x_nchw, eps, params_f32):
    """Pure-JAX reference with matching bf16 matmul inputs / f32 accumulation."""
    w1, b1, w21, b21, w22, b22, w3, b3, w4, b4 = params_f32
    x = x_nchw.reshape(x_nchw.shape[0], -1).astype(jnp.float32)

    def mm(a, w):
        a16 = a.astype(jnp.bfloat16).astype(jnp.float32)
        w16 = w.astype(jnp.bfloat16).astype(jnp.float32)
        return a16 @ w16

    h1 = jax.nn.relu(mm(x, w1) + b1)
    mu = mm(h1, w21) + b21
    logvar = mm(h1, w22) + b22
    z = mu + eps * jnp.exp(0.5 * logvar)
    h3 = jax.nn.relu(mm(z, w3) + b3)
    recon = jax.nn.sigmoid(mm(h3, w4) + b4)
    return recon, mu, logvar


if __name__ == "__main__":
    key = jax.random.PRNGKey(0)
    kx, keps, kp = jax.random.split(key, 3)

    B = 2
    x = jax.random.normal(kx, (B, 1, 28, 28), jnp.float32)    # NCHW, flattens to 784
    # eps is an explicit input (PyTorch uses torch.randn_like inside forward);
    # it could also be drawn in-kernel via pltpu.prng_random_bits if desired.
    eps = jax.random.normal(keps, (B, LAT), jnp.float32)

    params_f32 = init_params(kp)
    kernel_params = pack_params(params_f32)

    recon, mu, logvar = vae_forward(x, eps, kernel_params)
    jax.block_until_ready((recon, mu, logvar))

    r_ref, mu_ref, lv_ref = vae_reference(x, eps, params_f32)
    assert recon.shape == (B, SIZE) and mu.shape == (B, LAT) and logvar.shape == (B, LAT)
    assert jnp.allclose(mu, mu_ref, atol=5e-3, rtol=5e-3)
    assert jnp.allclose(logvar, lv_ref, atol=5e-3, rtol=5e-3)
    # recon is stored in bf16 (halves the dominant HBM write); tolerance covers
    # the ~2^-9 bf16 quantization of sigmoid outputs on top of matmul roundoff.
    assert jnp.allclose(recon.astype(jnp.float32), r_ref, atol=1e-2, rtol=1e-2)

    print("KERNEL_OK")
</pallas_src>

<mosaic_0001>
module attributes {stable_mosaic.version = 11 : i64} {
  func.func @vae_kernel(%arg0: i32, %arg1: memref<16x784xf32, #tpu.memory_space<vmem>>, %arg2: memref<16x128xf32, #tpu.memory_space<vmem>>, %arg3: memref<784x512xbf16, #tpu.memory_space<vmem>>, %arg4: memref<1x512xf32, #tpu.memory_space<vmem>>, %arg5: memref<512x256xbf16, #tpu.memory_space<vmem>>, %arg6: memref<1x256xf32, #tpu.memory_space<vmem>>, %arg7: memref<128x512xbf16, #tpu.memory_space<vmem>>, %arg8: memref<1x512xf32, #tpu.memory_space<vmem>>, %arg9: memref<512x896xbf16, #tpu.memory_space<vmem>>, %arg10: memref<1x896xf32, #tpu.memory_space<vmem>>, %arg11: memref<16x896xbf16, #tpu.memory_space<vmem>>, %arg12: memref<16x256xf32, #tpu.memory_space<vmem>>) attributes {dimension_semantics = [#tpu.dimension_semantics<parallel>], iteration_bounds = array<i64: 1>, scalar_prefetch = 0 : i64, scratch_operands = 0 : i64, tpu.core_type = #tpu.core_type<tc>, window_params = [{transform_indices = @transform_0, window_bounds = array<i64: 16, 784>}, {transform_indices = @transform_1, window_bounds = array<i64: 16, 128>}, {pipeline_mode = #tpu.pipeline_mode<synchronous>, transform_indices = @transform_2, window_bounds = array<i64: 784, 512>}, {pipeline_mode = #tpu.pipeline_mode<synchronous>, transform_indices = @transform_3, window_bounds = array<i64: 1, 512>}, {pipeline_mode = #tpu.pipeline_mode<synchronous>, transform_indices = @transform_4, window_bounds = array<i64: 512, 256>}, {pipeline_mode = #tpu.pipeline_mode<synchronous>, transform_indices = @transform_5, window_bounds = array<i64: 1, 256>}, {pipeline_mode = #tpu.pipeline_mode<synchronous>, transform_indices = @transform_6, window_bounds = array<i64: 128, 512>}, {pipeline_mode = #tpu.pipeline_mode<synchronous>, transform_indices = @transform_7, window_bounds = array<i64: 1, 512>}, {pipeline_mode = #tpu.pipeline_mode<synchronous>, transform_indices = @transform_8, window_bounds = array<i64: 512, 896>}, {pipeline_mode = #tpu.pipeline_mode<synchronous>, transform_indices = @transform_9, window_bounds = array<i64: 1, 896>}, {transform_indices = @transform_10, window_bounds = array<i64: 16, 896>}, {transform_indices = @transform_11, window_bounds = array<i64: 16, 256>}]} {
    %c0 = arith.constant 0 : index
    %c0_0 = arith.constant 0 : index
    %0 = vector.load %arg1[%c0, %c0_0] : memref<16x784xf32, #tpu.memory_space<vmem>>, vector<16x784xf32>
    %1 = arith.truncf %0 : vector<16x784xf32> to vector<16x784xbf16>
    %c0_1 = arith.constant 0 : index
    %c0_2 = arith.constant 0 : index
    %2 = vector.load %arg3[%c0_1, %c0_2] : memref<784x512xbf16, #tpu.memory_space<vmem>>, vector<784x512xbf16>
    %cst = arith.constant dense<0.000000e+00> : vector<16x512xf32>
    %3 = tpu.matmul %1, %2, %cst {dimension_numbers = #tpu.dot_dimension_numbers<[1], [0], [0], [1], [0, 0, 1, 1], [], []>} : vector<16x784xbf16>, vector<784x512xbf16>, vector<16x512xf32> -> vector<16x512xf32>
    %c0_3 = arith.constant 0 : index
    %c0_4 = arith.constant 0 : index
    %4 = vector.load %arg4[%c0_3, %c0_4] : memref<1x512xf32, #tpu.memory_space<vmem>>, vector<1x512xf32>
    %5 = vector.broadcast %4 : vector<1x512xf32> to vector<16x512xf32>
    %6 = arith.addf %3, %5 : vector<16x512xf32>
    %cst_5 = arith.constant 0.000000e+00 : f32
    %7 = vector.broadcast %cst_5 : f32 to vector<16x512xf32>
    %8 = arith.maximumf %6, %7 : vector<16x512xf32>
    %9 = arith.truncf %8 : vector<16x512xf32> to vector<16x512xbf16>
    %c0_6 = arith.constant 0 : index
    %c0_7 = arith.constant 0 : index
    %10 = vector.load %arg5[%c0_6, %c0_7] : memref<512x256xbf16, #tpu.memory_space<vmem>>, vector<512x256xbf16>
    %cst_8 = arith.constant dense<0.000000e+00> : vector<16x256xf32>
    %11 = tpu.matmul %9, %10, %cst_8 {dimension_numbers = #tpu.dot_dimension_numbers<[1], [0], [0], [1], [0, 0, 1, 1], [], []>} : vector<16x512xbf16>, vector<512x256xbf16>, vector<16x256xf32> -> vector<16x256xf32>
    %c0_9 = arith.constant 0 : index
    %c0_10 = arith.constant 0 : index
    %12 = vector.load %arg6[%c0_9, %c0_10] : memref<1x256xf32, #tpu.memory_space<vmem>>, vector<1x256xf32>
    %13 = vector.broadcast %12 : vector<1x256xf32> to vector<16x256xf32>
    %14 = arith.addf %11, %13 : vector<16x256xf32>
    %c0_11 = arith.constant 0 : index
    %c0_12 = arith.constant 0 : index
    %15 = vector.load %arg12[%c0_11, %c0_12] : memref<16x256xf32, #tpu.memory_space<vmem>>, vector<16x256xf32>
    tpu.vector_store %arg12[%c0_11, %c0_12], %14 {strides = array<i32>} : memref<16x256xf32, #tpu.memory_space<vmem>>, vector<16x256xf32>,
    %16 = vector.extract_strided_slice %14 {offsets = [0, 0], sizes = [16, 128], strides = [1, 1]} : vector<16x256xf32> to vector<16x128xf32>
    %17 = vector.extract_strided_slice %14 {offsets = [0, 128], sizes = [16, 128], strides = [1, 1]} : vector<16x256xf32> to vector<16x128xf32>
    %c0_13 = arith.constant 0 : index
    %c0_14 = arith.constant 0 : index
    %18 = vector.load %arg2[%c0_13, %c0_14] : memref<16x128xf32, #tpu.memory_space<vmem>>, vector<16x128xf32>
    %cst_15 = arith.constant 5.000000e-01 : f32
    %19 = vector.broadcast %cst_15 : f32 to vector<16x128xf32>
    %20 = arith.mulf %19, %17 : vector<16x128xf32>
    %21 = math.exp %20 : vector<16x128xf32>
    %22 = arith.mulf %18, %21 : vector<16x128xf32>
    %23 = arith.addf %16, %22 : vector<16x128xf32>
    %24 = arith.truncf %23 : vector<16x128xf32> to vector<16x128xbf16>
    %c0_16 = arith.constant 0 : index
    %c0_17 = arith.constant 0 : index
    %25 = vector.load %arg7[%c0_16, %c0_17] : memref<128x512xbf16, #tpu.memory_space<vmem>>, vector<128x512xbf16>
    %cst_18 = arith.constant dense<0.000000e+00> : vector<16x512xf32>
    %26 = tpu.matmul %24, %25, %cst_18 {dimension_numbers = #tpu.dot_dimension_numbers<[1], [0], [0], [1], [0, 0, 1, 1], [], []>} : vector<16x128xbf16>, vector<128x512xbf16>, vector<16x512xf32> -> vector<16x512xf32>
    %c0_19 = arith.constant 0 : index
    %c0_20 = arith.constant 0 : index
    %27 = vector.load %arg8[%c0_19, %c0_20] : memref<1x512xf32, #tpu.memory_space<vmem>>, vector<1x512xf32>
    %28 = vector.broadcast %27 : vector<1x512xf32> to vector<16x512xf32>
    %29 = arith.addf %26, %28 : vector<16x512xf32>
    %cst_21 = arith.constant 0.000000e+00 : f32
    %30 = vector.broadcast %cst_21 : f32 to vector<16x512xf32>
    %31 = arith.maximumf %29, %30 : vector<16x512xf32>
    %32 = arith.truncf %31 : vector<16x512xf32> to vector<16x512xbf16>
    %c0_22 = arith.constant 0 : index
    %c0_23 = arith.constant 0 : index
    %33 = vector.load %arg9[%c0_22, %c0_23] : memref<512x896xbf16, #tpu.memory_space<vmem>>, vector<512x896xbf16>
    %cst_24 = arith.constant dense<0.000000e+00> : vector<16x896xf32>
    %34 = tpu.matmul %32, %33, %cst_24 {dimension_numbers = #tpu.dot_dimension_numbers<[1], [0], [0], [1], [0, 0, 1, 1], [], []>} : vector<16x512xbf16>, vector<512x896xbf16>, vector<16x896xf32> -> vector<16x896xf32>
    %c0_25 = arith.constant 0 : index
    %c0_26 = arith.constant 0 : index
    %35 = vector.load %arg10[%c0_25, %c0_26] : memref<1x896xf32, #tpu.memory_space<vmem>>, vector<1x896xf32>
    %36 = vector.broadcast %35 : vector<1x896xf32> to vector<16x896xf32>
    %37 = arith.addf %34, %36 : vector<16x896xf32>
    %38 = arith.negf %37 : vector<16x896xf32>
    %39 = math.exp %38 : vector<16x896xf32>
    %cst_27 = arith.constant 1.000000e+00 : f32
    %40 = vector.broadcast %cst_27 : f32 to vector<16x896xf32>
    %41 = arith.addf %40, %39 : vector<16x896xf32>
    %42 = arith.divf %40, %41 : vector<16x896xf32>
    %43 = arith.truncf %42 : vector<16x896xf32> to vector<16x896xbf16>
    %c0_28 = arith.constant 0 : index
    %c0_29 = arith.constant 0 : index
    %44 = vector.load %arg11[%c0_28, %c0_29] : memref<16x896xbf16, #tpu.memory_space<vmem>>, vector<16x896xbf16>
    tpu.vector_store %arg11[%c0_28, %c0_29], %43 {strides = array<i32>} : memref<16x896xbf16, #tpu.memory_space<vmem>>, vector<16x896xbf16>,
    return
  }
  func.func @transform_0(%arg0: i32) -> (i32, i32) {
    %c0_i32 = arith.constant 0 : i32
    %c0_i32_0 = arith.constant 0 : i32
    return %arg0, %c0_i32 : i32, i32
  }
  func.func @transform_1(%arg0: i32) -> (i32, i32) {
    %c0_i32 = arith.constant 0 : i32
    %c0_i32_0 = arith.constant 0 : i32
    return %arg0, %c0_i32 : i32, i32
  }
  func.func @transform_2(%arg0: i32) -> (i32, i32) {
    %c0_i32 = arith.constant 0 : i32
    %c0_i32_0 = arith.constant 0 : i32
    %c0_i32_1 = arith.constant 0 : i32
    return %c0_i32, %c0_i32_0 : i32, i32
  }
  func.func @transform_3(%arg0: i32) -> (i32, i32) {
    %c0_i32 = arith.constant 0 : i32
    %c0_i32_0 = arith.constant 0 : i32
    %c0_i32_1 = arith.constant 0 : i32
    return %c0_i32, %c0_i32_0 : i32, i32
  }
  func.func @transform_4(%arg0: i32) -> (i32, i32) {
    %c0_i32 = arith.constant 0 : i32
    %c0_i32_0 = arith.constant 0 : i32
    %c0_i32_1 = arith.constant 0 : i32
    return %c0_i32, %c0_i32_0 : i32, i32
  }
  func.func @transform_5(%arg0: i32) -> (i32, i32) {
    %c0_i32 = arith.constant 0 : i32
    %c0_i32_0 = arith.constant 0 : i32
    %c0_i32_1 = arith.constant 0 : i32
    return %c0_i32, %c0_i32_0 : i32, i32
  }
  func.func @transform_6(%arg0: i32) -> (i32, i32) {
    %c0_i32 = arith.constant 0 : i32
    %c0_i32_0 = arith.constant 0 : i32
    %c0_i32_1 = arith.constant 0 : i32
    return %c0_i32, %c0_i32_0 : i32, i32
  }
  func.func @transform_7(%arg0: i32) -> (i32, i32) {
    %c0_i32 = arith.constant 0 : i32
    %c0_i32_0 = arith.constant 0 : i32
    %c0_i32_1 = arith.constant 0 : i32
    return %c0_i32, %c0_i32_0 : i32, i32
  }
  func.func @transform_8(%arg0: i32) -> (i32, i32) {
    %c0_i32 = arith.constant 0 : i32
    %c0_i32_0 = arith.constant 0 : i32
    %c0_i32_1 = arith.constant 0 : i32
    return %c0_i32, %c0_i32_0 : i32, i32
  }
  func.func @transform_9(%arg0: i32) -> (i32, i32) {
    %c0_i32 = arith.constant 0 : i32
    %c0_i32_0 = arith.constant 0 : i32
    %c0_i32_1 = arith.constant 0 : i32
    return %c0_i32, %c0_i32_0 : i32, i32
  }
  func.func @transform_10(%arg0: i32) -> (i32, i32) {
    %c0_i32 = arith.constant 0 : i32
    %c0_i32_0 = arith.constant 0 : i32
    return %arg0, %c0_i32 : i32, i32
  }
  func.func @transform_11(%arg0: i32) -> (i32, i32) {
    %c0_i32 = arith.constant 0 : i32
    %c0_i32_0 = arith.constant 0 : i32
    return %arg0, %c0_i32 : i32, i32
  }
}

</mosaic_0001>

<llo_original>
// kernel: tpu_custom_call.1
$region0: #{tpu_custom_call.1}
  #allocation0 [shape = 'u32[]', space=smem, size = 0x4, offset = 0x4, fixed_abs, tag = 'smem constant byte address 0x4 - core index']
  #allocation1 [shape = 'u32[144,128]{1,0:T(1,128)}', space=vmem, size = 0x12000, scoped, tag = 'internal scratch']
  %s0 = inlined_call_operand.hbm [shape: f32[16,784], index: 0, kind: input, shape index: {}]
  %s1 = inlined_call_operand.hbm [shape: f32[16,128], index: 1, kind: input, shape index: {}]
  %s2 = inlined_call_operand.hbm [shape: bf16[784,512], index: 2, kind: input, shape index: {}]
  %s3 = inlined_call_operand.vmem [shape: f32[1,512], index: 3, kind: input, shape index: {}]
  %s4 = inlined_call_operand.hbm [shape: bf16[512,256], index: 4, kind: input, shape index: {}]
  %s5 = inlined_call_operand.vmem [shape: f32[1,256], index: 5, kind: input, shape index: {}]
  %s6 = inlined_call_operand.hbm [shape: bf16[128,512], index: 6, kind: input, shape index: {}]
  %s7 = inlined_call_operand.vmem [shape: f32[1,512], index: 7, kind: input, shape index: {}]
  %s8 = inlined_call_operand.hbm [shape: bf16[512,896], index: 8, kind: input, shape index: {}]
  %s9 = inlined_call_operand.vmem [shape: f32[1,896], index: 9, kind: input, shape index: {}]
  %s10 = inlined_call_operand.hbm [shape: bf16[16,896], index: 10, kind: output, shape index: {0}]
  %s11 = inlined_call_operand.hbm [shape: f32[16,256], index: 11, kind: output, shape index: {1}]
  %12 = xla_tuple %s10, %s11
  %s13 = sld [smem:[#allocation0]]
  $region82: #{tpu_custom_call.1} parent=0
    _
  %s15 = ssub.s32 1, %s13
  %s16 = scalar_select 0, %s15, %s13
  $region1: #{tpu_custom_call.1} parent=0
    #allocation2 [shape = 'u8[57344]{0}', space=vmem, size = 0xe000, scoped, tag = 'input window, operand 0, single buffered']
    #allocation3 [shape = 's32[1]{0}', space=sflag, size = 0x4, scoped, tag = 'scoped memory for tpu_custom_call.1']
    #allocation4 [shape = 's32[1]{0}', space=sflag, size = 0x4, scoped, tag = 'scoped memory for tpu_custom_call.1']
    #allocation5 [shape = 'u8[8192]{0}', space=vmem, size = 0x2000, scoped, tag = 'input window, operand 1, single buffered']
    #allocation6 [shape = 's32[1]{0}', space=sflag, size = 0x4, scoped, tag = 'scoped memory for tpu_custom_call.1']
    #allocation7 [shape = 'u8[802816]{0}', space=vmem, size = 0xc4000, scoped, tag = 'input window, operand 2, single buffered']
    #allocation8 [shape = 'u8[262144]{0}', space=vmem, size = 0x40000, scoped, tag = 'input window, operand 4, single buffered']
    #allocation9 [shape = 's32[1]{0}', space=sflag, size = 0x4, scoped, tag = 'scoped memory for tpu_custom_call.1']
    #allocation10 [shape = 'u8[131072]{0}', space=vmem, size = 0x20000, scoped, tag = 'input window, operand 6, single buffered']
    #allocation11 [shape = 'u8[917504]{0}', space=vmem, size = 0xe0000, scoped, tag = 'input window, operand 8, single buffered']
    #allocation12 [shape = 's32[1]{0}', space=sflag, size = 0x4, scoped, tag = 'scoped memory for tpu_custom_call.1']
    #allocation13 [shape = 'u8[28672]{0}', space=vmem, size = 0x7000, scoped, tag = 'output window, operand 0, single buffered']
    #allocation14 [shape = 'u8[16384]{0}', space=vmem, size = 0x4000, scoped, tag = 'output window, operand 1, single buffered']
    #allocation15 [shape = 's32[1]{0}', space=sflag, size = 0x4, scoped, tag = 'scoped memory for tpu_custom_call.1']
    %17 = vsyncpa [#allocation3], 0
    %18 = vsyncpa [#allocation6], 0
    %19 = vsyncpa [#allocation9], 0
    %20 = vsyncpa [#allocation12], 0
    %21 = vsyncpa [#allocation4], 0
    %22 = vsyncpa [#allocation15], 0
    // Predicated region
    $region2: #{tpu_custom_call.1} parent=1 // pred_check
      _
    $region3: #{tpu_custom_call.1} parent=1 // pred_check_branch
      %24 = sbr.rel (0) target = $region5
    $region4: #{tpu_custom_call.1} parent=1 // pred_region
      %s26 = ssub.s32 1792, 1792
      %27 = vsyncadd [#allocation3], %s26
      %s28 = sshll.u32 [#allocation2], 4
      %s29 = int_to_ptr.vmem [resolvable:$true] %s28
      %34 = dma.hbm_to_vmem [thread:$0]  %s0, 1792, %s29, [#allocation3], 896, 896, 56
    $region5: #{tpu_custom_call.1} parent=1 // pred_fallthru
      _
    // Predicated region
    $region6: #{tpu_custom_call.1} parent=1 // pred_check
      _
    $region7: #{tpu_custom_call.1} parent=1 // pred_check_branch
      %36 = sbr.rel (0) target = $region9
    $region8: #{tpu_custom_call.1} parent=1 // pred_region
      %s38 = ssub.s32 256, 256
      %39 = vsyncadd [#allocation6], %s38
      %s40 = sshll.u32 [#allocation5], 4
      %s41 = int_to_ptr.vmem [resolvable:$true] %s40
      %46 = dma.hbm_to_vmem [thread:$0]  %s1, 256, %s41, [#allocation6], 128, 128, 8
    $region9: #{tpu_custom_call.1} parent=1 // pred_fallthru
      _
    // Predicated region
    $region10: #{tpu_custom_call.1} parent=1 // pred_check
      _
    $region11: #{tpu_custom_call.1} parent=1 // pred_check_branch
      %48 = sbr.rel (0) target = $region13
    $region12: #{tpu_custom_call.1} parent=1 // pred_region
      %s50 = ssub.s32 25088, 25088
      %51 = vsyncadd [#allocation6], %s50
      %s52 = sshll.u32 [#allocation7], 4
      %s53 = int_to_ptr.vmem [resolvable:$true] %s52
      %58 = dma.hbm_to_vmem [thread:$0]  %s2, 25088, %s53, [#allocation6], 256, 256, 16
    $region13: #{tpu_custom_call.1} parent=1 // pred_fallthru
      _
    // Predicated region
    $region14: #{tpu_custom_call.1} parent=1 // pred_check
      _
    $region15: #{tpu_custom_call.1} parent=1 // pred_check_branch
      %60 = sbr.rel (0) target = $region17
    $region16: #{tpu_custom_call.1} parent=1 // pred_region
      _
    $region17: #{tpu_custom_call.1} parent=1 // pred_fallthru
      _
    // Predicated region
    $region18: #{tpu_custom_call.1} parent=1 // pred_check
      _
    $region19: #{tpu_custom_call.1} parent=1 // pred_check_branch
      %62 = sbr.rel (0) target = $region21
    $region20: #{tpu_custom_call.1} parent=1 // pred_region
      %s64 = ssub.s32 8192, 8192
      %65 = vsyncadd [#allocation9], %s64
      %s66 = sshll.u32 [#allocation8], 4
      %s67 = int_to_ptr.vmem [resolvable:$true] %s66
      %72 = dma.hbm_to_vmem [thread:$0]  %s4, 8192, %s67, [#allocation9], 128, 128, 8
    $region21: #{tpu_custom_call.1} parent=1 // pred_fallthru
      _
    // Predicated region
    $region22: #{tpu_custom_call.1} parent=1 // pred_check
      _
    $region23: #{tpu_custom_call.1} parent=1 // pred_check_branch
      %74 = sbr.rel (0) target = $region25
    $region24: #{tpu_custom_call.1} parent=1 // pred_region
      _
    $region25: #{tpu_custom_call.1} parent=1 // pred_fallthru
      _
    // Predicated region
    $region26: #{tpu_custom_call.1} parent=1 // pred_check
      _
    $region27: #{tpu_custom_call.1} parent=1 // pred_check_branch
      %76 = sbr.rel (0) target = $region29
    $region28: #{tpu_custom_call.1} parent=1 // pred_region
      %s78 = ssub.s32 4096, 4096
      %79 = vsyncadd [#allocation9], %s78
      %s80 = sshll.u32 [#allocation10], 4
      %s81 = int_to_ptr.vmem [resolvable:$true] %s80
      %86 = dma.hbm_to_vmem [thread:$0]  %s6, 4096, %s81, [#allocation9], 256, 256, 16
    $region29: #{tpu_custom_call.1} parent=1 // pred_fallthru
      _
    // Predicated region
    $region30: #{tpu_custom_call.1} parent=1 // pred_check
      _
    $region31: #{tpu_custom_call.1} parent=1 // pred_check_branch
      %88 = sbr.rel (0) target = $region33
    $region32: #{tpu_custom_call.1} parent=1 // pred_region
      _
    $region33: #{tpu_custom_call.1} parent=1 // pred_fallthru
      _
    // Predicated region
    $region34: #{tpu_custom_call.1} parent=1 // pred_check
      _
    $region35: #{tpu_custom_call.1} parent=1 // pred_check_branch
      %90 = sbr.rel (0) target = $region37
    $region36: #{tpu_custom_call.1} parent=1 // pred_region
      %s92 = ssub.s32 28672, 28672
      %93 = vsyncadd [#allocation12], %s92
      %s94 = sshll.u32 [#allocation11], 4
      %s95 = int_to_ptr.vmem [resolvable:$true] %s94
      %100 = dma.hbm_to_vmem [thread:$0]  %s8, 28672, %s95, [#allocation12], 448, 448, 28
    $region37: #{tpu_custom_call.1} parent=1 // pred_fallthru
      _
    // Predicated region
    $region38: #{tpu_custom_call.1} parent=1 // pred_check
      _
    $region39: #{tpu_custom_call.1} parent=1 // pred_check_branch
      %102 = sbr.rel (0) target = $region41
    $region40: #{tpu_custom_call.1} parent=1 // pred_region
      _
    $region41: #{tpu_custom_call.1} parent=1 // pred_fallthru
      _
    // Predicated region
    $region42: #{tpu_custom_call.1} parent=1 // pred_check
      _
    $region43: #{tpu_custom_call.1} parent=1 // pred_check_branch
      %104 = sbr.rel (0) target = $region45
    $region44: #{tpu_custom_call.1} parent=1 // pred_region
      %105 = dma.done [#allocation3], 1792
    $region45: #{tpu_custom_call.1} parent=1 // pred_fallthru
      _
    // Predicated region
    $region46: #{tpu_custom_call.1} parent=1 // pred_check
      _
    $region47: #{tpu_custom_call.1} parent=1 // pred_check_branch
      %107 = sbr.rel (0) target = $region49
    $region48: #{tpu_custom_call.1} parent=1 // pred_region
      %108 = dma.done [#allocation6], 256
    $region49: #{tpu_custom_call.1} parent=1 // pred_fallthru
      _
    // Predicated region
    $region50: #{tpu_custom_call.1} parent=1 // pred_check
      _
    $region51: #{tpu_custom_call.1} parent=1 // pred_check_branch
      %110 = sbr.rel (0) target = $region53
    $region52: #{tpu_custom_call.1} parent=1 // pred_region
      %111 = dma.done [#allocation6], 25088
    $region53: #{tpu_custom_call.1} parent=1 // pred_fallthru
      _
    // Predicated region
    $region54: #{tpu_custom_call.1} parent=1 // pred_check
      _
    $region55: #{tpu_custom_call.1} parent=1 // pred_check_branch
      %113 = sbr.rel (0) target = $region57
    $region56: #{tpu_custom_call.1} parent=1 // pred_region
      %114 = dma.done [#allocation9], 8192
    $region57: #{tpu_custom_call.1} parent=1 // pred_fallthru
      _
    // Predicated region
    $region58: #{tpu_custom_call.1} parent=1 // pred_check
      _
    $region59: #{tpu_custom_call.1} parent=1 // pred_check_branch
      %116 = sbr.rel (0) target = $region61
    $region60: #{tpu_custom_call.1} parent=1 // pred_region
      %117 = dma.done [#allocation9], 4096
    $region61: #{tpu_custom_call.1} parent=1 // pred_fallthru
      _
    // Predicated region
    $region62: #{tpu_custom_call.1} parent=1 // pred_check
      _
    $region63: #{tpu_custom_call.1} parent=1 // pred_check_branch
      %119 = sbr.rel (0) target = $region65
    $region64: #{tpu_custom_call.1} parent=1 // pred_region
      %120 = dma.done [#allocation12], 28672
    $region65: #{tpu_custom_call.1} parent=1 // pred_fallthru
      _
    %v122 = vld [vmem:[#allocation2] sm:$0xff]
    %v123 = vld [vmem:[#allocation2 + $0x8] sm:$0xff]
    %v124 = vld [vmem:[#allocation2 + $0x10] sm:$0xff]
    %v125 = vld [vmem:[#allocation2 + $0x18] sm:$0xff]
    %v126 = vld [vmem:[#allocation2 + $0x20] sm:$0xff]
    %v127 = vld [vmem:[#allocation2 + $0x28] sm:$0xff]
    %v128 = vld [vmem:[#allocation2 + $0x30] sm:$0xff]
    %v129 = vld [vmem:[#allocation2 + $0x38] sm:$0xff]
    %v130 = vld [vmem:[#allocation2 + $0x40] sm:$0xff]
    %v131 = vld [vmem:[#allocation2 + $0x48] sm:$0xff]
    %v132 = vld [vmem:[#allocation2 + $0x50] sm:$0xff]
    %v133 = vld [vmem:[#allocation2 + $0x58] sm:$0xff]
    %v134 = vld [vmem:[#allocation2 + $0x60] sm:$0xff]
    %v135 = vld [vmem:[#allocation2 + $0x68] sm:$0xff]
    %v136 = vpack.c.bf16 %v129, %v122
    %v137 = vpack.c.bf16 %v130, %v123
    %v138 = vpack.c.bf16 %v131, %v124
    %v139 = vpack.c.bf16 %v132, %v125
    %v140 = vpack.c.bf16 %v133, %v126
    %v141 = vpack.c.bf16 %v134, %v127
    %v142 = vpack.c.bf16 %v135, %v128
    %v143 = vld [vmem:[#allocation7] sm:$0xff]
    %v144 = vld [vmem:[#allocation7 + $0x8] sm:$0xff]
    %v145 = vld [vmem:[#allocation7 + $0x10] sm:$0xff]
    %v146 = vld [vmem:[#allocation7 + $0x18] sm:$0xff]
    %v147 = vld [vmem:[#allocation7 + $0x20] sm:$0xff]
    %v148 = vld [vmem:[#allocation7 + $0x28] sm:$0xff]
    %v149 = vld [vmem:[#allocation7 + $0x30] sm:$0xff]
    %v150 = vld [vmem:[#allocation7 + $0x38] sm:$0xff]
    %v151 = vld [vmem:[#allocation7 + $0x40] sm:$0xff]
    %v152 = vld [vmem:[#allocation7 + $0x48] sm:$0xff]
    %v153 = vld [vmem:[#allocation7 + $0x50] sm:$0xff]
    %v154 = vld [vmem:[#allocation7 + $0x58] sm:$0xff]
    %v155 = vld [vmem:[#allocation7 + $0x60] sm:$0xff]
    %v156 = vld [vmem:[#allocation7 + $0x68] sm:$0xff]
    %v157 = vld [vmem:[#allocation7 + $0x70] sm:$0xff]
    %v158 = vld [vmem:[#allocation7 + $0x78] sm:$0xff]
    %v159 = vld [vmem:[#allocation7 + $0x80] sm:$0xff]
    %v160 = vld [vmem:[#allocation7 + $0x88] sm:$0xff]
    %v161 = vld [vmem:[#allocation7 + $0x90] sm:$0xff]
    %v162 = vld [vmem:[#allocation7 + $0x98] sm:$0xff]
    %v163 = vld [vmem:[#allocation7 + $0xa0] sm:$0xff]
    %v164 = vld [vmem:[#allocation7 + $0xa8] sm:$0xff]
    %v165 = vld [vmem:[#allocation7 + $0xb0] sm:$0xff]
    %v166 = vld [vmem:[#allocation7 + $0xb8] sm:$0xff]
    %v167 = vld [vmem:[#allocation7 + $0xc0] sm:$0xff]
    %v168 = vld [vmem:[#allocation7 + $0xc8] sm:$0xff]
    %v169 = vld [vmem:[#allocation7 + $0xd0] sm:$0xff]
    %v170 = vld [vmem:[#allocation7 + $0xd8] sm:$0xff]
    %v171 = vld [vmem:[#allocation7 + $0xe0] sm:$0xff]
    %v172 = vld [vmem:[#allocation7 + $0xe8] sm:$0xff]
    %v173 = vld [vmem:[#allocation7 + $0xf0] sm:$0xff]
    %v174 = vld [vmem:[#allocation7 + $0xf8] sm:$0xff]
    %v175 = vld [vmem:[#allocation7 + $0x100] sm:$0xff]
    %v176 = vld [vmem:[#allocation7 + $0x108] sm:$0xff]
    %v177 = vld [vmem:[#allocation7 + $0x110] sm:$0xff]
    %v178 = vld [vmem:[#allocation7 + $0x118] sm:$0xff]
    %v179 = vld [vmem:[#allocation7 + $0x120] sm:$0xff]
    %v180 = vld [vmem:[#allocation7 + $0x128] sm:$0xff]
    %v181 = vld [vmem:[#allocation7 + $0x130] sm:$0xff]
    %v182 = vld [vmem:[#allocation7 + $0x138] sm:$0xff]
    %v183 = vld [vmem:[#allocation7 + $0x140] sm:$0xff]
    %v184 = vld [vmem:[#allocation7 + $0x148] sm:$0xff]
    %v185 = vld [vmem:[#allocation7 + $0x150] sm:$0xff]
    %v186 = vld [vmem:[#allocation7 + $0x158] sm:$0xff]
    %v187 = vld [vmem:[#allocation7 + $0x160] sm:$0xff]
    %v188 = vld [vmem:[#allocation7 + $0x168] sm:$0xff]
    %v189 = vld [vmem:[#allocation7 + $0x170] sm:$0xff]
    %v190 = vld [vmem:[#allocation7 + $0x178] sm:$0xff]
    %v191 = vld [vmem:[#allocation7 + $0x180] sm:$0xff]
    %v192 = vld [vmem:[#allocation7 + $0x188] sm:$0xff]
    %v193 = vld [vmem:[#allocation7 + $0x190] sm:$0xff]
    %v194 = vld [vmem:[#allocation7 + $0x198] sm:$0xff]
    %v195 = vld [vmem:[#allocation7 + $0x1a0] sm:$0xff]
    %v196 = vld [vmem:[#allocation7 + $0x1a8] sm:$0xff]
    %v197 = vld [vmem:[#allocation7 + $0x1b0] sm:$0xff]
    %v198 = vld [vmem:[#allocation7 + $0x1b8] sm:$0xff]
    %v199 = vld [vmem:[#allocation7 + $0x1c0] sm:$0xff]
    %v200 = vld [vmem:[#allocation7 + $0x1c8] sm:$0xff]
    %v201 = vld [vmem:[#allocation7 + $0x1d0] sm:$0xff]
    %v202 = vld [vmem:[#allocation7 + $0x1d8] sm:$0xff]
    %v203 = vld [vmem:[#allocation7 + $0x1e0] sm:$0xff]
    %v204 = vld [vmem:[#allocation7 + $0x1e8] sm:$0xff]
    %v205 = vld [vmem:[#allocation7 + $0x1f0] sm:$0xff]
    %v206 = vld [vmem:[#allocation7 + $0x1f8] sm:$0xff]
    %v207 = vld [vmem:[#allocation7 + $0x200] sm:$0xff]
    %v208 = vld [vmem:[#allocation7 + $0x208] sm:$0xff]
    %v209 = vld [vmem:[#allocation7 + $0x210] sm:$0xff]
    %v210 = vld [vmem:[#allocation7 + $0x218] sm:$0xff]
    %v211 = vld [vmem:[#allocation7 + $0x220] sm:$0xff]
    %v212 = vld [vmem:[#allocation7 + $0x228] sm:$0xff]
    %v213 = vld [vmem:[#allocation7 + $0x230] sm:$0xff]
    %v214 = vld [vmem:[#allocation7 + $0x238] sm:$0xff]
    %v215 = vld [vmem:[#allocation7 + $0x240] sm:$0xff]
    %v216 = vld [vmem:[#allocation7 + $0x248] sm:$0xff]
    %v217 = vld [vmem:[#allocation7 + $0x250] sm:$0xff]
    %v218 = vld [vmem:[#allocation7 + $0x258] sm:$0xff]
    %v219 = vld [vmem:[#allocation7 + $0x260] sm:$0xff]
    %v220 = vld [vmem:[#allocation7 + $0x268] sm:$0xff]
    %v221 = vld [vmem:[#allocation7 + $0x270] sm:$0xff]
    %v222 = vld [vmem:[#allocation7 + $0x278] sm:$0xff]
    %v223 = vld [vmem:[#allocation7 + $0x280] sm:$0xff]
    %v224 = vld [vmem:[#allocation7 + $0x288] sm:$0xff]
    %v225 = vld [vmem:[#allocation7 + $0x290] sm:$0xff]
    %v226 = vld [vmem:[#allocation7 + $0x298] sm:$0xff]
    %v227 = vld [vmem:[#allocation7 + $0x2a0] sm:$0xff]
    %v228 = vld [vmem:[#allocation7 + $0x2a8] sm:$0xff]
    %v229 = vld [vmem:[#allocation7 + $0x2b0] sm:$0xff]
    %v230 = vld [vmem:[#allocation7 + $0x2b8] sm:$0xff]
    %v231 = vld [vmem:[#allocation7 + $0x2c0] sm:$0xff]
    %v232 = vld [vmem:[#allocation7 + $0x2c8] sm:$0xff]
    %v233 = vld [vmem:[#allocation7 + $0x2d0] sm:$0xff]
    %v234 = vld [vmem:[#allocation7 + $0x2d8] sm:$0xff]
    %v235 = vld [vmem:[#allocation7 + $0x2e0] sm:$0xff]
    %v236 = vld [vmem:[#allocation7 + $0x2e8] sm:$0xff]
    %v237 = vld [vmem:[#allocation7 + $0x2f0] sm:$0xff]
    %v238 = vld [vmem:[#allocation7 + $0x2f8] sm:$0xff]
    %v239 = vld [vmem:[#allocation7 + $0x300] sm:$0xff]
    %v240 = vld [vmem:[#allocation7 + $0x308] sm:$0xff]
    %v241 = vld [vmem:[#allocation7 + $0x310] sm:$0xff]
    %v242 = vld [vmem:[#allocation7 + $0x318] sm:$0xff]
    %v243 = vld [vmem:[#allocation7 + $0x320] sm:$0xff]
    %v244 = vld [vmem:[#allocation7 + $0x328] sm:$0xff]
    %v245 = vld [vmem:[#allocation7 + $0x330] sm:$0xff]
    %v246 = vld [vmem:[#allocation7 + $0x338] sm:$0xff]
    %v247 = vld [vmem:[#allocation7 + $0x340] sm:$0xff]
    %v248 = vld [vmem:[#allocation7 + $0x348] sm:$0xff]
    %v249 = vld [vmem:[#allocation7 + $0x350] sm:$0xff]
    %v250 = vld [vmem:[#allocation7 + $0x358] sm:$0xff]
    %v251 = vld [vmem:[#allocation7 + $0x360] sm:$0xff]
    %v252 = vld [vmem:[#allocation7 + $0x368] sm:$0xff]
    %v253 = vld [vmem:[#allocation7 + $0x370] sm:$0xff]
    %v254 = vld [vmem:[#allocation7 + $0x378] sm:$0xff]
    %v255 = vld [vmem:[#allocation7 + $0x380] sm:$0xff]
    %v256 = vld [vmem:[#allocation7 + $0x388] sm:$0xff]
    %v257 = vld [vmem:[#allocation7 + $0x390] sm:$0xff]
    %v258 = vld [vmem:[#allocation7 + $0x398] sm:$0xff]
    %v259 = vld [vmem:[#allocation7 + $0x3a0] sm:$0xff]
    %v260 = vld [vmem:[#allocation7 + $0x3a8] sm:$0xff]
    %v261 = vld [vmem:[#allocation7 + $0x3b0] sm:$0xff]
    %v262 = vld [vmem:[#allocation7 + $0x3b8] sm:$0xff]
    %v263 = vld [vmem:[#allocation7 + $0x3c0] sm:$0xff]
    %v264 = vld [vmem:[#allocation7 + $0x3c8] sm:$0xff]
    %v265 = vld [vmem:[#allocation7 + $0x3d0] sm:$0xff]
    %v266 = vld [vmem:[#allocation7 + $0x3d8] sm:$0xff]
    %v267 = vld [vmem:[#allocation7 + $0x3e0] sm:$0xff]
    %v268 = vld [vmem:[#allocation7 + $0x3e8] sm:$0xff]
    %v269 = vld [vmem:[#allocation7 + $0x3f0] sm:$0xff]
    %v270 = vld [vmem:[#allocation7 + $0x3f8] sm:$0xff]
    %v271 = vld [vmem:[#allocation7 + $0x400] sm:$0xff]
    %v272 = vld [vmem:[#allocation7 + $0x408] sm:$0xff]
    %v273 = vld [vmem:[#allocation7 + $0x410] sm:$0xff]
    %v274 = vld [vmem:[#allocation7 + $0x418] sm:$0xff]
    %v275 = vld [vmem:[#allocation7 + $0x420] sm:$0xff]
    %v276 = vld [vmem:[#allocation7 + $0x428] sm:$0xff]
    %v277 = vld [vmem:[#allocation7 + $0x430] sm:$0xff]
    %v278 = vld [vmem:[#allocation7 + $0x438] sm:$0xff]
    %v279 = vld [vmem:[#allocation7 + $0x440] sm:$0xff]
    %v280 = vld [vmem:[#allocation7 + $0x448] sm:$0xff]
    %v281 = vld [vmem:[#allocation7 + $0x450] sm:$0xff]
    %v282 = vld [vmem:[#allocation7 + $0x458] sm:$0xff]
    %v283 = vld [vmem:[#allocation7 + $0x460] sm:$0xff]
    %v284 = vld [vmem:[#allocation7 + $0x468] sm:$0xff]
    %v285 = vld [vmem:[#allocation7 + $0x470] sm:$0xff]
    %v286 = vld [vmem:[#allocation7 + $0x478] sm:$0xff]
    %v287 = vld [vmem:[#allocation7 + $0x480] sm:$0xff]
    %v288 = vld [vmem:[#allocation7 + $0x488] sm:$0xff]
    %v289 = vld [vmem:[#allocation7 + $0x490] sm:$0xff]
    %v290 = vld [vmem:[#allocation7 + $0x498] sm:$0xff]
    %v291 = vld [vmem:[#allocation7 + $0x4a0] sm:$0xff]
    %v292 = vld [vmem:[#allocation7 + $0x4a8] sm:$0xff]
    %v293 = vld [vmem:[#allocation7 + $0x4b0] sm:$0xff]
    %v294 = vld [vmem:[#allocation7 + $0x4b8] sm:$0xff]
    %v295 = vld [vmem:[#allocation7 + $0x4c0] sm:$0xff]
    %v296 = vld [vmem:[#allocation7 + $0x4c8] sm:$0xff]
    %v297 = vld [vmem:[#allocation7 + $0x4d0] sm:$0xff]
    %v298 = vld [vmem:[#allocation7 + $0x4d8] sm:$0xff]
    %v299 = vld [vmem:[#allocation7 + $0x4e0] sm:$0xff]
    %v300 = vld [vmem:[#allocation7 + $0x4e8] sm:$0xff]
    %v301 = vld [vmem:[#allocation7 + $0x4f0] sm:$0xff]
    %v302 = vld [vmem:[#allocation7 + $0x4f8] sm:$0xff]
    %v303 = vld [vmem:[#allocation7 + $0x500] sm:$0xff]
    %v304 = vld [vmem:[#allocation7 + $0x508] sm:$0xff]
    %v305 = vld [vmem:[#allocation7 + $0x510] sm:$0xff]
    %v306 = vld [vmem:[#allocation7 + $0x518] sm:$0xff]
    %v307 = vld [vmem:[#allocation7 + $0x520] sm:$0xff]
    %v308 = vld [vmem:[#allocation7 + $0x528] sm:$0xff]
    %v309 = vld [vmem:[#allocation7 + $0x530] sm:$0xff]
    %v310 = vld [vmem:[#allocation7 + $0x538] sm:$0xff]
    %v311 = vld [vmem:[#allocation7 + $0x540] sm:$0xff]
    %v312 = vld [vmem:[#allocation7 + $0x548] sm:$0xff]
    %v313 = vld [vmem:[#allocation7 + $0x550] sm:$0xff]
    %v314 = vld [vmem:[#allocation7 + $0x558] sm:$0xff]
    %v315 = vld [vmem:[#allocation7 + $0x560] sm:$0xff]
    %v316 = vld [vmem:[#allocation7 + $0x568] sm:$0xff]
    %v317 = vld [vmem:[#allocation7 + $0x570] sm:$0xff]
    %v318 = vld [vmem:[#allocation7 + $0x578] sm:$0xff]
    %v319 = vld [vmem:[#allocation7 + $0x580] sm:$0xff]
    %v320 = vld [vmem:[#allocation7 + $0x588] sm:$0xff]
    %v321 = vld [vmem:[#allocation7 + $0x590] sm:$0xff]
    %v322 = vld [vmem:[#allocation7 + $0x598] sm:$0xff]
    %v323 = vld [vmem:[#allocation7 + $0x5a0] sm:$0xff]
    %v324 = vld [vmem:[#allocation7 + $0x5a8] sm:$0xff]
    %v325 = vld [vmem:[#allocation7 + $0x5b0] sm:$0xff]
    %v326 = vld [vmem:[#allocation7 + $0x5b8] sm:$0xff]
    %v327 = vld [vmem:[#allocation7 + $0x5c0] sm:$0xff]
    %v328 = vld [vmem:[#allocation7 + $0x5c8] sm:$0xff]
    %v329 = vld [vmem:[#allocation7 + $0x5d0] sm:$0xff]
    %v330 = vld [vmem:[#allocation7 + $0x5d8] sm:$0xff]
    %v331 = vld [vmem:[#allocation7 + $0x5e0] sm:$0xff]
    %v332 = vld [vmem:[#allocation7 + $0x5e8] sm:$0xff]
    %v333 = vld [vmem:[#allocation7 + $0x5f0] sm:$0xff]
    %v334 = vld [vmem:[#allocation7 + $0x5f8] sm:$0xff]
    %v335 = vld [vmem:[#allocation7 + $0x600] sm:$0xff]
    %v336 = vld [vmem:[#allocation7 + $0x608] sm:$0xff]
    %v337 = vld [vmem:[#allocation7 + $0x610] sm:$0xff]
    %v338 = vld [vmem:[#allocation7 + $0x618] sm:$0xff]
    %v339 = vld [vmem:[%s3] sm:$0xf]
    %v341 = vlaneseq
    %v342 = vshrl.u32 %v341, 7
    %v343 = vsub.s32 0, %v342
    %v344 = vrot.slane %v339, %v343
    %v345 = vlaneseq
    %v346 = vshrl.u32 %v345, 7
    %v347 = vsub.s32 1, %v346
    %v348 = vrot.slane %v339, %v347
    %v349 = vlaneseq
    %v350 = vshrl.u32 %v349, 7
    %v351 = vsub.s32 2, %v350
    %v352 = vrot.slane %v339, %v351
    %v353 = vlaneseq
    %v354 = vshrl.u32 %v353, 7
    %v355 = vsub.s32 3, %v354
    %v356 = vrot.slane %v339, %v355
    %v557 = vunpack.c.l.b16 %v143
    %v558 = vunpack.c.h.b16 %v143
    %v559 = vunpack.c.l.b16 %v144
    %v560 = vunpack.c.h.b16 %v144
    %v561 = vunpack.c.l.b16 %v145
    %v562 = vunpack.c.h.b16 %v145
    %v563 = vunpack.c.l.b16 %v146
    %v564 = vunpack.c.h.b16 %v146
    %v565 = vunpack.c.l.b16 %v147
    %v566 = vunpack.c.h.b16 %v147
    %v567 = vunpack.c.l.b16 %v148
    %v568 = vunpack.c.h.b16 %v148
    %v569 = vunpack.c.l.b16 %v149
    %v570 = vunpack.c.h.b16 %v149
    %v571 = vunpack.c.l.b16 %v150
    %v572 = vunpack.c.h.b16 %v150
    %v573 = vunpack.c.l.b16 %v151
    %v574 = vunpack.c.h.b16 %v151
    %v575 = vunpack.c.l.b16 %v152
    %v576 = vunpack.c.h.b16 %v152
    %v577 = vunpack.c.l.b16 %v153
    %v578 = vunpack.c.h.b16 %v153
    %v579 = vunpack.c.l.b16 %v154
    %v580 = vunpack.c.h.b16 %v154
    %v581 = vunpack.c.l.b16 %v155
    %v582 = vunpack.c.h.b16 %v155
    %v583 = vunpack.c.l.b16 %v156
    %v584 = vunpack.c.h.b16 %v156
    %v585 = vunpack.c.l.b16 %v157
    %v586 = vunpack.c.h.b16 %v157
    %v587 = vunpack.c.l.b16 %v158
    %v588 = vunpack.c.h.b16 %v158
    %v589 = vunpack.c.l.b16 %v159
    %v590 = vunpack.c.h.b16 %v159
    %v591 = vunpack.c.l.b16 %v160
    %v592 = vunpack.c.h.b16 %v160
    %v593 = vunpack.c.l.b16 %v161
    %v594 = vunpack.c.h.b16 %v161
    %v595 = vunpack.c.l.b16 %v162
    %v596 = vunpack.c.h.b16 %v162
    %v597 = vunpack.c.l.b16 %v163
    %v598 = vunpack.c.h.b16 %v163
    %v599 = vunpack.c.l.b16 %v164
    %v600 = vunpack.c.h.b16 %v164
    %v601 = vunpack.c.l.b16 %v165
    %v602 = vunpack.c.h.b16 %v165
    %v603 = vunpack.c.l.b16 %v166
    %v604 = vunpack.c.h.b16 %v166
    %v605 = vunpack.c.l.b16 %v167
    %v606 = vunpack.c.h.b16 %v167
    %v607 = vunpack.c.l.b16 %v168
    %v608 = vunpack.c.h.b16 %v168
    %v609 = vunpack.c.l.b16 %v169
    %v610 = vunpack.c.h.b16 %v169
    %v611 = vunpack.c.l.b16 %v170
    %v612 = vunpack.c.h.b16 %v170
    %v613 = vunpack.c.l.b16 %v171
    %v614 = vunpack.c.h.b16 %v171
    %v615 = vunpack.c.l.b16 %v172
    %v616 = vunpack.c.h.b16 %v172
    %v617 = vunpack.c.l.b16 %v173
    %v618 = vunpack.c.h.b16 %v173
    %v619 = vunpack.c.l.b16 %v174
    %v620 = vunpack.c.h.b16 %v174
    %v621 = vunpack.c.l.b16 %v175
    %v622 = vunpack.c.h.b16 %v175
    %v623 = vunpack.c.l.b16 %v176
    %v624 = vunpack.c.h.b16 %v176
    %v625 = vunpack.c.l.b16 %v177
    %v626 = vunpack.c.h.b16 %v177
    %v627 = vunpack.c.l.b16 %v178
    %v628 = vunpack.c.h.b16 %v178
    %v629 = vunpack.c.l.b16 %v179
    %v630 = vunpack.c.h.b16 %v179
    %v631 = vunpack.c.l.b16 %v180
    %v632 = vunpack.c.h.b16 %v180
    %v633 = vunpack.c.l.b16 %v181
    %v634 = vunpack.c.h.b16 %v181
    %v635 = vunpack.c.l.b16 %v182
    %v636 = vunpack.c.h.b16 %v182
    %v637 = vunpack.c.l.b16 %v183
    %v638 = vunpack.c.h.b16 %v183
    %v639 = vunpack.c.l.b16 %v184
    %v640 = vunpack.c.h.b16 %v184
    %v641 = vunpack.c.l.b16 %v185
    %v642 = vunpack.c.h.b16 %v185
    %v643 = vunpack.c.l.b16 %v186
    %v644 = vunpack.c.h.b16 %v186
    %v645 = vunpack.c.l.b16 %v187
    %v646 = vunpack.c.h.b16 %v187
    %v647 = vunpack.c.l.b16 %v188
    %v648 = vunpack.c.h.b16 %v188
    %v649 = vunpack.c.l.b16 %v189
    %v650 = vunpack.c.h.b16 %v189
    %v651 = vunpack.c.l.b16 %v190
    %v652 = vunpack.c.h.b16 %v190
    %v653 = vunpack.c.l.b16 %v191
    %v654 = vunpack.c.h.b16 %v191
    %v655 = vunpack.c.l.b16 %v192
    %v656 = vunpack.c.h.b16 %v192
    %v657 = vunpack.c.l.b16 %v193
    %v658 = vunpack.c.h.b16 %v193
    %v659 = vunpack.c.l.b16 %v194
    %v660 = vunpack.c.h.b16 %v194
    %v661 = vunpack.c.l.b16 %v195
    %v662 = vunpack.c.h.b16 %v195
    %v663 = vunpack.c.l.b16 %v196
    %v664 = vunpack.c.h.b16 %v196
    %v665 = vunpack.c.l.b16 %v197
    %v666 = vunpack.c.h.b16 %v197
    %v667 = vunpack.c.l.b16 %v198
    %v668 = vunpack.c.h.b16 %v198
    %v669 = vunpack.c.l.b16 %v199
    %v670 = vunpack.c.h.b16 %v199
    %v671 = vunpack.c.l.b16 %v200
    %v672 = vunpack.c.h.b16 %v200
    %v673 = vunpack.c.l.b16 %v201
    %v674 = vunpack.c.h.b16 %v201
    %v675 = vunpack.c.l.b16 %v202
    %v676 = vunpack.c.h.b16 %v202
    %v677 = vunpack.c.l.b16 %v203
    %v678 = vunpack.c.h.b16 %v203
    %v679 = vunpack.c.l.b16 %v204
    %v680 = vunpack.c.h.b16 %v204
    %v681 = vunpack.c.l.b16 %v205
    %v682 = vunpack.c.h.b16 %v205
    %v683 = vunpack.c.l.b16 %v206
    %v684 = vunpack.c.h.b16 %v206
    %v685 = vunpack.c.l.b16 %v207
    %v686 = vunpack.c.h.b16 %v207
    %v687 = vunpack.c.l.b16 %v208
    %v688 = vunpack.c.h.b16 %v208
    %v689 = vunpack.c.l.b16 %v209
    %v690 = vunpack.c.h.b16 %v209
    %v691 = vunpack.c.l.b16 %v210
    %v692 = vunpack.c.h.b16 %v210
    %v693 = vunpack.c.l.b16 %v211
    %v694 = vunpack.c.h.b16 %v211
    %v695 = vunpack.c.l.b16 %v212
    %v696 = vunpack.c.h.b16 %v212
    %v697 = vunpack.c.l.b16 %v213
    %v698 = vunpack.c.h.b16 %v213
    %v699 = vunpack.c.l.b16 %v214
    %v700 = vunpack.c.h.b16 %v214
    %v701 = vunpack.c.l.b16 %v215
    %v702 = vunpack.c.h.b16 %v215
    %v703 = vunpack.c.l.b16 %v216
    %v704 = vunpack.c.h.b16 %v216
    %v705 = vunpack.c.l.b16 %v217
    %v706 = vunpack.c.h.b16 %v217
    %v707 = vunpack.c.l.b16 %v218
    %v708 = vunpack.c.h.b16 %v218
    %v709 = vunpack.c.l.b16 %v219
    %v710 = vunpack.c.h.b16 %v219
    %v711 = vunpack.c.l.b16 %v220
    %v712 = vunpack.c.h.b16 %v220
    %v713 = vunpack.c.l.b16 %v221
    %v714 = vunpack.c.h.b16 %v221
    %v715 = vunpack.c.l.b16 %v222
    %v716 = vunpack.c.h.b16 %v222
    %v717 = vunpack.c.l.b16 %v223
    %v718 = vunpack.c.h.b16 %v223
    %v719 = vunpack.c.l.b16 %v224
    %v720 = vunpack.c.h.b16 %v224
    %v721 = vunpack.c.l.b16 %v225
    %v722 = vunpack.c.h.b16 %v225
    %v723 = vunpack.c.l.b16 %v226
    %v724 = vunpack.c.h.b16 %v226
    %v725 = vunpack.c.l.b16 %v227
    %v726 = vunpack.c.h.b16 %v227
    %v727 = vunpack.c.l.b16 %v228
    %v728 = vunpack.c.h.b16 %v228
    %v729 = vunpack.c.l.b16 %v229
    %v730 = vunpack.c.h.b16 %v229
    %v731 = vunpack.c.l.b16 %v230
    %v732 = vunpack.c.h.b16 %v230
    %v733 = vunpack.c.l.b16 %v231
    %v734 = vunpack.c.h.b16 %v231
    %v735 = vunpack.c.l.b16 %v232
    %v736 = vunpack.c.h.b16 %v232
    %v737 = vunpack.c.l.b16 %v233
    %v738 = vunpack.c.h.b16 %v233
    %v739 = vunpack.c.l.b16 %v234
    %v740 = vunpack.c.h.b16 %v234
    %v741 = vunpack.c.l.b16 %v235
    %v742 = vunpack.c.h.b16 %v235
    %v743 = vunpack.c.l.b16 %v236
    %v744 = vunpack.c.h.b16 %v236
    %v745 = vunpack.c.l.b16 %v237
    %v746 = vunpack.c.h.b16 %v237
    %v747 = vunpack.c.l.b16 %v238
    %v748 = vunpack.c.h.b16 %v238
    %v749 = vunpack.c.l.b16 %v239
    %v750 = vunpack.c.h.b16 %v239
    %v751 = vunpack.c.l.b16 %v240
    %v752 = vunpack.c.h.b16 %v240
    %v753 = vunpack.c.l.b16 %v241
    %v754 = vunpack.c.h.b16 %v241
    %v755 = vunpack.c.l.b16 %v242
    %v756 = vunpack.c.h.b16 %v242
    %v757 = vunpack.c.l.b16 %v243
    %v758 = vunpack.c.h.b16 %v243
    %v759 = vunpack.c.l.b16 %v244
    %v760 = vunpack.c.h.b16 %v244
    %v761 = vunpack.c.l.b16 %v245
    %v762 = vunpack.c.h.b16 %v245
    %v763 = vunpack.c.l.b16 %v246
    %v764 = vunpack.c.h.b16 %v246
    %v765 = vunpack.c.l.b16 %v247
    %v766 = vunpack.c.h.b16 %v247
    %v767 = vunpack.c.l.b16 %v248
    %v768 = vunpack.c.h.b16 %v248
    %v769 = vunpack.c.l.b16 %v249
    %v770 = vunpack.c.h.b16 %v249
    %v771 = vunpack.c.l.b16 %v250
    %v772 = vunpack.c.h.b16 %v250
    %v773 = vunpack.c.l.b16 %v251
    %v774 = vunpack.c.h.b16 %v251
    %v775 = vunpack.c.l.b16 %v252
    %v776 = vunpack.c.h.b16 %v252
    %v777 = vunpack.c.l.b16 %v253
    %v778 = vunpack.c.h.b16 %v253
    %v779 = vunpack.c.l.b16 %v254
    %v780 = vunpack.c.h.b16 %v254
    %v781 = vunpack.c.l.b16 %v255
    %v782 = vunpack.c.h.b16 %v255
    %v783 = vunpack.c.l.b16 %v256
    %v784 = vunpack.c.h.b16 %v256
    %v785 = vunpack.c.l.b16 %v257
    %v786 = vunpack.c.h.b16 %v257
    %v787 = vunpack.c.l.b16 %v258
    %v788 = vunpack.c.h.b16 %v258
    %v789 = vunpack.c.l.b16 %v259
    %v790 = vunpack.c.h.b16 %v259
    %v791 = vunpack.c.l.b16 %v260
    %v792 = vunpack.c.h.b16 %v260
    %v793 = vunpack.c.l.b16 %v261
    %v794 = vunpack.c.h.b16 %v261
    %v795 = vunpack.c.l.b16 %v262
    %v796 = vunpack.c.h.b16 %v262
    %v797 = vunpack.c.l.b16 %v263
    %v798 = vunpack.c.h.b16 %v263
    %v799 = vunpack.c.l.b16 %v264
    %v800 = vunpack.c.h.b16 %v264
    %v801 = vunpack.c.l.b16 %v265
    %v802 = vunpack.c.h.b16 %v265
    %v803 = vunpack.c.l.b16 %v266
    %v804 = vunpack.c.h.b16 %v266
    %v805 = vunpack.c.l.b16 %v267
    %v806 = vunpack.c.h.b16 %v267
    %v807 = vunpack.c.l.b16 %v268
    %v808 = vunpack.c.h.b16 %v268
    %v809 = vunpack.c.l.b16 %v269
    %v810 = vunpack.c.h.b16 %v269
    %v811 = vunpack.c.l.b16 %v270
    %v812 = vunpack.c.h.b16 %v270
    %v813 = vunpack.c.l.b16 %v271
    %v814 = vunpack.c.h.b16 %v271
    %v815 = vunpack.c.l.b16 %v272
    %v816 = vunpack.c.h.b16 %v272
    %v817 = vunpack.c.l.b16 %v273
    %v818 = vunpack.c.h.b16 %v273
    %v819 = vunpack.c.l.b16 %v274
    %v820 = vunpack.c.h.b16 %v274
    %v821 = vunpack.c.l.b16 %v275
    %v822 = vunpack.c.h.b16 %v275
    %v823 = vunpack.c.l.b16 %v276
    %v824 = vunpack.c.h.b16 %v276
    %v825 = vunpack.c.l.b16 %v277
    %v826 = vunpack.c.h.b16 %v277
    %v827 = vunpack.c.l.b16 %v278
    %v828 = vunpack.c.h.b16 %v278
    %v829 = vunpack.c.l.b16 %v279
    %v830 = vunpack.c.h.b16 %v279
    %v831 = vunpack.c.l.b16 %v280
    %v832 = vunpack.c.h.b16 %v280
    %v833 = vunpack.c.l.b16 %v281
    %v834 = vunpack.c.h.b16 %v281
    %v835 = vunpack.c.l.b16 %v282
    %v836 = vunpack.c.h.b16 %v282
    %v837 = vunpack.c.l.b16 %v283
    %v838 = vunpack.c.h.b16 %v283
    %v839 = vunpack.c.l.b16 %v284
    %v840 = vunpack.c.h.b16 %v284
    %v841 = vunpack.c.l.b16 %v285
    %v842 = vunpack.c.h.b16 %v285
    %v843 = vunpack.c.l.b16 %v286
    %v844 = vunpack.c.h.b16 %v286
    %v845 = vunpack.c.l.b16 %v287
    %v846 = vunpack.c.h.b16 %v287
    %v847 = vunpack.c.l.b16 %v288
    %v848 = vunpack.c.h.b16 %v288
    %v849 = vunpack.c.l.b16 %v289
    %v850 = vunpack.c.h.b16 %v289
    %v851 = vunpack.c.l.b16 %v290
    %v852 = vunpack.c.h.b16 %v290
    %v853 = vunpack.c.l.b16 %v291
    %v854 = vunpack.c.h.b16 %v291
    %v855 = vunpack.c.l.b16 %v292
    %v856 = vunpack.c.h.b16 %v292
    %v857 = vunpack.c.l.b16 %v293
    %v858 = vunpack.c.h.b16 %v293
    %v859 = vunpack.c.l.b16 %v294
    %v860 = vunpack.c.h.b16 %v294
    %v861 = vunpack.c.l.b16 %v295
    %v862 = vunpack.c.h.b16 %v295
    %v863 = vunpack.c.l.b16 %v296
    %v864 = vunpack.c.h.b16 %v296
    %v865 = vunpack.c.l.b16 %v297
    %v866 = vunpack.c.h.b16 %v297
    %v867 = vunpack.c.l.b16 %v298
    %v868 = vunpack.c.h.b16 %v298
    %v869 = vunpack.c.l.b16 %v299
    %v870 = vunpack.c.h.b16 %v299
    %v871 = vunpack.c.l.b16 %v300
    %v872 = vunpack.c.h.b16 %v300
    %v873 = vunpack.c.l.b16 %v301
    %v874 = vunpack.c.h.b16 %v301
    %v875 = vunpack.c.l.b16 %v302
    %v876 = vunpack.c.h.b16 %v302
    %v877 = vunpack.c.l.b16 %v303
    %v878 = vunpack.c.h.b16 %v303
    %v879 = vunpack.c.l.b16 %v304
    %v880 = vunpack.c.h.b16 %v304
    %v881 = vunpack.c.l.b16 %v305
    %v882 = vunpack.c.h.b16 %v305
    %v883 = vunpack.c.l.b16 %v306
    %v884 = vunpack.c.h.b16 %v306
    %v885 = vunpack.c.l.b16 %v307
    %v886 = vunpack.c.h.b16 %v307
    %v887 = vunpack.c.l.b16 %v308
    %v888 = vunpack.c.h.b16 %v308
    %v889 = vunpack.c.l.b16 %v309
    %v890 = vunpack.c.h.b16 %v309
    %v891 = vunpack.c.l.b16 %v310
    %v892 = vunpack.c.h.b16 %v310
    %v893 = vunpack.c.l.b16 %v311
    %v894 = vunpack.c.h.b16 %v311
    %v895 = vunpack.c.l.b16 %v312
    %v896 = vunpack.c.h.b16 %v312
    %v897 = vunpack.c.l.b16 %v313
    %v898 = vunpack.c.h.b16 %v313
    %v899 = vunpack.c.l.b16 %v314
    %v900 = vunpack.c.h.b16 %v314
    %v901 = vunpack.c.l.b16 %v315
    %v902 = vunpack.c.h.b16 %v315
    %v903 = vunpack.c.l.b16 %v316
    %v904 = vunpack.c.h.b16 %v316
    %v905 = vunpack.c.l.b16 %v317
    %v906 = vunpack.c.h.b16 %v317
    %v907 = vunpack.c.l.b16 %v318
    %v908 = vunpack.c.h.b16 %v318
    %v909 = vunpack.c.l.b16 %v319
    %v910 = vunpack.c.h.b16 %v319
    %v911 = vunpack.c.l.b16 %v320
    %v912 = vunpack.c.h.b16 %v320
    %v913 = vunpack.c.l.b16 %v321
    %v914 = vunpack.c.h.b16 %v321
    %v915 = vunpack.c.l.b16 %v322
    %v916 = vunpack.c.h.b16 %v322
    %v917 = vunpack.c.l.b16 %v323
    %v918 = vunpack.c.h.b16 %v323
    %v919 = vunpack.c.l.b16 %v324
    %v920 = vunpack.c.h.b16 %v324
    %v921 = vunpack.c.l.b16 %v325
    %v922 = vunpack.c.h.b16 %v325
    %v923 = vunpack.c.l.b16 %v326
    %v924 = vunpack.c.h.b16 %v326
    %v925 = vunpack.c.l.b16 %v327
    %v926 = vunpack.c.h.b16 %v327
    %v927 = vunpack.c.l.b16 %v328
    %v928 = vunpack.c.h.b16 %v328
    %v929 = vunpack.c.l.b16 %v329
    %v930 = vunpack.c.h.b16 %v329
    %v931 = vunpack.c.l.b16 %v330
    %v932 = vunpack.c.h.b16 %v330
    %v933 = vunpack.c.l.b16 %v331
    %v934 = vunpack.c.h.b16 %v331
    %v935 = vunpack.c.l.b16 %v332
    %v936 = vunpack.c.h.b16 %v332
    %v937 = vunpack.c.l.b16 %v333
    %v938 = vunpack.c.h.b16 %v333
    %v939 = vunpack.c.l.b16 %v334
    %v940 = vunpack.c.h.b16 %v334
    %v941 = vunpack.c.l.b16 %v335
    %v942 = vunpack.c.h.b16 %v335
    %v943 = vunpack.c.l.b16 %v336
    %v944 = vunpack.c.h.b16 %v336
    %v945 = vunpack.c.l.b16 %v337
    %v946 = vunpack.c.h.b16 %v337
    %v947 = vunpack.c.l.b16 %v338
    %v948 = vunpack.c.h.b16 %v338
    %v949 = vpack.c.b16 %v561, %v557
    %v950 = vpack.c.b16 %v562, %v558
    %v951 = vpack.c.b16 %v563, %v559
    %v952 = vpack.c.b16 %v564, %v560
    %v953 = vpack.c.b16 %v569, %v565
    %v954 = vpack.c.b16 %v570, %v566
    %v955 = vpack.c.b16 %v571, %v567
    %v956 = vpack.c.b16 %v572, %v568
    %v957 = vpack.c.b16 %v577, %v573
    %v958 = vpack.c.b16 %v578, %v574
    %v959 = vpack.c.b16 %v579, %v575
    %v960 = vpack.c.b16 %v580, %v576
    %v961 = vpack.c.b16 %v585, %v581
    %v962 = vpack.c.b16 %v586, %v582
    %v963 = vpack.c.b16 %v587, %v583
    %v964 = vpack.c.b16 %v588, %v584
    %v965 = vpack.c.b16 %v593, %v589
    %v966 = vpack.c.b16 %v594, %v590
    %v967 = vpack.c.b16 %v595, %v591
    %v968 = vpack.c.b16 %v596, %v592
    %v969 = vpack.c.b16 %v601, %v597
    %v970 = vpack.c.b16 %v602, %v598
    %v971 = vpack.c.b16 %v603, %v599
    %v972 = vpack.c.b16 %v604, %v600
    %v973 = vpack.c.b16 %v609, %v605
    %v974 = vpack.c.b16 %v610, %v606
    %v975 = vpack.c.b16 %v611, %v607
    %v976 = vpack.c.b16 %v612, %v608
    %v977 = vpack.c.b16 %v617, %v613
    %v978 = vpack.c.b16 %v618, %v614
    %v979 = vpack.c.b16 %v619, %v615
    %v980 = vpack.c.b16 %v620, %v616
    %v981 = vpack.c.b16 %v625, %v621
    %v982 = vpack.c.b16 %v626, %v622
    %v983 = vpack.c.b16 %v627, %v623
    %v984 = vpack.c.b16 %v628, %v624
    %v985 = vpack.c.b16 %v633, %v629
    %v986 = vpack.c.b16 %v634, %v630
    %v987 = vpack.c.b16 %v635, %v631
    %v988 = vpack.c.b16 %v636, %v632
    %v989 = vpack.c.b16 %v641, %v637
    %v990 = vpack.c.b16 %v642, %v638
    %v991 = vpack.c.b16 %v643, %v639
    %v992 = vpack.c.b16 %v644, %v640
    %v993 = vpack.c.b16 %v649, %v645
    %v994 = vpack.c.b16 %v650, %v646
    %v995 = vpack.c.b16 %v651, %v647
    %v996 = vpack.c.b16 %v652, %v648
    %v997 = vpack.c.b16 %v657, %v653
    %v998 = vpack.c.b16 %v658, %v654
    %v999 = vpack.c.b16 %v659, %v655
    %v1000 = vpack.c.b16 %v660, %v656
    %v1001 = vpack.c.b16 %v665, %v661
    %v1002 = vpack.c.b16 %v666, %v662
    %v1003 = vpack.c.b16 %v667, %v663
    %v1004 = vpack.c.b16 %v668, %v664
    %v1005 = vpack.c.b16 %v673, %v669
    %v1006 = vpack.c.b16 %v674, %v670
    %v1007 = vpack.c.b16 %v675, %v671
    %v1008 = vpack.c.b16 %v676, %v672
    %v1009 = vpack.c.b16 %v681, %v677
    %v1010 = vpack.c.b16 %v682, %v678
    %v1011 = vpack.c.b16 %v683, %v679
    %v1012 = vpack.c.b16 %v684, %v680
    %v1013 = vpack.c.b16 %v689, %v685
    %v1014 = vpack.c.b16 %v690, %v686
    %v1015 = vpack.c.b16 %v691, %v687
    %v1016 = vpack.c.b16 %v692, %v688
    %v1017 = vpack.c.b16 %v697, %v693
    %v1018 = vpack.c.b16 %v698, %v694
    %v1019 = vpack.c.b16 %v699, %v695
    %v1020 = vpack.c.b16 %v700, %v696
    %v1021 = vpack.c.b16 %v705, %v701
    %v1022 = vpack.c.b16 %v706, %v702
    %v1023 = vpack.c.b16 %v707, %v703
    %v1024 = vpack.c.b16 %v708, %v704
    %v1025 = vpack.c.b16 %v713, %v709
    %v1026 = vpack.c.b16 %v714, %v710
    %v1027 = vpack.c.b16 %v715, %v711
    %v1028 = vpack.c.b16 %v716, %v712
    %v1029 = vpack.c.b16 %v721, %v717
    %v1030 = vpack.c.b16 %v722, %v718
    %v1031 = vpack.c.b16 %v723, %v719
    %v1032 = vpack.c.b16 %v724, %v720
    %v1033 = vpack.c.b16 %v729, %v725
    %v1034 = vpack.c.b16 %v730, %v726
    %v1035 = vpack.c.b16 %v731, %v727
    %v1036 = vpack.c.b16 %v732, %v728
    %v1037 = vpack.c.b16 %v737, %v733
    %v1038 = vpack.c.b16 %v738, %v734
    %v1039 = vpack.c.b16 %v739, %v735
    %v1040 = vpack.c.b16 %v740, %v736
    %v1041 = vpack.c.b16 %v745, %v741
    %v1042 = vpack.c.b16 %v746, %v742
    %v1043 = vpack.c.b16 %v747, %v743
    %v1044 = vpack.c.b16 %v748, %v744
    %v1045 = vpack.c.b16 %v753, %v749
    %v1046 = vpack.c.b16 %v754, %v750
    %v1047 = vpack.c.b16 %v755, %v751
    %v1048 = vpack.c.b16 %v756, %v752
    %v1049 = vpack.c.b16 %v761, %v757
    %v1050 = vpack.c.b16 %v762, %v758
    %v1051 = vpack.c.b16 %v763, %v759
    %v1052 = vpack.c.b16 %v764, %v760
    %v1053 = vpack.c.b16 %v769, %v765
    %v1054 = vpack.c.b16 %v770, %v766
    %v1055 = vpack.c.b16 %v771, %v767
    %v1056 = vpack.c.b16 %v772, %v768
    %v1057 = vpack.c.b16 %v777, %v773
    %v1058 = vpack.c.b16 %v778, %v774
    %v1059 = vpack.c.b16 %v779, %v775
    %v1060 = vpack.c.b16 %v780, %v776
    %v1061 = vpack.c.b16 %v785, %v781
    %v1062 = vpack.c.b16 %v786, %v782
    %v1063 = vpack.c.b16 %v787, %v783
    %v1064 = vpack.c.b16 %v788, %v784
    %v1065 = vpack.c.b16 %v793, %v789
    %v1066 = vpack.c.b16 %v794, %v790
    %v1067 = vpack.c.b16 %v795, %v791
    %v1068 = vpack.c.b16 %v796, %v792
    %v1069 = vpack.c.b16 %v801, %v797
    %v1070 = vpack.c.b16 %v802, %v798
    %v1071 = vpack.c.b16 %v803, %v799
    %v1072 = vpack.c.b16 %v804, %v800
    %v1073 = vpack.c.b16 %v809, %v805
    %v1074 = vpack.c.b16 %v810, %v806
    %v1075 = vpack.c.b16 %v811, %v807
    %v1076 = vpack.c.b16 %v812, %v808
    %v1077 = vpack.c.b16 %v817, %v813
    %v1078 = vpack.c.b16 %v818, %v814
    %v1079 = vpack.c.b16 %v819, %v815
    %v1080 = vpack.c.b16 %v820, %v816
    %v1081 = vpack.c.b16 %v825, %v821
    %v1082 = vpack.c.b16 %v826, %v822
    %v1083 = vpack.c.b16 %v827, %v823
    %v1084 = vpack.c.b16 %v828, %v824
    %v1085 = vpack.c.b16 %v833, %v829
    %v1086 = vpack.c.b16 %v834, %v830
    %v1087 = vpack.c.b16 %v835, %v831
    %v1088 = vpack.c.b16 %v836, %v832
    %v1089 = vpack.c.b16 %v841, %v837
    %v1090 = vpack.c.b16 %v842, %v838
    %v1091 = vpack.c.b16 %v843, %v839
    %v1092 = vpack.c.b16 %v844, %v840
    %v1093 = vpack.c.b16 %v849, %v845
    %v1094 = vpack.c.b16 %v850, %v846
    %v1095 = vpack.c.b16 %v851, %v847
    %v1096 = vpack.c.b16 %v852, %v848
    %v1097 = vpack.c.b16 %v857, %v853
    %v1098 = vpack.c.b16 %v858, %v854
    %v1099 = vpack.c.b16 %v859, %v855
    %v1100 = vpack.c.b16 %v860, %v856
    %v1101 = vpack.c.b16 %v865, %v861
    %v1102 = vpack.c.b16 %v866, %v862
    %v1103 = vpack.c.b16 %v867, %v863
    %v1104 = vpack.c.b16 %v868, %v864
    %v1105 = vpack.c.b16 %v873, %v869
    %v1106 = vpack.c.b16 %v874, %v870
    %v1107 = vpack.c.b16 %v875, %v871
    %v1108 = vpack.c.b16 %v876, %v872
    %v1109 = vpack.c.b16 %v881, %v877
    %v1110 = vpack.c.b16 %v882, %v878
    %v1111 = vpack.c.b16 %v883, %v879
    %v1112 = vpack.c.b16 %v884, %v880
    %v1113 = vpack.c.b16 %v889, %v885
    %v1114 = vpack.c.b16 %v890, %v886
    %v1115 = vpack.c.b16 %v891, %v887
    %v1116 = vpack.c.b16 %v892, %v888
    %v1117 = vpack.c.b16 %v897, %v893
    %v1118 = vpack.c.b16 %v898, %v894
    %v1119 = vpack.c.b16 %v899, %v895
    %v1120 = vpack.c.b16 %v900, %v896
    %v1121 = vpack.c.b16 %v905, %v901
    %v1122 = vpack.c.b16 %v906, %v902
    %v1123 = vpack.c.b16 %v907, %v903
    %v1124 = vpack.c.b16 %v908, %v904
    %v1125 = vpack.c.b16 %v913, %v909
    %v1126 = vpack.c.b16 %v914, %v910
    %v1127 = vpack.c.b16 %v915, %v911
    %v1128 = vpack.c.b16 %v916, %v912
    %v1129 = vpack.c.b16 %v921, %v917
    %v1130 = vpack.c.b16 %v922, %v918
    %v1131 = vpack.c.b16 %v923, %v919
    %v1132 = vpack.c.b16 %v924, %v920
    %v1133 = vpack.c.b16 %v929, %v925
    %v1134 = vpack.c.b16 %v930, %v926
    %v1135 = vpack.c.b16 %v931, %v927
    %v1136 = vpack.c.b16 %v932, %v928
    %v1137 = vpack.c.b16 %v937, %v933
    %v1138 = vpack.c.b16 %v938, %v934
    %v1139 = vpack.c.b16 %v939, %v935
    %v1140 = vpack.c.b16 %v940, %v936
    %v1141 = vpack.c.b16 %v945, %v941
    %v1142 = vpack.c.b16 %v946, %v942
    %v1143 = vpack.c.b16 %v947, %v943
    %v1144 = vpack.c.b16 %v948, %v944
    %vm1341 = vcmask 130048
    %v1343 = vsel %vm1341, %v142, 0
    %1345 = vmatprep.subr.bf16.mxu0 %v950
    %1346 = vmatpush1.bf16.msra.mxu0 %v949
    %1347 = vmatprep.subr.bf16.mxu0 %v954
    %1348 = vmatpush1.bf16.msra.mxu0 %v953
    %1349 = vmatprep.subr.bf16.mxu0 %v958
    %1350 = vmatpush1.bf16.msra.mxu0 %v957
    %1351 = vmatprep.subr.bf16.mxu0 %v962
    %1352 = vmatpush1.bf16.msra.mxu0 %v961
    %1353 = vmatprep.subr.bf16.mxu0 %v966
    %1354 = vmatpush1.bf16.msra.mxu0 %v965
    %1355 = vmatprep.subr.bf16.mxu0 %v970
    %1356 = vmatpush1.bf16.msra.mxu0 %v969
    %1357 = vmatprep.subr.bf16.mxu0 %v974
    %1358 = vmatpush1.bf16.msra.mxu0 %v973
    %1359 = vmatprep.subr.bf16.mxu0 %v978
    %1360 = vmatpush1.bf16.msra.mxu0 %v977
    %1361 = vmatprep.subr.bf16.mxu0 %v982
    %1362 = vmatpush1.bf16.msra.mxu0 %v981
    %1363 = vmatprep.subr.bf16.mxu0 %v986
    %1364 = vmatpush1.bf16.msra.mxu0 %v985
    %1365 = vmatprep.subr.bf16.mxu0 %v990
    %1366 = vmatpush1.bf16.msra.mxu0 %v989
    %1367 = vmatprep.subr.bf16.mxu0 %v994
    %1368 = vmatpush1.bf16.msra.mxu0 %v993
    %1369 = vmatprep.subr.bf16.mxu0 %v998
    %1370 = vmatpush1.bf16.msra.mxu0 %v997
    %1371 = vmatprep.subr.bf16.mxu0 %v1002
    %1372 = vmatpush1.bf16.msra.mxu0 %v1001
    %1373 = vmatprep.subr.bf16.mxu0 %v1006
    %1374 = vmatpush1.bf16.msra.mxu0 %v1005
    %1375 = vmatprep.subr.bf16.mxu0 %v1010
    %1376 = vmatpush1.bf16.msra.mxu0 %v1009
    %1377 = vmatprep.mubr.bf16.mxu0 %v137
    %1378 = vmatmul.mubr.bf16.gmra.mrb[0].mxu0 %v136
    %v1379 = vpop.f32.mrb[0].mxu0
    %v1380 = vadd.f32 %v344, %v1379
    %v1381 = vpop.f32.mrb[0].mxu0
    %v1382 = vadd.f32 %v348, %v1381
    %v1383 = vpop.f32.mrb[0].mxu0
    %v1384 = vadd.f32 %v344, %v1383
    %v1385 = vpop.f32.mrb[0].mxu0
    %v1386 = vadd.f32 %v348, %v1385
    %1387 = vdwg.mxu0
    %1388 = vmatprep.subr.bf16.mxu0 %v1014
    %1389 = vmatpush1.bf16.msra.mxu0 %v1013
    %1390 = vmatprep.subr.bf16.mxu0 %v1018
    %1391 = vmatpush1.bf16.msra.mxu0 %v1017
    %1392 = vmatprep.subr.bf16.mxu0 %v1022
    %1393 = vmatpush1.bf16.msra.mxu0 %v1021
    %1394 = vmatprep.subr.bf16.mxu0 %v1026
    %1395 = vmatpush1.bf16.msra.mxu0 %v1025
    %1396 = vmatprep.subr.bf16.mxu0 %v1030
    %1397 = vmatpush1.bf16.msra.mxu0 %v1029
    %1398 = vmatprep.subr.bf16.mxu0 %v1034
    %1399 = vmatpush1.bf16.msra.mxu0 %v1033
    %1400 = vmatprep.subr.bf16.mxu0 %v1038
    %1401 = vmatpush1.bf16.msra.mxu0 %v1037
    %1402 = vmatprep.subr.bf16.mxu0 %v1042
    %1403 = vmatpush1.bf16.msra.mxu0 %v1041
    %1404 = vmatprep.subr.bf16.mxu0 %v1046
    %1405 = vmatpush1.bf16.msra.mxu0 %v1045
    %1406 = vmatprep.subr.bf16.mxu0 %v1050
    %1407 = vmatpush1.bf16.msra.mxu0 %v1049
    %1408 = vmatprep.subr.bf16.mxu0 %v1054
    %1409 = vmatpush1.bf16.msra.mxu0 %v1053
    %1410 = vmatprep.subr.bf16.mxu0 %v1058
    %1411 = vmatpush1.bf16.msra.mxu0 %v1057
    %1412 = vmatprep.subr.bf16.mxu0 %v1062
    %1413 = vmatpush1.bf16.msra.mxu0 %v1061
    %1414 = vmatprep.subr.bf16.mxu0 %v1066
    %1415 = vmatpush1.bf16.msra.mxu0 %v1065
    %1416 = vmatprep.subr.bf16.mxu0 %v1070
    %1417 = vmatpush1.bf16.msra.mxu0 %v1069
    %1418 = vmatprep.subr.bf16.mxu0 %v1074
    %1419 = vmatpush1.bf16.msra.mxu0 %v1073
    %1420 = vmatprep.mubr.bf16.mxu0 %v139
    %1421 = vmatmul.mubr.bf16.gmra.mrb[0].mxu0 %v138
    %v1422 = vpop.f32.mrb[0].mxu0
    %v1423 = vadd.f32 %v1380, %v1422
    %v1424 = vpop.f32.mrb[0].mxu0
    %v1425 = vadd.f32 %v1382, %v1424
    %v1426 = vpop.f32.mrb[0].mxu0
    %v1427 = vadd.f32 %v1384, %v1426
    %v1428 = vpop.f32.mrb[0].mxu0
    %v1429 = vadd.f32 %v1386, %v1428
    %1430 = vdwg.mxu0
    %1431 = vmatprep.subr.bf16.mxu0 %v1078
    %1432 = vmatpush1.bf16.msra.mxu0 %v1077
    %1433 = vmatprep.subr.bf16.mxu0 %v1082
    %1434 = vmatpush1.bf16.msra.mxu0 %v1081
    %1435 = vmatprep.subr.bf16.mxu0 %v1086
    %1436 = vmatpush1.bf16.msra.mxu0 %v1085
    %1437 = vmatprep.subr.bf16.mxu0 %v1090
    %1438 = vmatpush1.bf16.msra.mxu0 %v1089
    %1439 = vmatprep.subr.bf16.mxu0 %v1094
    %1440 = vmatpush1.bf16.msra.mxu0 %v1093
    %1441 = vmatprep.subr.bf16.mxu0 %v1098
    %1442 = vmatpush1.bf16.msra.mxu0 %v1097
    %1443 = vmatprep.subr.bf16.mxu0 %v1102
    %1444 = vmatpush1.bf16.msra.mxu0 %v1101
    %1445 = vmatprep.subr.bf16.mxu0 %v1106
    %1446 = vmatpush1.bf16.msra.mxu0 %v1105
    %1447 = vmatprep.subr.bf16.mxu0 %v1110
    %1448 = vmatpush1.bf16.msra.mxu0 %v1109
    %1449 = vmatprep.subr.bf16.mxu0 %v1114
    %1450 = vmatpush1.bf16.msra.mxu0 %v1113
    %1451 = vmatprep.subr.bf16.mxu0 %v1118
    %1452 = vmatpush1.bf16.msra.mxu0 %v1117
    %1453 = vmatprep.subr.bf16.mxu0 %v1122
    %1454 = vmatpush1.bf16.msra.mxu0 %v1121
    %1455 = vmatprep.subr.bf16.mxu0 %v1126
    %1456 = vmatpush1.bf16.msra.mxu0 %v1125
    %1457 = vmatprep.subr.bf16.mxu0 %v1130
    %1458 = vmatpush1.bf16.msra.mxu0 %v1129
    %1459 = vmatprep.subr.bf16.mxu0 %v1134
    %1460 = vmatpush1.bf16.msra.mxu0 %v1133
    %1461 = vmatprep.subr.bf16.mxu0 %v1138
    %1462 = vmatpush1.bf16.msra.mxu0 %v1137
    %1463 = vmatprep.mubr.bf16.mxu0 %v141
    %1464 = vmatmul.mubr.bf16.gmra.mrb[0].mxu0 %v140
    %v1465 = vpop.f32.mrb[0].mxu0
    %v1466 = vadd.f32 %v1423, %v1465
    %v1467 = vpop.f32.mrb[0].mxu0
    %v1468 = vadd.f32 %v1425, %v1467
    %v1469 = vpop.f32.mrb[0].mxu0
    %v1470 = vadd.f32 %v1427, %v1469
    %v1471 = vpop.f32.mrb[0].mxu0
    %v1472 = vadd.f32 %v1429, %v1471
    %1473 = vdwg.mxu0
    %1474 = vmatprep.subr.bf16.mxu0 %v1142
    %1475 = vmatpush1.bf16.msra.mxu0 %v1141
    %1476 = vmatprep.subr.bf16.mxu0 0
    %1477 = vmatpush1.bf16.msra.mxu0 0
    %1478 = vmatprep.subr.bf16.mxu0 0
    %1479 = vmatpush1.bf16.msra.mxu0 0
    %1480 = vmatprep.subr.bf16.mxu0 0
    %1481 = vmatpush1.bf16.msra.mxu0 0
    %1482 = vmatprep.subr.bf16.mxu0 0
    %1483 = vmatpush1.bf16.msra.mxu0 0
    %1484 = vmatprep.subr.bf16.mxu0 0
    %1485 = vmatpush1.bf16.msra.mxu0 0
    %1486 = vmatprep.subr.bf16.mxu0 0
    %1487 = vmatpush1.bf16.msra.mxu0 0
    %1488 = vmatprep.subr.bf16.mxu0 0
    %1489 = vmatpush1.bf16.msra.mxu0 0
    %1490 = vmatprep.subr.bf16.mxu0 0
    %1491 = vmatpush1.bf16.msra.mxu0 0
    %1492 = vmatprep.subr.bf16.mxu0 0
    %1493 = vmatpush1.bf16.msra.mxu0 0
    %1494 = vmatprep.subr.bf16.mxu0 0
    %1495 = vmatpush1.bf16.msra.mxu0 0
    %1496 = vmatprep.subr.bf16.mxu0 0
    %1497 = vmatpush1.bf16.msra.mxu0 0
    %1498 = vmatprep.subr.bf16.mxu0 0
    %1499 = vmatpush1.bf16.msra.mxu0 0
    %1500 = vmatprep.subr.bf16.mxu0 0
    %1501 = vmatpush1.bf16.msra.mxu0 0
    %1502 = vmatprep.subr.bf16.mxu0 0
    %1503 = vmatpush1.bf16.msra.mxu0 0
    %1504 = vmatprep.subr.bf16.mxu0 0
    %1505 = vmatpush1.bf16.msra.mxu0 0
    %1506 = vmatprep.mubr.bf16.mxu0 0
    %1507 = vmatmul.mubr.bf16.gmra.mrb[0].mxu0 %v1343
    %v1508 = vpop.f32.mrb[0].mxu0
    %v1509 = vadd.f32 %v1466, %v1508
    %v1510 = vpop.f32.mrb[0].mxu0
    %v1511 = vadd.f32 %v1468, %v1510
    %v1512 = vpop.f32.mrb[0].mxu0
    %v1513 = vadd.f32 %v1470, %v1512
    %v1514 = vpop.f32.mrb[0].mxu0
    %v1515 = vadd.f32 %v1472, %v1514
    %1516 = vdwg.mxu0
    %1517 = vmatprep.subr.bf16.mxu0 %v952
    %1518 = vmatpush1.bf16.msra.mxu0 %v951
    %1519 = vmatprep.subr.bf16.mxu0 %v956
    %1520 = vmatpush1.bf16.msra.mxu0 %v955
    %1521 = vmatprep.subr.bf16.mxu0 %v960
    %1522 = vmatpush1.bf16.msra.mxu0 %v959
    %1523 = vmatprep.subr.bf16.mxu0 %v964
    %1524 = vmatpush1.bf16.msra.mxu0 %v963
    %1525 = vmatprep.subr.bf16.mxu0 %v968
    %1526 = vmatpush1.bf16.msra.mxu0 %v967
    %1527 = vmatprep.subr.bf16.mxu0 %v972
    %1528 = vmatpush1.bf16.msra.mxu0 %v971
    %1529 = vmatprep.subr.bf16.mxu0 %v976
    %1530 = vmatpush1.bf16.msra.mxu0 %v975
    %1531 = vmatprep.subr.bf16.mxu0 %v980
    %1532 = vmatpush1.bf16.msra.mxu0 %v979
    %1533 = vmatprep.subr.bf16.mxu0 %v984
    %1534 = vmatpush1.bf16.msra.mxu0 %v983
    %1535 = vmatprep.subr.bf16.mxu0 %v988
    %1536 = vmatpush1.bf16.msra.mxu0 %v987
    %1537 = vmatprep.subr.bf16.mxu0 %v992
    %1538 = vmatpush1.bf16.msra.mxu0 %v991
    %1539 = vmatprep.subr.bf16.mxu0 %v996
    %1540 = vmatpush1.bf16.msra.mxu0 %v995
    %1541 = vmatprep.subr.bf16.mxu0 %v1000
    %1542 = vmatpush1.bf16.msra.mxu0 %v999
    %1543 = vmatprep.subr.bf16.mxu0 %v1004
    %1544 = vmatpush1.bf16.msra.mxu0 %v1003
    %1545 = vmatprep.subr.bf16.mxu0 %v1008
    %1546 = vmatpush1.bf16.msra.mxu0 %v1007
    %1547 = vmatprep.subr.bf16.mxu0 %v1012
    %1548 = vmatpush1.bf16.msra.mxu0 %v1011
    %1549 = vmatprep.mubr.bf16.mxu0 %v137
    %1550 = vmatmul.mubr.bf16.gmra.mrb[0].mxu0 %v136
    %v1551 = vpop.f32.mrb[0].mxu0
    %v1552 = vadd.f32 %v352, %v1551
    %v1553 = vpop.f32.mrb[0].mxu0
    %v1554 = vadd.f32 %v356, %v1553
    %v1555 = vpop.f32.mrb[0].mxu0
    %v1556 = vadd.f32 %v352, %v1555
    %v1557 = vpop.f32.mrb[0].mxu0
    %v1558 = vadd.f32 %v356, %v1557
    %1559 = vdwg.mxu0
    %1560 = vmatprep.subr.bf16.mxu0 %v1016
    %1561 = vmatpush1.bf16.msra.mxu0 %v1015
    %1562 = vmatprep.subr.bf16.mxu0 %v1020
    %1563 = vmatpush1.bf16.msra.mxu0 %v1019
    %1564 = vmatprep.subr.bf16.mxu0 %v1024
    %1565 = vmatpush1.bf16.msra.mxu0 %v1023
    %1566 = vmatprep.subr.bf16.mxu0 %v1028
    %1567 = vmatpush1.bf16.msra.mxu0 %v1027
    %1568 = vmatprep.subr.bf16.mxu0 %v1032
    %1569 = vmatpush1.bf16.msra.mxu0 %v1031
    %1570 = vmatprep.subr.bf16.mxu0 %v1036
    %1571 = vmatpush1.bf16.msra.mxu0 %v1035
    %1572 = vmatprep.subr.bf16.mxu0 %v1040
    %1573 = vmatpush1.bf16.msra.mxu0 %v1039
    %1574 = vmatprep.subr.bf16.mxu0 %v1044
    %1575 = vmatpush1.bf16.msra.mxu0 %v1043
    %1576 = vmatprep.subr.bf16.mxu0 %v1048
    %1577 = vmatpush1.bf16.msra.mxu0 %v1047
    %1578 = vmatprep.subr.bf16.mxu0 %v1052
    %1579 = vmatpush1.bf16.msra.mxu0 %v1051
    %1580 = vmatprep.subr.bf16.mxu0 %v1056
    %1581 = vmatpush1.bf16.msra.mxu0 %v1055
    %1582 = vmatprep.subr.bf16.mxu0 %v1060
    %1583 = vmatpush1.bf16.msra.mxu0 %v1059
    %1584 = vmatprep.subr.bf16.mxu0 %v1064
    %1585 = vmatpush1.bf16.msra.mxu0 %v1063
    %1586 = vmatprep.subr.bf16.mxu0 %v1068
    %1587 = vmatpush1.bf16.msra.mxu0 %v1067
    %1588 = vmatprep.subr.bf16.mxu0 %v1072
    %1589 = vmatpush1.bf16.msra.mxu0 %v1071
    %1590 = vmatprep.subr.bf16.mxu0 %v1076
    %1591 = vmatpush1.bf16.msra.mxu0 %v1075
    %1592 = vmatprep.mubr.bf16.mxu0 %v139
    %1593 = vmatmul.mubr.bf16.gmra.mrb[0].mxu0 %v138
    %v1594 = vpop.f32.mrb[0].mxu0
    %v1595 = vadd.f32 %v1552, %v1594
    %v1596 = vpop.f32.mrb[0].mxu0
    %v1597 = vadd.f32 %v1554, %v1596
    %v1598 = vpop.f32.mrb[0].mxu0
    %v1599 = vadd.f32 %v1556, %v1598
    %v1600 = vpop.f32.mrb[0].mxu0
    %v1601 = vadd.f32 %v1558, %v1600
    %1602 = vdwg.mxu0
    %1603 = vmatprep.subr.bf16.mxu0 %v1080
    %1604 = vmatpush1.bf16.msra.mxu0 %v1079
    %1605 = vmatprep.subr.bf16.mxu0 %v1084
    %1606 = vmatpush1.bf16.msra.mxu0 %v1083
    %1607 = vmatprep.subr.bf16.mxu0 %v1088
    %1608 = vmatpush1.bf16.msra.mxu0 %v1087
    %1609 = vmatprep.subr.bf16.mxu0 %v1092
    %1610 = vmatpush1.bf16.msra.mxu0 %v1091
    %1611 = vmatprep.subr.bf16.mxu0 %v1096
    %1612 = vmatpush1.bf16.msra.mxu0 %v1095
    %1613 = vmatprep.subr.bf16.mxu0 %v1100
    %1614 = vmatpush1.bf16.msra.mxu0 %v1099
    %1615 = vmatprep.subr.bf16.mxu0 %v1104
    %1616 = vmatpush1.bf16.msra.mxu0 %v1103
    %1617 = vmatprep.subr.bf16.mxu0 %v1108
    %1618 = vmatpush1.bf16.msra.mxu0 %v1107
    %1619 = vmatprep.subr.bf16.mxu0 %v1112
    %1620 = vmatpush1.bf16.msra.mxu0 %v1111
    %1621 = vmatprep.subr.bf16.mxu0 %v1116
    %1622 = vmatpush1.bf16.msra.mxu0 %v1115
    %1623 = vmatprep.subr.bf16.mxu0 %v1120
    %1624 = vmatpush1.bf16.msra.mxu0 %v1119
    %1625 = vmatprep.subr.bf16.mxu0 %v1124
    %1626 = vmatpush1.bf16.msra.mxu0 %v1123
    %1627 = vmatprep.subr.bf16.mxu0 %v1128
    %1628 = vmatpush1.bf16.msra.mxu0 %v1127
    %1629 = vmatprep.subr.bf16.mxu0 %v1132
    %1630 = vmatpush1.bf16.msra.mxu0 %v1131
    %1631 = vmatprep.subr.bf16.mxu0 %v1136
    %1632 = vmatpush1.bf16.msra.mxu0 %v1135
    %1633 = vmatprep.subr.bf16.mxu0 %v1140
    %1634 = vmatpush1.bf16.msra.mxu0 %v1139
    %1635 = vmatprep.mubr.bf16.mxu0 %v141
    %1636 = vmatmul.mubr.bf16.gmra.mrb[0].mxu0 %v140
    %v1637 = vpop.f32.mrb[0].mxu0
    %v1638 = vadd.f32 %v1595, %v1637
    %v1639 = vpop.f32.mrb[0].mxu0
    %v1640 = vadd.f32 %v1597, %v1639
    %v1641 = vpop.f32.mrb[0].mxu0
    %v1642 = vadd.f32 %v1599, %v1641
    %v1643 = vpop.f32.mrb[0].mxu0
    %v1644 = vadd.f32 %v1601, %v1643
    %1645 = vdwg.mxu0
    %1646 = vmatprep.subr.bf16.mxu0 %v1144
    %1647 = vmatpush1.bf16.msra.mxu0 %v1143
    %1648 = vmatprep.subr.bf16.mxu0 0
    %1649 = vmatpush1.bf16.msra.mxu0 0
    %1650 = vmatprep.subr.bf16.mxu0 0
    %1651 = vmatpush1.bf16.msra.mxu0 0
    %1652 = vmatprep.subr.bf16.mxu0 0
    %1653 = vmatpush1.bf16.msra.mxu0 0
    %1654 = vmatprep.subr.bf16.mxu0 0
    %1655 = vmatpush1.bf16.msra.mxu0 0
    %1656 = vmatprep.subr.bf16.mxu0 0
    %1657 = vmatpush1.bf16.msra.mxu0 0
    %1658 = vmatprep.subr.bf16.mxu0 0
    %1659 = vmatpush1.bf16.msra.mxu0 0
    %1660 = vmatprep.subr.bf16.mxu0 0
    %1661 = vmatpush1.bf16.msra.mxu0 0
    %1662 = vmatprep.subr.bf16.mxu0 0
    %1663 = vmatpush1.bf16.msra.mxu0 0
    %1664 = vmatprep.subr.bf16.mxu0 0
    %1665 = vmatpush1.bf16.msra.mxu0 0
    %1666 = vmatprep.subr.bf16.mxu0 0
    %1667 = vmatpush1.bf16.msra.mxu0 0
    %1668 = vmatprep.subr.bf16.mxu0 0
    %1669 = vmatpush1.bf16.msra.mxu0 0
    %1670 = vmatprep.subr.bf16.mxu0 0
    %1671 = vmatpush1.bf16.msra.mxu0 0
    %1672 = vmatprep.subr.bf16.mxu0 0
    %1673 = vmatpush1.bf16.msra.mxu0 0
    %1674 = vmatprep.subr.bf16.mxu0 0
    %1675 = vmatpush1.bf16.msra.mxu0 0
    %1676 = vmatprep.subr.bf16.mxu0 0
    %1677 = vmatpush1.bf16.msra.mxu0 0
    %1678 = vmatprep.mubr.bf16.mxu0 0
    %1679 = vmatmul.mubr.bf16.gmra.mrb[0].mxu0 %v1343
    %v1680 = vpop.f32.mrb[0].mxu0
    %v1681 = vadd.f32 %v1638, %v1680
    %v1682 = vpop.f32.mrb[0].mxu0
    %v1683 = vadd.f32 %v1640, %v1682
    %v1684 = vpop.f32.mrb[0].mxu0
    %v1685 = vadd.f32 %v1642, %v1684
    %v1686 = vpop.f32.mrb[0].mxu0
    %v1687 = vadd.f32 %v1644, %v1686
    %1688 = vdwg.mxu0
    %v1689 = vmax.f32 %v1509, 0.0
    %v1690 = vmax.f32 %v1511, 0.0
    %v1691 = vmax.f32 %v1681, 0.0
    %v1692 = vmax.f32 %v1683, 0.0
    %v1693 = vmax.f32 %v1513, 0.0
    %v1694 = vmax.f32 %v1515, 0.0
    %v1695 = vmax.f32 %v1685, 0.0
    %v1696 = vmax.f32 %v1687, 0.0
    %v1697 = vpack.c.bf16 %v1693, %v1689
    %v1698 = vpack.c.bf16 %v1694, %v1690
    %v1699 = vpack.c.bf16 %v1695, %v1691
    %v1700 = vpack.c.bf16 %v1696, %v1692
    %v1701 = vld [vmem:[#allocation8] sm:$0xff]
    %v1702 = vld [vmem:[#allocation8 + $0x8] sm:$0xff]
    %v1703 = vld [vmem:[#allocation8 + $0x10] sm:$0xff]
    %v1704 = vld [vmem:[#allocation8 + $0x18] sm:$0xff]
    %v1705 = vld [vmem:[#allocation8 + $0x20] sm:$0xff]
    %v1706 = vld [vmem:[#allocation8 + $0x28] sm:$0xff]
    %v1707 = vld [vmem:[#allocation8 + $0x30] sm:$0xff]
    %v1708 = vld [vmem:[#allocation8 + $0x38] sm:$0xff]
    %v1709 = vld [vmem:[#allocation8 + $0x40] sm:$0xff]
    %v1710 = vld [vmem:[#allocation8 + $0x48] sm:$0xff]
    %v1711 = vld [vmem:[#allocation8 + $0x50] sm:$0xff]
    %v1712 = vld [vmem:[#allocation8 + $0x58] sm:$0xff]
    %v1713 = vld [vmem:[#allocation8 + $0x60] sm:$0xff]
    %v1714 = vld [vmem:[#allocation8 + $0x68] sm:$0xff]
    %v1715 = vld [vmem:[#allocation8 + $0x70] sm:$0xff]
    %v1716 = vld [vmem:[#allocation8 + $0x78] sm:$0xff]
    %v1717 = vld [vmem:[#allocation8 + $0x80] sm:$0xff]
    %v1718 = vld [vmem:[#allocation8 + $0x88] sm:$0xff]
    %v1719 = vld [vmem:[#allocation8 + $0x90] sm:$0xff]
    %v1720 = vld [vmem:[#allocation8 + $0x98] sm:$0xff]
    %v1721 = vld [vmem:[#allocation8 + $0xa0] sm:$0xff]
    %v1722 = vld [vmem:[#allocation8 + $0xa8] sm:$0xff]
    %v1723 = vld [vmem:[#allocation8 + $0xb0] sm:$0xff]
    %v1724 = vld [vmem:[#allocation8 + $0xb8] sm:$0xff]
    %v1725 = vld [vmem:[#allocation8 + $0xc0] sm:$0xff]
    %v1726 = vld [vmem:[#allocation8 + $0xc8] sm:$0xff]
    %v1727 = vld [vmem:[#allocation8 + $0xd0] sm:$0xff]
    %v1728 = vld [vmem:[#allocation8 + $0xd8] sm:$0xff]
    %v1729 = vld [vmem:[#allocation8 + $0xe0] sm:$0xff]
    %v1730 = vld [vmem:[#allocation8 + $0xe8] sm:$0xff]
    %v1731 = vld [vmem:[#allocation8 + $0xf0] sm:$0xff]
    %v1732 = vld [vmem:[#allocation8 + $0xf8] sm:$0xff]
    %v1733 = vld [vmem:[#allocation8 + $0x100] sm:$0xff]
    %v1734 = vld [vmem:[#allocation8 + $0x108] sm:$0xff]
    %v1735 = vld [vmem:[#allocation8 + $0x110] sm:$0xff]
    %v1736 = vld [vmem:[#allocation8 + $0x118] sm:$0xff]
    %v1737 = vld [vmem:[#allocation8 + $0x120] sm:$0xff]
    %v1738 = vld [vmem:[#allocation8 + $0x128] sm:$0xff]
    %v1739 = vld [vmem:[#allocation8 + $0x130] sm:$0xff]
    %v1740 = vld [vmem:[#allocation8 + $0x138] sm:$0xff]
    %v1741 = vld [vmem:[#allocation8 + $0x140] sm:$0xff]
    %v1742 = vld [vmem:[#allocation8 + $0x148] sm:$0xff]
    %v1743 = vld [vmem:[#allocation8 + $0x150] sm:$0xff]
    %v1744 = vld [vmem:[#allocation8 + $0x158] sm:$0xff]
    %v1745 = vld [vmem:[#allocation8 + $0x160] sm:$0xff]
    %v1746 = vld [vmem:[#allocation8 + $0x168] sm:$0xff]
    %v1747 = vld [vmem:[#allocation8 + $0x170] sm:$0xff]
    %v1748 = vld [vmem:[#allocation8 + $0x178] sm:$0xff]
    %v1749 = vld [vmem:[#allocation8 + $0x180] sm:$0xff]
    %v1750 = vld [vmem:[#allocation8 + $0x188] sm:$0xff]
    %v1751 = vld [vmem:[#allocation8 + $0x190] sm:$0xff]
    %v1752 = vld [vmem:[#allocation8 + $0x198] sm:$0xff]
    %v1753 = vld [vmem:[#allocation8 + $0x1a0] sm:$0xff]
    %v1754 = vld [vmem:[#allocation8 + $0x1a8] sm:$0xff]
    %v1755 = vld [vmem:[#allocation8 + $0x1b0] sm:$0xff]
    %v1756 = vld [vmem:[#allocation8 + $0x1b8] sm:$0xff]
    %v1757 = vld [vmem:[#allocation8 + $0x1c0] sm:$0xff]
    %v1758 = vld [vmem:[#allocation8 + $0x1c8] sm:$0xff]
    %v1759 = vld [vmem:[#allocation8 + $0x1d0] sm:$0xff]
    %v1760 = vld [vmem:[#allocation8 + $0x1d8] sm:$0xff]
    %v1761 = vld [vmem:[#allocation8 + $0x1e0] sm:$0xff]
    %v1762 = vld [vmem:[#allocation8 + $0x1e8] sm:$0xff]
    %v1763 = vld [vmem:[#allocation8 + $0x1f0] sm:$0xff]
    %v1764 = vld [vmem:[#allocation8 + $0x1f8] sm:$0xff]
    %v1765 = vld [vmem:[%s5] sm:$0x3]
    %v1767 = vlaneseq
    %v1768 = vshrl.u32 %v1767, 7
    %v1769 = vsub.s32 0, %v1768
    %v1770 = vrot.slane %v1765, %v1769
    %v1771 = vlaneseq
    %v1772 = vshrl.u32 %v1771, 7
    %v1773 = vsub.s32 1, %v1772
    %v1774 = vrot.slane %v1765, %v1773
    %v1841 = vunpack.c.l.b16 %v1701
    %v1842 = vunpack.c.h.b16 %v1701
    %v1843 = vunpack.c.l.b16 %v1702
    %v1844 = vunpack.c.h.b16 %v1702
    %v1845 = vunpack.c.l.b16 %v1703
    %v1846 = vunpack.c.h.b16 %v1703
    %v1847 = vunpack.c.l.b16 %v1704
    %v1848 = vunpack.c.h.b16 %v1704
    %v1849 = vunpack.c.l.b16 %v1705
    %v1850 = vunpack.c.h.b16 %v1705
    %v1851 = vunpack.c.l.b16 %v1706
    %v1852 = vunpack.c.h.b16 %v1706
    %v1853 = vunpack.c.l.b16 %v1707
    %v1854 = vunpack.c.h.b16 %v1707
    %v1855 = vunpack.c.l.b16 %v1708
    %v1856 = vunpack.c.h.b16 %v1708
    %v1857 = vunpack.c.l.b16 %v1709
    %v1858 = vunpack.c.h.b16 %v1709
    %v1859 = vunpack.c.l.b16 %v1710
    %v1860 = vunpack.c.h.b16 %v1710
    %v1861 = vunpack.c.l.b16 %v1711
    %v1862 = vunpack.c.h.b16 %v1711
    %v1863 = vunpack.c.l.b16 %v1712
    %v1864 = vunpack.c.h.b16 %v1712
    %v1865 = vunpack.c.l.b16 %v1713
    %v1866 = vunpack.c.h.b16 %v1713
    %v1867 = vunpack.c.l.b16 %v1714
    %v1868 = vunpack.c.h.b16 %v1714
    %v1869 = vunpack.c.l.b16 %v1715
    %v1870 = vunpack.c.h.b16 %v1715
    %v1871 = vunpack.c.l.b16 %v1716
    %v1872 = vunpack.c.h.b16 %v1716
    %v1873 = vunpack.c.l.b16 %v1717
    %v1874 = vunpack.c.h.b16 %v1717
    %v1875 = vunpack.c.l.b16 %v1718
    %v1876 = vunpack.c.h.b16 %v1718
    %v1877 = vunpack.c.l.b16 %v1719
    %v1878 = vunpack.c.h.b16 %v1719
    %v1879 = vunpack.c.l.b16 %v1720
    %v1880 = vunpack.c.h.b16 %v1720
    %v1881 = vunpack.c.l.b16 %v1721
    %v1882 = vunpack.c.h.b16 %v1721
    %v1883 = vunpack.c.l.b16 %v1722
    %v1884 = vunpack.c.h.b16 %v1722
    %v1885 = vunpack.c.l.b16 %v1723
    %v1886 = vunpack.c.h.b16 %v1723
    %v1887 = vunpack.c.l.b16 %v1724
    %v1888 = vunpack.c.h.b16 %v1724
    %v1889 = vunpack.c.l.b16 %v1725
    %v1890 = vunpack.c.h.b16 %v1725
    %v1891 = vunpack.c.l.b16 %v1726
    %v1892 = vunpack.c.h.b16 %v1726
    %v1893 = vunpack.c.l.b16 %v1727
    %v1894 = vunpack.c.h.b16 %v1727
    %v1895 = vunpack.c.l.b16 %v1728
    %v1896 = vunpack.c.h.b16 %v1728
    %v1897 = vunpack.c.l.b16 %v1729
    %v1898 = vunpack.c.h.b16 %v1729
    %v1899 = vunpack.c.l.b16 %v1730
    %v1900 = vunpack.c.h.b16 %v1730
    %v1901 = vunpack.c.l.b16 %v1731
    %v1902 = vunpack.c.h.b16 %v1731
    %v1903 = vunpack.c.l.b16 %v1732
    %v1904 = vunpack.c.h.b16 %v1732
    %v1905 = vunpack.c.l.b16 %v1733
    %v1906 = vunpack.c.h.b16 %v1733
    %v1907 = vunpack.c.l.b16 %v1734
    %v1908 = vunpack.c.h.b16 %v1734
    %v1909 = vunpack.c.l.b16 %v1735
    %v1910 = vunpack.c.h.b16 %v1735
    %v1911 = vunpack.c.l.b16 %v1736
    %v1912 = vunpack.c.h.b16 %v1736
    %v1913 = vunpack.c.l.b16 %v1737
    %v1914 = vunpack.c.h.b16 %v1737
    %v1915 = vunpack.c.l.b16 %v1738
    %v1916 = vunpack.c.h.b16 %v1738
    %v1917 = vunpack.c.l.b16 %v1739
    %v1918 = vunpack.c.h.b16 %v1739
    %v1919 = vunpack.c.l.b16 %v1740
    %v1920 = vunpack.c.h.b16 %v1740
    %v1921 = vunpack.c.l.b16 %v1741
    %v1922 = vunpack.c.h.b16 %v1741
    %v1923 = vunpack.c.l.b16 %v1742
    %v1924 = vunpack.c.h.b16 %v1742
    %v1925 = vunpack.c.l.b16 %v1743
    %v1926 = vunpack.c.h.b16 %v1743
    %v1927 = vunpack.c.l.b16 %v1744
    %v1928 = vunpack.c.h.b16 %v1744
    %v1929 = vunpack.c.l.b16 %v1745
    %v1930 = vunpack.c.h.b16 %v1745
    %v1931 = vunpack.c.l.b16 %v1746
    %v1932 = vunpack.c.h.b16 %v1746
    %v1933 = vunpack.c.l.b16 %v1747
    %v1934 = vunpack.c.h.b16 %v1747
    %v1935 = vunpack.c.l.b16 %v1748
    %v1936 = vunpack.c.h.b16 %v1748
    %v1937 = vunpack.c.l.b16 %v1749
    %v1938 = vunpack.c.h.b16 %v1749
    %v1939 = vunpack.c.l.b16 %v1750
    %v1940 = vunpack.c.h.b16 %v1750
    %v1941 = vunpack.c.l.b16 %v1751
    %v1942 = vunpack.c.h.b16 %v1751
    %v1943 = vunpack.c.l.b16 %v1752
    %v1944 = vunpack.c.h.b16 %v1752
    %v1945 = vunpack.c.l.b16 %v1753
    %v1946 = vunpack.c.h.b16 %v1753
    %v1947 = vunpack.c.l.b16 %v1754
    %v1948 = vunpack.c.h.b16 %v1754
    %v1949 = vunpack.c.l.b16 %v1755
    %v1950 = vunpack.c.h.b16 %v1755
    %v1951 = vunpack.c.l.b16 %v1756
    %v1952 = vunpack.c.h.b16 %v1756
    %v1953 = vunpack.c.l.b16 %v1757
    %v1954 = vunpack.c.h.b16 %v1757
    %v1955 = vunpack.c.l.b16 %v1758
    %v1956 = vunpack.c.h.b16 %v1758
    %v1957 = vunpack.c.l.b16 %v1759
    %v1958 = vunpack.c.h.b16 %v1759
    %v1959 = vunpack.c.l.b16 %v1760
    %v1960 = vunpack.c.h.b16 %v1760
    %v1961 = vunpack.c.l.b16 %v1761
    %v1962 = vunpack.c.h.b16 %v1761
    %v1963 = vunpack.c.l.b16 %v1762
    %v1964 = vunpack.c.h.b16 %v1762
    %v1965 = vunpack.c.l.b16 %v1763
    %v1966 = vunpack.c.h.b16 %v1763
    %v1967 = vunpack.c.l.b16 %v1764
    %v1968 = vunpack.c.h.b16 %v1764
    %v1969 = vpack.c.b16 %v1843, %v1841
    %v1970 = vpack.c.b16 %v1844, %v1842
    %v1971 = vpack.c.b16 %v1847, %v1845
    %v1972 = vpack.c.b16 %v1848, %v1846
    %v1973 = vpack.c.b16 %v1851, %v1849
    %v1974 = vpack.c.b16 %v1852, %v1850
    %v1975 = vpack.c.b16 %v1855, %v1853
    %v1976 = vpack.c.b16 %v1856, %v1854
    %v1977 = vpack.c.b16 %v1859, %v1857
    %v1978 = vpack.c.b16 %v1860, %v1858
    %v1979 = vpack.c.b16 %v1863, %v1861
    %v1980 = vpack.c.b16 %v1864, %v1862
    %v1981 = vpack.c.b16 %v1867, %v1865
    %v1982 = vpack.c.b16 %v1868, %v1866
    %v1983 = vpack.c.b16 %v1871, %v1869
    %v1984 = vpack.c.b16 %v1872, %v1870
    %v1985 = vpack.c.b16 %v1875, %v1873
    %v1986 = vpack.c.b16 %v1876, %v1874
    %v1987 = vpack.c.b16 %v1879, %v1877
    %v1988 = vpack.c.b16 %v1880, %v1878
    %v1989 = vpack.c.b16 %v1883, %v1881
    %v1990 = vpack.c.b16 %v1884, %v1882
    %v1991 = vpack.c.b16 %v1887, %v1885
    %v1992 = vpack.c.b16 %v1888, %v1886
    %v1993 = vpack.c.b16 %v1891, %v1889
    %v1994 = vpack.c.b16 %v1892, %v1890
    %v1995 = vpack.c.b16 %v1895, %v1893
    %v1996 = vpack.c.b16 %v1896, %v1894
    %v1997 = vpack.c.b16 %v1899, %v1897
    %v1998 = vpack.c.b16 %v1900, %v1898
    %v1999 = vpack.c.b16 %v1903, %v1901
    %v2000 = vpack.c.b16 %v1904, %v1902
    %v2001 = vpack.c.b16 %v1907, %v1905
    %v2002 = vpack.c.b16 %v1908, %v1906
    %v2003 = vpack.c.b16 %v1911, %v1909
    %v2004 = vpack.c.b16 %v1912, %v1910
    %v2005 = vpack.c.b16 %v1915, %v1913
    %v2006 = vpack.c.b16 %v1916, %v1914
    %v2007 = vpack.c.b16 %v1919, %v1917
    %v2008 = vpack.c.b16 %v1920, %v1918
    %v2009 = vpack.c.b16 %v1923, %v1921
    %v2010 = vpack.c.b16 %v1924, %v1922
    %v2011 = vpack.c.b16 %v1927, %v1925
    %v2012 = vpack.c.b16 %v1928, %v1926
    %v2013 = vpack.c.b16 %v1931, %v1929
    %v2014 = vpack.c.b16 %v1932, %v1930
    %v2015 = vpack.c.b16 %v1935, %v1933
    %v2016 = vpack.c.b16 %v1936, %v1934
    %v2017 = vpack.c.b16 %v1939, %v1937
    %v2018 = vpack.c.b16 %v1940, %v1938
    %v2019 = vpack.c.b16 %v1943, %v1941
    %v2020 = vpack.c.b16 %v1944, %v1942
    %v2021 = vpack.c.b16 %v1947, %v1945
    %v2022 = vpack.c.b16 %v1948, %v1946
    %v2023 = vpack.c.b16 %v1951, %v1949
    %v2024 = vpack.c.b16 %v1952, %v1950
    %v2025 = vpack.c.b16 %v1955, %v1953
    %v2026 = vpack.c.b16 %v1956, %v1954
    %v2027 = vpack.c.b16 %v1959, %v1957
    %v2028 = vpack.c.b16 %v1960, %v1958
    %v2029 = vpack.c.b16 %v1963, %v1961
    %v2030 = vpack.c.b16 %v1964, %v1962
    %v2031 = vpack.c.b16 %v1967, %v1965
    %v2032 = vpack.c.b16 %v1968, %v1966
    %2097 = vmatprep.subr.bf16.mxu0 %v1970
    %2098 = vmatpush1.bf16.msra.mxu0 %v1969
    %2099 = vmatprep.subr.bf16.mxu0 %v1972
    %2100 = vmatpush1.bf16.msra.mxu0 %v1971
    %2101 = vmatprep.subr.bf16.mxu0 %v1974
    %2102 = vmatpush1.bf16.msra.mxu0 %v1973
    %2103 = vmatprep.subr.bf16.mxu0 %v1976
    %2104 = vmatpush1.bf16.msra.mxu0 %v1975
    %2105 = vmatprep.subr.bf16.mxu0 %v1978
    %2106 = vmatpush1.bf16.msra.mxu0 %v1977
    %2107 = vmatprep.subr.bf16.mxu0 %v1980
    %2108 = vmatpush1.bf16.msra.mxu0 %v1979
    %2109 = vmatprep.subr.bf16.mxu0 %v1982
    %2110 = vmatpush1.bf16.msra.mxu0 %v1981
    %2111 = vmatprep.subr.bf16.mxu0 %v1984
    %2112 = vmatpush1.bf16.msra.mxu0 %v1983
    %2113 = vmatprep.subr.bf16.mxu0 %v1986
    %2114 = vmatpush1.bf16.msra.mxu0 %v1985
    %2115 = vmatprep.subr.bf16.mxu0 %v1988
    %2116 = vmatpush1.bf16.msra.mxu0 %v1987
    %2117 = vmatprep.subr.bf16.mxu0 %v1990
    %2118 = vmatpush1.bf16.msra.mxu0 %v1989
    %2119 = vmatprep.subr.bf16.mxu0 %v1992
    %2120 = vmatpush1.bf16.msra.mxu0 %v1991
    %2121 = vmatprep.subr.bf16.mxu0 %v1994
    %2122 = vmatpush1.bf16.msra.mxu0 %v1993
    %2123 = vmatprep.subr.bf16.mxu0 %v1996
    %2124 = vmatpush1.bf16.msra.mxu0 %v1995
    %2125 = vmatprep.subr.bf16.mxu0 %v1998
    %2126 = vmatpush1.bf16.msra.mxu0 %v1997
    %2127 = vmatprep.subr.bf16.mxu0 %v2000
    %2128 = vmatpush1.bf16.msra.mxu0 %v1999
    %2129 = vmatprep.mubr.bf16.mxu0 %v1698
    %2130 = vmatmul.mubr.bf16.gmra.mrb[0].mxu0 %v1697
    %v2131 = vpop.f32.mrb[0].mxu0
    %v2132 = vadd.f32 %v1770, %v2131
    %v2133 = vpop.f32.mrb[0].mxu0
    %v2134 = vadd.f32 %v1774, %v2133
    %v2135 = vpop.f32.mrb[0].mxu0
    %v2136 = vadd.f32 %v1770, %v2135
    %v2137 = vpop.f32.mrb[0].mxu0
    %v2138 = vadd.f32 %v1774, %v2137
    %2139 = vdwg.mxu0
    %2140 = vmatprep.subr.bf16.mxu0 %v2002
    %2141 = vmatpush1.bf16.msra.mxu0 %v2001
    %2142 = vmatprep.subr.bf16.mxu0 %v2004
    %2143 = vmatpush1.bf16.msra.mxu0 %v2003
    %2144 = vmatprep.subr.bf16.mxu0 %v2006
    %2145 = vmatpush1.bf16.msra.mxu0 %v2005
    %2146 = vmatprep.subr.bf16.mxu0 %v2008
    %2147 = vmatpush1.bf16.msra.mxu0 %v2007
    %2148 = vmatprep.subr.bf16.mxu0 %v2010
    %2149 = vmatpush1.bf16.msra.mxu0 %v2009
    %2150 = vmatprep.subr.bf16.mxu0 %v2012
    %2151 = vmatpush1.bf16.msra.mxu0 %v2011
    %2152 = vmatprep.subr.bf16.mxu0 %v2014
    %2153 = vmatpush1.bf16.msra.mxu0 %v2013
    %2154 = vmatprep.subr.bf16.mxu0 %v2016
    %2155 = vmatpush1.bf16.msra.mxu0 %v2015
    %2156 = vmatprep.subr.bf16.mxu0 %v2018
    %2157 = vmatpush1.bf16.msra.mxu0 %v2017
    %2158 = vmatprep.subr.bf16.mxu0 %v2020
    %2159 = vmatpush1.bf16.msra.mxu0 %v2019
    %2160 = vmatprep.subr.bf16.mxu0 %v2022
    %2161 = vmatpush1.bf16.msra.mxu0 %v2021
    %2162 = vmatprep.subr.bf16.mxu0 %v2024
    %2163 = vmatpush1.bf16.msra.mxu0 %v2023
    %2164 = vmatprep.subr.bf16.mxu0 %v2026
    %2165 = vmatpush1.bf16.msra.mxu0 %v2025
    %2166 = vmatprep.subr.bf16.mxu0 %v2028
    %2167 = vmatpush1.bf16.msra.mxu0 %v2027
    %2168 = vmatprep.subr.bf16.mxu0 %v2030
    %2169 = vmatpush1.bf16.msra.mxu0 %v2029
    %2170 = vmatprep.subr.bf16.mxu0 %v2032
    %2171 = vmatpush1.bf16.msra.mxu0 %v2031
    %2172 = vmatprep.mubr.bf16.mxu0 %v1700
    %2173 = vmatmul.mubr.bf16.gmra.mrb[0].mxu0 %v1699
    %v2174 = vpop.f32.mrb[0].mxu0
    %v2175 = vadd.f32 %v2132, %v2174
    %v2176 = vpop.f32.mrb[0].mxu0
    %v2177 = vadd.f32 %v2134, %v2176
    %v2178 = vpop.f32.mrb[0].mxu0
    %v2179 = vadd.f32 %v2136, %v2178
    %v2180 = vpop.f32.mrb[0].mxu0
    %v2181 = vadd.f32 %v2138, %v2180
    %2182 = vdwg.mxu0
    %2183 = vst [vmem:[#allocation14] sm:$0xff] %v2175
    %2184 = vst [vmem:[#allocation14 + $0x8] sm:$0xff] %v2177
    %2185 = vst [vmem:[#allocation14 + $0x10] sm:$0xff] %v2179
    %2186 = vst [vmem:[#allocation14 + $0x18] sm:$0xff] %v2181
    %v2187 = vld [vmem:[#allocation5] sm:$0xff]
    %v2188 = vld [vmem:[#allocation5 + $0x8] sm:$0xff]
    %v2189 = vmul.f32 %v2177, 0.5
    %v2190 = vmul.f32 %v2181, 0.5
    %v2191 = vmul.f32 %v2189, 1.442695
    %v2192 = vpow.pop %v2191
    %v2193 = vmul.f32 %v2190, 1.442695
    %v2194 = vpow.pop %v2193
    %v2195 = vmul.f32 %v2187, %v2192
    %v2196 = vmul.f32 %v2188, %v2194
    %v2197 = vadd.f32 %v2175, %v2195
    %v2198 = vadd.f32 %v2179, %v2196
    %v2199 = vpack.c.bf16 %v2198, %v2197
    %v2200 = vld [vmem:[#allocation10] sm:$0xff]
    %v2201 = vld [vmem:[#allocation10 + $0x8] sm:$0xff]
    %v2202 = vld [vmem:[#allocation10 + $0x10] sm:$0xff]
    %v2203 = vld [vmem:[#allocation10 + $0x18] sm:$0xff]
    %v2204 = vld [vmem:[#allocation10 + $0x20] sm:$0xff]
    %v2205 = vld [vmem:[#allocation10 + $0x28] sm:$0xff]
    %v2206 = vld [vmem:[#allocation10 + $0x30] sm:$0xff]
    %v2207 = vld [vmem:[#allocation10 + $0x38] sm:$0xff]
    %v2208 = vld [vmem:[#allocation10 + $0x40] sm:$0xff]
    %v2209 = vld [vmem:[#allocation10 + $0x48] sm:$0xff]
    %v2210 = vld [vmem:[#allocation10 + $0x50] sm:$0xff]
    %v2211 = vld [vmem:[#allocation10 + $0x58] sm:$0xff]
    %v2212 = vld [vmem:[#allocation10 + $0x60] sm:$0xff]
    %v2213 = vld [vmem:[#allocation10 + $0x68] sm:$0xff]
    %v2214 = vld [vmem:[#allocation10 + $0x70] sm:$0xff]
    %v2215 = vld [vmem:[#allocation10 + $0x78] sm:$0xff]
    %v2216 = vld [vmem:[#allocation10 + $0x80] sm:$0xff]
    %v2217 = vld [vmem:[#allocation10 + $0x88] sm:$0xff]
    %v2218 = vld [vmem:[#allocation10 + $0x90] sm:$0xff]
    %v2219 = vld [vmem:[#allocation10 + $0x98] sm:$0xff]
    %v2220 = vld [vmem:[#allocation10 + $0xa0] sm:$0xff]
    %v2221 = vld [vmem:[#allocation10 + $0xa8] sm:$0xff]
    %v2222 = vld [vmem:[#allocation10 + $0xb0] sm:$0xff]
    %v2223 = vld [vmem:[#allocation10 + $0xb8] sm:$0xff]
    %v2224 = vld [vmem:[#allocation10 + $0xc0] sm:$0xff]
    %v2225 = vld [vmem:[#allocation10 + $0xc8] sm:$0xff]
    %v2226 = vld [vmem:[#allocation10 + $0xd0] sm:$0xff]
    %v2227 = vld [vmem:[#allocation10 + $0xd8] sm:$0xff]
    %v2228 = vld [vmem:[#allocation10 + $0xe0] sm:$0xff]
    %v2229 = vld [vmem:[#allocation10 + $0xe8] sm:$0xff]
    %v2230 = vld [vmem:[#allocation10 + $0xf0] sm:$0xff]
    %v2231 = vld [vmem:[#allocation10 + $0xf8] sm:$0xff]
    %v2232 = vld [vmem:[%s7] sm:$0xf]
    %v2234 = vlaneseq
    %v2235 = vshrl.u32 %v2234, 7
    %v2236 = vsub.s32 0, %v2235
    %v2237 = vrot.slane %v2232, %v2236
    %v2238 = vlaneseq
    %v2239 = vshrl.u32 %v2238, 7
    %v2240 = vsub.s32 1, %v2239
    %v2241 = vrot.slane %v2232, %v2240
    %v2242 = vlaneseq
    %v2243 = vshrl.u32 %v2242, 7
    %v2244 = vsub.s32 2, %v2243
    %v2245 = vrot.slane %v2232, %v2244
    %v2246 = vlaneseq
    %v2247 = vshrl.u32 %v2246, 7
    %v2248 = vsub.s32 3, %v2247
    %v2249 = vrot.slane %v2232, %v2248
    %v2286 = vunpack.c.l.b16 %v2200
    %v2287 = vunpack.c.h.b16 %v2200
    %v2288 = vunpack.c.l.b16 %v2201
    %v2289 = vunpack.c.h.b16 %v2201
    %v2290 = vunpack.c.l.b16 %v2202
    %v2291 = vunpack.c.h.b16 %v2202
    %v2292 = vunpack.c.l.b16 %v2203
    %v2293 = vunpack.c.h.b16 %v2203
    %v2294 = vunpack.c.l.b16 %v2204
    %v2295 = vunpack.c.h.b16 %v2204
    %v2296 = vunpack.c.l.b16 %v2205
    %v2297 = vunpack.c.h.b16 %v2205
    %v2298 = vunpack.c.l.b16 %v2206
    %v2299 = vunpack.c.h.b16 %v2206
    %v2300 = vunpack.c.l.b16 %v2207
    %v2301 = vunpack.c.h.b16 %v2207
    %v2302 = vunpack.c.l.b16 %v2208
    %v2303 = vunpack.c.h.b16 %v2208
    %v2304 = vunpack.c.l.b16 %v2209
    %v2305 = vunpack.c.h.b16 %v2209
    %v2306 = vunpack.c.l.b16 %v2210
    %v2307 = vunpack.c.h.b16 %v2210
    %v2308 = vunpack.c.l.b16 %v2211
    %v2309 = vunpack.c.h.b16 %v2211
    %v2310 = vunpack.c.l.b16 %v2212
    %v2311 = vunpack.c.h.b16 %v2212
    %v2312 = vunpack.c.l.b16 %v2213
    %v2313 = vunpack.c.h.b16 %v2213
    %v2314 = vunpack.c.l.b16 %v2214
    %v2315 = vunpack.c.h.b16 %v2214
    %v2316 = vunpack.c.l.b16 %v2215
    %v2317 = vunpack.c.h.b16 %v2215
    %v2318 = vunpack.c.l.b16 %v2216
    %v2319 = vunpack.c.h.b16 %v2216
    %v2320 = vunpack.c.l.b16 %v2217
    %v2321 = vunpack.c.h.b16 %v2217
    %v2322 = vunpack.c.l.b16 %v2218
    %v2323 = vunpack.c.h.b16 %v2218
    %v2324 = vunpack.c.l.b16 %v2219
    %v2325 = vunpack.c.h.b16 %v2219
    %v2326 = vunpack.c.l.b16 %v2220
    %v2327 = vunpack.c.h.b16 %v2220
    %v2328 = vunpack.c.l.b16 %v2221
    %v2329 = vunpack.c.h.b16 %v2221
    %v2330 = vunpack.c.l.b16 %v2222
    %v2331 = vunpack.c.h.b16 %v2222
    %v2332 = vunpack.c.l.b16 %v2223
    %v2333 = vunpack.c.h.b16 %v2223
    %v2334 = vunpack.c.l.b16 %v2224
    %v2335 = vunpack.c.h.b16 %v2224
    %v2336 = vunpack.c.l.b16 %v2225
    %v2337 = vunpack.c.h.b16 %v2225
    %v2338 = vunpack.c.l.b16 %v2226
    %v2339 = vunpack.c.h.b16 %v2226
    %v2340 = vunpack.c.l.b16 %v2227
    %v2341 = vunpack.c.h.b16 %v2227
    %v2342 = vunpack.c.l.b16 %v2228
    %v2343 = vunpack.c.h.b16 %v2228
    %v2344 = vunpack.c.l.b16 %v2229
    %v2345 = vunpack.c.h.b16 %v2229
    %v2346 = vunpack.c.l.b16 %v2230
    %v2347 = vunpack.c.h.b16 %v2230
    %v2348 = vunpack.c.l.b16 %v2231
    %v2349 = vunpack.c.h.b16 %v2231
    %v2350 = vpack.c.b16 %v2290, %v2286
    %v2351 = vpack.c.b16 %v2291, %v2287
    %v2352 = vpack.c.b16 %v2292, %v2288
    %v2353 = vpack.c.b16 %v2293, %v2289
    %v2354 = vpack.c.b16 %v2298, %v2294
    %v2355 = vpack.c.b16 %v2299, %v2295
    %v2356 = vpack.c.b16 %v2300, %v2296
    %v2357 = vpack.c.b16 %v2301, %v2297
    %v2358 = vpack.c.b16 %v2306, %v2302
    %v2359 = vpack.c.b16 %v2307, %v2303
    %v2360 = vpack.c.b16 %v2308, %v2304
    %v2361 = vpack.c.b16 %v2309, %v2305
    %v2362 = vpack.c.b16 %v2314, %v2310
    %v2363 = vpack.c.b16 %v2315, %v2311
    %v2364 = vpack.c.b16 %v2316, %v2312
    %v2365 = vpack.c.b16 %v2317, %v2313
    %v2366 = vpack.c.b16 %v2322, %v2318
    %v2367 = vpack.c.b16 %v2323, %v2319
    %v2368 = vpack.c.b16 %v2324, %v2320
    %v2369 = vpack.c.b16 %v2325, %v2321
    %v2370 = vpack.c.b16 %v2330, %v2326
    %v2371 = vpack.c.b16 %v2331, %v2327
    %v2372 = vpack.c.b16 %v2332, %v2328
    %v2373 = vpack.c.b16 %v2333, %v2329
    %v2374 = vpack.c.b16 %v2338, %v2334
    %v2375 = vpack.c.b16 %v2339, %v2335
    %v2376 = vpack.c.b16 %v2340, %v2336
    %v2377 = vpack.c.b16 %v2341, %v2337
    %v2378 = vpack.c.b16 %v2346, %v2342
    %v2379 = vpack.c.b16 %v2347, %v2343
    %v2380 = vpack.c.b16 %v2348, %v2344
    %v2381 = vpack.c.b16 %v2349, %v2345
    %2414 = vmatprep.subr.bf16.mxu0 %v2351
    %2415 = vmatpush1.bf16.msra.mxu0 %v2350
    %2416 = vmatprep.subr.bf16.mxu0 %v2355
    %2417 = vmatpush1.bf16.msra.mxu0 %v2354
    %2418 = vmatprep.subr.bf16.mxu0 %v2359
    %2419 = vmatpush1.bf16.msra.mxu0 %v2358
    %2420 = vmatprep.subr.bf16.mxu0 %v2363
    %2421 = vmatpush1.bf16.msra.mxu0 %v2362
    %2422 = vmatprep.subr.bf16.mxu0 %v2367
    %2423 = vmatpush1.bf16.msra.mxu0 %v2366
    %2424 = vmatprep.subr.bf16.mxu0 %v2371
    %2425 = vmatpush1.bf16.msra.mxu0 %v2370
    %2426 = vmatprep.subr.bf16.mxu0 %v2375
    %2427 = vmatpush1.bf16.msra.mxu0 %v2374
    %2428 = vmatprep.subr.bf16.mxu0 %v2379
    %2429 = vmatpush1.bf16.msra.mxu0 %v2378
    %2430 = vmatprep.subr.bf16.mxu0 0
    %2431 = vmatpush1.bf16.msra.mxu0 0
    %2432 = vmatprep.subr.bf16.mxu0 0
    %2433 = vmatpush1.bf16.msra.mxu0 0
    %2434 = vmatprep.subr.bf16.mxu0 0
    %2435 = vmatpush1.bf16.msra.mxu0 0
    %2436 = vmatprep.subr.bf16.mxu0 0
    %2437 = vmatpush1.bf16.msra.mxu0 0
    %2438 = vmatprep.subr.bf16.mxu0 0
    %2439 = vmatpush1.bf16.msra.mxu0 0
    %2440 = vmatprep.subr.bf16.mxu0 0
    %2441 = vmatpush1.bf16.msra.mxu0 0
    %2442 = vmatprep.subr.bf16.mxu0 0
    %2443 = vmatpush1.bf16.msra.mxu0 0
    %2444 = vmatprep.subr.bf16.mxu0 0
    %2445 = vmatpush1.bf16.msra.mxu0 0
    %2446 = vmatprep.mubr.bf16.mxu0 0
    %2447 = vmatmul.mubr.bf16.gmra.mrb[0].mxu0 %v2199
    %v2448 = vpop.f32.mrb[0].mxu0
    %v2449 = vadd.f32 %v2237, %v2448
    %v2450 = vpop.f32.mrb[0].mxu0
    %v2451 = vadd.f32 %v2241, %v2450
    %v2452 = vpop.f32.mrb[0].mxu0
    %v2453 = vadd.f32 %v2237, %v2452
    %v2454 = vpop.f32.mrb[0].mxu0
    %v2455 = vadd.f32 %v2241, %v2454
    %2456 = vdwg.mxu0
    %2457 = vmatprep.subr.bf16.mxu0 %v2353
    %2458 = vmatpush1.bf16.msra.mxu0 %v2352
    %2459 = vmatprep.subr.bf16.mxu0 %v2357
    %2460 = vmatpush1.bf16.msra.mxu0 %v2356
    %2461 = vmatprep.subr.bf16.mxu0 %v2361
    %2462 = vmatpush1.bf16.msra.mxu0 %v2360
    %2463 = vmatprep.subr.bf16.mxu0 %v2365
    %2464 = vmatpush1.bf16.msra.mxu0 %v2364
    %2465 = vmatprep.subr.bf16.mxu0 %v2369
    %2466 = vmatpush1.bf16.msra.mxu0 %v2368
    %2467 = vmatprep.subr.bf16.mxu0 %v2373
    %2468 = vmatpush1.bf16.msra.mxu0 %v2372
    %2469 = vmatprep.subr.bf16.mxu0 %v2377
    %2470 = vmatpush1.bf16.msra.mxu0 %v2376
    %2471 = vmatprep.subr.bf16.mxu0 %v2381
    %2472 = vmatpush1.bf16.msra.mxu0 %v2380
    %2473 = vmatprep.subr.bf16.mxu0 0
    %2474 = vmatpush1.bf16.msra.mxu0 0
    %2475 = vmatprep.subr.bf16.mxu0 0
    %2476 = vmatpush1.bf16.msra.mxu0 0
    %2477 = vmatprep.subr.bf16.mxu0 0
    %2478 = vmatpush1.bf16.msra.mxu0 0
    %2479 = vmatprep.subr.bf16.mxu0 0
    %2480 = vmatpush1.bf16.msra.mxu0 0
    %2481 = vmatprep.subr.bf16.mxu0 0
    %2482 = vmatpush1.bf16.msra.mxu0 0
    %2483 = vmatprep.subr.bf16.mxu0 0
    %2484 = vmatpush1.bf16.msra.mxu0 0
    %2485 = vmatprep.subr.bf16.mxu0 0
    %2486 = vmatpush1.bf16.msra.mxu0 0
    %2487 = vmatprep.subr.bf16.mxu0 0
    %2488 = vmatpush1.bf16.msra.mxu0 0
    %2489 = vmatprep.mubr.bf16.mxu0 0
    %2490 = vmatmul.mubr.bf16.gmra.mrb[0].mxu0 %v2199
    %v2491 = vpop.f32.mrb[0].mxu0
    %v2492 = vadd.f32 %v2245, %v2491
    %v2493 = vpop.f32.mrb[0].mxu0
    %v2494 = vadd.f32 %v2249, %v2493
    %v2495 = vpop.f32.mrb[0].mxu0
    %v2496 = vadd.f32 %v2245, %v2495
    %v2497 = vpop.f32.mrb[0].mxu0
    %v2498 = vadd.f32 %v2249, %v2497
    %2499 = vdwg.mxu0
    %v2500 = vmax.f32 %v2449, 0.0
    %v2501 = vmax.f32 %v2451, 0.0
    %v2502 = vmax.f32 %v2492, 0.0
    %v2503 = vmax.f32 %v2494, 0.0
    %v2504 = vmax.f32 %v2453, 0.0
    %v2505 = vmax.f32 %v2455, 0.0
    %v2506 = vmax.f32 %v2496, 0.0
    %v2507 = vmax.f32 %v2498, 0.0
    %v2508 = vpack.c.bf16 %v2504, %v2500
    %v2509 = vpack.c.bf16 %v2505, %v2501
    %v2510 = vpack.c.bf16 %v2506, %v2502
    %v2511 = vpack.c.bf16 %v2507, %v2503
    %v2512 = vld [vmem:[#allocation11] sm:$0xff]
    %v2513 = vld [vmem:[#allocation11 + $0x8] sm:$0xff]
    %v2514 = vld [vmem:[#allocation11 + $0x10] sm:$0xff]
    %v2515 = vld [vmem:[#allocation11 + $0x18] sm:$0xf]
    %v2516 = vld [vmem:[#allocation11 + $0x1c] sm:$0xff]
    %v2517 = vld [vmem:[#allocation11 + $0x24] sm:$0xff]
    %v2518 = vld [vmem:[#allocation11 + $0x2c] sm:$0xff]
    %v2519 = vld [vmem:[#allocation11 + $0x34] sm:$0xf]
    %v2520 = vld [vmem:[#allocation11 + $0x38] sm:$0xff]
    %v2521 = vld [vmem:[#allocation11 + $0x40] sm:$0xff]
    %v2522 = vld [vmem:[#allocation11 + $0x48] sm:$0xff]
    %v2523 = vld [vmem:[#allocation11 + $0x50] sm:$0xf]
    %v2524 = vld [vmem:[#allocation11 + $0x54] sm:$0xff]
    %v2525 = vld [vmem:[#allocation11 + $0x5c] sm:$0xff]
    %v2526 = vld [vmem:[#allocation11 + $0x64] sm:$0xff]
    %v2527 = vld [vmem:[#allocation11 + $0x6c] sm:$0xf]
    %v2528 = vld [vmem:[#allocation11 + $0x70] sm:$0xff]
    %v2529 = vld [vmem:[#allocation11 + $0x78] sm:$0xff]
    %v2530 = vld [vmem:[#allocation11 + $0x80] sm:$0xff]
    %v2531 = vld [vmem:[#allocation11 + $0x88] sm:$0xf]
    %v2532 = vld [vmem:[#allocation11 + $0x8c] sm:$0xff]
    %v2533 = vld [vmem:[#allocation11 + $0x94] sm:$0xff]
    %v2534 = vld [vmem:[#allocation11 + $0x9c] sm:$0xff]
    %v2535 = vld [vmem:[#allocation11 + $0xa4] sm:$0xf]
    %v2536 = vld [vmem:[#allocation11 + $0xa8] sm:$0xff]
    %v2537 = vld [vmem:[#allocation11 + $0xb0] sm:$0xff]
    %v2538 = vld [vmem:[#allocation11 + $0xb8] sm:$0xff]
    %v2539 = vld [vmem:[#allocation11 + $0xc0] sm:$0xf]
    %v2540 = vld [vmem:[#allocation11 + $0xc4] sm:$0xff]
    %v2541 = vld [vmem:[#allocation11 + $0xcc] sm:$0xff]
    %v2542 = vld [vmem:[#allocation11 + $0xd4] sm:$0xff]
    %v2543 = vld [vmem:[#allocation11 + $0xdc] sm:$0xf]
    %v2544 = vld [vmem:[#allocation11 + $0xe0] sm:$0xff]
    %v2545 = vld [vmem:[#allocation11 + $0xe8] sm:$0xff]
    %v2546 = vld [vmem:[#allocation11 + $0xf0] sm:$0xff]
    %v2547 = vld [vmem:[#allocation11 + $0xf8] sm:$0xf]
    %v2548 = vld [vmem:[#allocation11 + $0xfc] sm:$0xff]
    %v2549 = vld [vmem:[#allocation11 + $0x104] sm:$0xff]
    %v2550 = vld [vmem:[#allocation11 + $0x10c] sm:$0xff]
    %v2551 = vld [vmem:[#allocation11 + $0x114] sm:$0xf]
    %v2552 = vld [vmem:[#allocation11 + $0x118] sm:$0xff]
    %v2553 = vld [vmem:[#allocation11 + $0x120] sm:$0xff]
    %v2554 = vld [vmem:[#allocation11 + $0x128] sm:$0xff]
    %v2555 = vld [vmem:[#allocation11 + $0x130] sm:$0xf]
    %v2556 = vld [vmem:[#allocation11 + $0x134] sm:$0xff]
    %v2557 = vld [vmem:[#allocation11 + $0x13c] sm:$0xff]
    %v2558 = vld [vmem:[#allocation11 + $0x144] sm:$0xff]
    %v2559 = vld [vmem:[#allocation11 + $0x14c] sm:$0xf]
    %v2560 = vld [vmem:[#allocation11 + $0x150] sm:$0xff]
    %v2561 = vld [vmem:[#allocation11 + $0x158] sm:$0xff]
    %v2562 = vld [vmem:[#allocation11 + $0x160] sm:$0xff]
    %v2563 = vld [vmem:[#allocation11 + $0x168] sm:$0xf]
    %v2564 = vld [vmem:[#allocation11 + $0x16c] sm:$0xff]
    %v2565 = vld [vmem:[#allocation11 + $0x174] sm:$0xff]
    %v2566 = vld [vmem:[#allocation11 + $0x17c] sm:$0xff]
    %v2567 = vld [vmem:[#allocation11 + $0x184] sm:$0xf]
    %v2568 = vld [vmem:[#allocation11 + $0x188] sm:$0xff]
    %v2569 = vld [vmem:[#allocation11 + $0x190] sm:$0xff]
    %v2570 = vld [vmem:[#allocation11 + $0x198] sm:$0xff]
    %v2571 = vld [vmem:[#allocation11 + $0x1a0] sm:$0xf]
    %v2572 = vld [vmem:[#allocation11 + $0x1a4] sm:$0xff]
    %v2573 = vld [vmem:[#allocation11 + $0x1ac] sm:$0xff]
    %v2574 = vld [vmem:[#allocation11 + $0x1b4] sm:$0xff]
    %v2575 = vld [vmem:[#allocation11 + $0x1bc] sm:$0xf]
    %v2576 = vld [vmem:[#allocation11 + $0x1c0] sm:$0xff]
    %v2577 = vld [vmem:[#allocation11 + $0x1c8] sm:$0xff]
    %v2578 = vld [vmem:[#allocation11 + $0x1d0] sm:$0xff]
    %v2579 = vld [vmem:[#allocation11 + $0x1d8] sm:$0xf]
    %v2580 = vld [vmem:[#allocation11 + $0x1dc] sm:$0xff]
    %v2581 = vld [vmem:[#allocation11 + $0x1e4] sm:$0xff]
    %v2582 = vld [vmem:[#allocation11 + $0x1ec] sm:$0xff]
    %v2583 = vld [vmem:[#allocation11 + $0x1f4] sm:$0xf]
    %v2584 = vld [vmem:[#allocation11 + $0x1f8] sm:$0xff]
    %v2585 = vld [vmem:[#allocation11 + $0x200] sm:$0xff]
    %v2586 = vld [vmem:[#allocation11 + $0x208] sm:$0xff]
    %v2587 = vld [vmem:[#allocation11 + $0x210] sm:$0xf]
    %v2588 = vld [vmem:[#allocation11 + $0x214] sm:$0xff]
    %v2589 = vld [vmem:[#allocation11 + $0x21c] sm:$0xff]
    %v2590 = vld [vmem:[#allocation11 + $0x224] sm:$0xff]
    %v2591 = vld [vmem:[#allocation11 + $0x22c] sm:$0xf]
    %v2592 = vld [vmem:[#allocation11 + $0x230] sm:$0xff]
    %v2593 = vld [vmem:[#allocation11 + $0x238] sm:$0xff]
    %v2594 = vld [vmem:[#allocation11 + $0x240] sm:$0xff]
    %v2595 = vld [vmem:[#allocation11 + $0x248] sm:$0xf]
    %v2596 = vld [vmem:[#allocation11 + $0x24c] sm:$0xff]
    %v2597 = vld [vmem:[#allocation11 + $0x254] sm:$0xff]
    %v2598 = vld [vmem:[#allocation11 + $0x25c] sm:$0xff]
    %v2599 = vld [vmem:[#allocation11 + $0x264] sm:$0xf]
    %v2600 = vld [vmem:[#allocation11 + $0x268] sm:$0xff]
    %v2601 = vld [vmem:[#allocation11 + $0x270] sm:$0xff]
    %v2602 = vld [vmem:[#allocation11 + $0x278] sm:$0xff]
    %v2603 = vld [vmem:[#allocation11 + $0x280] sm:$0xf]
    %v2604 = vld [vmem:[#allocation11 + $0x284] sm:$0xff]
    %v2605 = vld [vmem:[#allocation11 + $0x28c] sm:$0xff]
    %v2606 = vld [vmem:[#allocation11 + $0x294] sm:$0xff]
    %v2607 = vld [vmem:[#allocation11 + $0x29c] sm:$0xf]
    %v2608 = vld [vmem:[#allocation11 + $0x2a0] sm:$0xff]
    %v2609 = vld [vmem:[#allocation11 + $0x2a8] sm:$0xff]
    %v2610 = vld [vmem:[#allocation11 + $0x2b0] sm:$0xff]
    %v2611 = vld [vmem:[#allocation11 + $0x2b8] sm:$0xf]
    %v2612 = vld [vmem:[#allocation11 + $0x2bc] sm:$0xff]
    %v2613 = vld [vmem:[#allocation11 + $0x2c4] sm:$0xff]
    %v2614 = vld [vmem:[#allocation11 + $0x2cc] sm:$0xff]
    %v2615 = vld [vmem:[#allocation11 + $0x2d4] sm:$0xf]
    %v2616 = vld [vmem:[#allocation11 + $0x2d8] sm:$0xff]
    %v2617 = vld [vmem:[#allocation11 + $0x2e0] sm:$0xff]
    %v2618 = vld [vmem:[#allocation11 + $0x2e8] sm:$0xff]
    %v2619 = vld [vmem:[#allocation11 + $0x2f0] sm:$0xf]
    %v2620 = vld [vmem:[#allocation11 + $0x2f4] sm:$0xff]
    %v2621 = vld [vmem:[#allocation11 + $0x2fc] sm:$0xff]
    %v2622 = vld [vmem:[#allocation11 + $0x304] sm:$0xff]
    %v2623 = vld [vmem:[#allocation11 + $0x30c] sm:$0xf]
    %v2624 = vld [vmem:[#allocation11 + $0x310] sm:$0xff]
    %v2625 = vld [vmem:[#allocation11 + $0x318] sm:$0xff]
    %v2626 = vld [vmem:[#allocation11 + $0x320] sm:$0xff]
    %v2627 = vld [vmem:[#allocation11 + $0x328] sm:$0xf]
    %v2628 = vld [vmem:[#allocation11 + $0x32c] sm:$0xff]
    %v2629 = vld [vmem:[#allocation11 + $0x334] sm:$0xff]
    %v2630 = vld [vmem:[#allocation11 + $0x33c] sm:$0xff]
    %v2631 = vld [vmem:[#allocation11 + $0x344] sm:$0xf]
    %v2632 = vld [vmem:[#allocation11 + $0x348] sm:$0xff]
    %v2633 = vld [vmem:[#allocation11 + $0x350] sm:$0xff]
    %v2634 = vld [vmem:[#allocation11 + $0x358] sm:$0xff]
    %v2635 = vld [vmem:[#allocation11 + $0x360] sm:$0xf]
    %v2636 = vld [vmem:[#allocation11 + $0x364] sm:$0xff]
    %v2637 = vld [vmem:[#allocation11 + $0x36c] sm:$0xff]
    %v2638 = vld [vmem:[#allocation11 + $0x374] sm:$0xff]
    %v2639 = vld [vmem:[#allocation11 + $0x37c] sm:$0xf]
    %v2640 = vld [vmem:[#allocation11 + $0x380] sm:$0xff]
    %v2641 = vld [vmem:[#allocation11 + $0x388] sm:$0xff]
    %v2642 = vld [vmem:[#allocation11 + $0x390] sm:$0xff]
    %v2643 = vld [vmem:[#allocation11 + $0x398] sm:$0xf]
    %v2644 = vld [vmem:[#allocation11 + $0x39c] sm:$0xff]
    %v2645 = vld [vmem:[#allocation11 + $0x3a4] sm:$0xff]
    %v2646 = vld [vmem:[#allocation11 + $0x3ac] sm:$0xff]
    %v2647 = vld [vmem:[#allocation11 + $0x3b4] sm:$0xf]
    %v2648 = vld [vmem:[#allocation11 + $0x3b8] sm:$0xff]
    %v2649 = vld [vmem:[#allocation11 + $0x3c0] sm:$0xff]
    %v2650 = vld [vmem:[#allocation11 + $0x3c8] sm:$0xff]
    %v2651 = vld [vmem:[#allocation11 + $0x3d0] sm:$0xf]
    %v2652 = vld [vmem:[#allocation11 + $0x3d4] sm:$0xff]
    %v2653 = vld [vmem:[#allocation11 + $0x3dc] sm:$0xff]
    %v2654 = vld [vmem:[#allocation11 + $0x3e4] sm:$0xff]
    %v2655 = vld [vmem:[#allocation11 + $0x3ec] sm:$0xf]
    %v2656 = vld [vmem:[#allocation11 + $0x3f0] sm:$0xff]
    %v2657 = vld [vmem:[#allocation11 + $0x3f8] sm:$0xff]
    %v2658 = vld [vmem:[#allocation11 + $0x400] sm:$0xff]
    %v2659 = vld [vmem:[#allocation11 + $0x408] sm:$0xf]
    %v2660 = vld [vmem:[#allocation11 + $0x40c] sm:$0xff]
    %v2661 = vld [vmem:[#allocation11 + $0x414] sm:$0xff]
    %v2662 = vld [vmem:[#allocation11 + $0x41c] sm:$0xff]
    %v2663 = vld [vmem:[#allocation11 + $0x424] sm:$0xf]
    %v2664 = vld [vmem:[#allocation11 + $0x428] sm:$0xff]
    %v2665 = vld [vmem:[#allocation11 + $0x430] sm:$0xff]
    %v2666 = vld [vmem:[#allocation11 + $0x438] sm:$0xff]
    %v2667 = vld [vmem:[#allocation11 + $0x440] sm:$0xf]
    %v2668 = vld [vmem:[#allocation11 + $0x444] sm:$0xff]
    %v2669 = vld [vmem:[#allocation11 + $0x44c] sm:$0xff]
    %v2670 = vld [vmem:[#allocation11 + $0x454] sm:$0xff]
    %v2671 = vld [vmem:[#allocation11 + $0x45c] sm:$0xf]
    %v2672 = vld [vmem:[#allocation11 + $0x460] sm:$0xff]
    %v2673 = vld [vmem:[#allocation11 + $0x468] sm:$0xff]
    %v2674 = vld [vmem:[#allocation11 + $0x470] sm:$0xff]
    %v2675 = vld [vmem:[#allocation11 + $0x478] sm:$0xf]
    %v2676 = vld [vmem:[#allocation11 + $0x47c] sm:$0xff]
    %v2677 = vld [vmem:[#allocation11 + $0x484] sm:$0xff]
    %v2678 = vld [vmem:[#allocation11 + $0x48c] sm:$0xff]
    %v2679 = vld [vmem:[#allocation11 + $0x494] sm:$0xf]
    %v2680 = vld [vmem:[#allocation11 + $0x498] sm:$0xff]
    %v2681 = vld [vmem:[#allocation11 + $0x4a0] sm:$0xff]
    %v2682 = vld [vmem:[#allocation11 + $0x4a8] sm:$0xff]
    %v2683 = vld [vmem:[#allocation11 + $0x4b0] sm:$0xf]
    %v2684 = vld [vmem:[#allocation11 + $0x4b4] sm:$0xff]
    %v2685 = vld [vmem:[#allocation11 + $0x4bc] sm:$0xff]
    %v2686 = vld [vmem:[#allocation11 + $0x4c4] sm:$0xff]
    %v2687 = vld [vmem:[#allocation11 + $0x4cc] sm:$0xf]
    %v2688 = vld [vmem:[#allocation11 + $0x4d0] sm:$0xff]
    %v2689 = vld [vmem:[#allocation11 + $0x4d8] sm:$0xff]
    %v2690 = vld [vmem:[#allocation11 + $0x4e0] sm:$0xff]
    %v2691 = vld [vmem:[#allocation11 + $0x4e8] sm:$0xf]
    %v2692 = vld [vmem:[#allocation11 + $0x4ec] sm:$0xff]
    %v2693 = vld [vmem:[#allocation11 + $0x4f4] sm:$0xff]
    %v2694 = vld [vmem:[#allocation11 + $0x4fc] sm:$0xff]
    %v2695 = vld [vmem:[#allocation11 + $0x504] sm:$0xf]
    %v2696 = vld [vmem:[#allocation11 + $0x508] sm:$0xff]
    %v2697 = vld [vmem:[#allocation11 + $0x510] sm:$0xff]
    %v2698 = vld [vmem:[#allocation11 + $0x518] sm:$0xff]
    %v2699 = vld [vmem:[#allocation11 + $0x520] sm:$0xf]
    %v2700 = vld [vmem:[#allocation11 + $0x524] sm:$0xff]
    %v2701 = vld [vmem:[#allocation11 + $0x52c] sm:$0xff]
    %v2702 = vld [vmem:[#allocation11 + $0x534] sm:$0xff]
    %v2703 = vld [vmem:[#allocation11 + $0x53c] sm:$0xf]
    %v2704 = vld [vmem:[#allocation11 + $0x540] sm:$0xff]
    %v2705 = vld [vmem:[#allocation11 + $0x548] sm:$0xff]
    %v2706 = vld [vmem:[#allocation11 + $0x550] sm:$0xff]
    %v2707 = vld [vmem:[#allocation11 + $0x558] sm:$0xf]
    %v2708 = vld [vmem:[#allocation11 + $0x55c] sm:$0xff]
    %v2709 = vld [vmem:[#allocation11 + $0x564] sm:$0xff]
    %v2710 = vld [vmem:[#allocation11 + $0x56c] sm:$0xff]
    %v2711 = vld [vmem:[#allocation11 + $0x574] sm:$0xf]
    %v2712 = vld [vmem:[#allocation11 + $0x578] sm:$0xff]
    %v2713 = vld [vmem:[#allocation11 + $0x580] sm:$0xff]
    %v2714 = vld [vmem:[#allocation11 + $0x588] sm:$0xff]
    %v2715 = vld [vmem:[#allocation11 + $0x590] sm:$0xf]
    %v2716 = vld [vmem:[#allocation11 + $0x594] sm:$0xff]
    %v2717 = vld [vmem:[#allocation11 + $0x59c] sm:$0xff]
    %v2718 = vld [vmem:[#allocation11 + $0x5a4] sm:$0xff]
    %v2719 = vld [vmem:[#allocation11 + $0x5ac] sm:$0xf]
    %v2720 = vld [vmem:[#allocation11 + $0x5b0] sm:$0xff]
    %v2721 = vld [vmem:[#allocation11 + $0x5b8] sm:$0xff]
    %v2722 = vld [vmem:[#allocation11 + $0x5c0] sm:$0xff]
    %v2723 = vld [vmem:[#allocation11 + $0x5c8] sm:$0xf]
    %v2724 = vld [vmem:[#allocation11 + $0x5cc] sm:$0xff]
    %v2725 = vld [vmem:[#allocation11 + $0x5d4] sm:$0xff]
    %v2726 = vld [vmem:[#allocation11 + $0x5dc] sm:$0xff]
    %v2727 = vld [vmem:[#allocation11 + $0x5e4] sm:$0xf]
    %v2728 = vld [vmem:[#allocation11 + $0x5e8] sm:$0xff]
    %v2729 = vld [vmem:[#allocation11 + $0x5f0] sm:$0xff]
    %v2730 = vld [vmem:[#allocation11 + $0x5f8] sm:$0xff]
    %v2731 = vld [vmem:[#allocation11 + $0x600] sm:$0xf]
    %v2732 = vld [vmem:[#allocation11 + $0x604] sm:$0xff]
    %v2733 = vld [vmem:[#allocation11 + $0x60c] sm:$0xff]
    %v2734 = vld [vmem:[#allocation11 + $0x614] sm:$0xff]
    %v2735 = vld [vmem:[#allocation11 + $0x61c] sm:$0xf]
    %v2736 = vld [vmem:[#allocation11 + $0x620] sm:$0xff]
    %v2737 = vld [vmem:[#allocation11 + $0x628] sm:$0xff]
    %v2738 = vld [vmem:[#allocation11 + $0x630] sm:$0xff]
    %v2739 = vld [vmem:[#allocation11 + $0x638] sm:$0xf]
    %v2740 = vld [vmem:[#allocation11 + $0x63c] sm:$0xff]
    %v2741 = vld [vmem:[#allocation11 + $0x644] sm:$0xff]
    %v2742 = vld [vmem:[#allocation11 + $0x64c] sm:$0xff]
    %v2743 = vld [vmem:[#allocation11 + $0x654] sm:$0xf]
    %v2744 = vld [vmem:[#allocation11 + $0x658] sm:$0xff]
    %v2745 = vld [vmem:[#allocation11 + $0x660] sm:$0xff]
    %v2746 = vld [vmem:[#allocation11 + $0x668] sm:$0xff]
    %v2747 = vld [vmem:[#allocation11 + $0x670] sm:$0xf]
    %v2748 = vld [vmem:[#allocation11 + $0x674] sm:$0xff]
    %v2749 = vld [vmem:[#allocation11 + $0x67c] sm:$0xff]
    %v2750 = vld [vmem:[#allocation11 + $0x684] sm:$0xff]
    %v2751 = vld [vmem:[#allocation11 + $0x68c] sm:$0xf]
    %v2752 = vld [vmem:[#allocation11 + $0x690] sm:$0xff]
    %v2753 = vld [vmem:[#allocation11 + $0x698] sm:$0xff]
    %v2754 = vld [vmem:[#allocation11 + $0x6a0] sm:$0xff]
    %v2755 = vld [vmem:[#allocation11 + $0x6a8] sm:$0xf]
    %v2756 = vld [vmem:[#allocation11 + $0x6ac] sm:$0xff]
    %v2757 = vld [vmem:[#allocation11 + $0x6b4] sm:$0xff]
    %v2758 = vld [vmem:[#allocation11 + $0x6bc] sm:$0xff]
    %v2759 = vld [vmem:[#allocation11 + $0x6c4] sm:$0xf]
    %v2760 = vld [vmem:[#allocation11 + $0x6c8] sm:$0xff]
    %v2761 = vld [vmem:[#allocation11 + $0x6d0] sm:$0xff]
    %v2762 = vld [vmem:[#allocation11 + $0x6d8] sm:$0xff]
    %v2763 = vld [vmem:[#allocation11 + $0x6e0] sm:$0xf]
    %v2764 = vld [vmem:[#allocation11 + $0x6e4] sm:$0xff]
    %v2765 = vld [vmem:[#allocation11 + $0x6ec] sm:$0xff]
    %v2766 = vld [vmem:[#allocation11 + $0x6f4] sm:$0xff]
    %v2767 = vld [vmem:[#allocation11 + $0x6fc] sm:$0xf]
    %v2768 = vld [vmem:[%s9] sm:$0xff]
    %v2770 = vlaneseq
    %v2771 = vshrl.u32 %v2770, 7
    %v2772 = vsub.s32 0, %v2771
    %v2773 = vrot.slane %v2768, %v2772
    %v2774 = vlaneseq
    %v2775 = vshrl.u32 %v2774, 7
    %v2776 = vsub.s32 1, %v2775
    %v2777 = vrot.slane %v2768, %v2776
    %v2778 = vlaneseq
    %v2779 = vshrl.u32 %v2778, 7
    %v2780 = vsub.s32 2, %v2779
    %v2781 = vrot.slane %v2768, %v2780
    %v2782 = vlaneseq
    %v2783 = vshrl.u32 %v2782, 7
    %v2784 = vsub.s32 3, %v2783
    %v2785 = vrot.slane %v2768, %v2784
    %v2786 = vlaneseq
    %v2787 = vshrl.u32 %v2786, 7
    %v2788 = vsub.s32 4, %v2787
    %v2789 = vrot.slane %v2768, %v2788
    %v2790 = vlaneseq
    %v2791 = vshrl.u32 %v2790, 7
    %v2792 = vsub.s32 5, %v2791
    %v2793 = vrot.slane %v2768, %v2792
    %v2794 = vlaneseq
    %v2795 = vshrl.u32 %v2794, 7
    %v2796 = vsub.s32 6, %v2795
    %v2797 = vrot.slane %v2768, %v2796
    %v3061 = vunpack.c.l.b16 %v2512
    %v3062 = vunpack.c.h.b16 %v2512
    %v3063 = vunpack.c.l.b16 %v2513
    %v3064 = vunpack.c.h.b16 %v2513
    %v3065 = vunpack.c.l.b16 %v2514
    %v3066 = vunpack.c.h.b16 %v2514
    %v3067 = vunpack.c.l.b16 %v2515
    %v3068 = vunpack.c.l.b16 %v2516
    %v3069 = vunpack.c.h.b16 %v2516
    %v3070 = vunpack.c.l.b16 %v2517
    %v3071 = vunpack.c.h.b16 %v2517
    %v3072 = vunpack.c.l.b16 %v2518
    %v3073 = vunpack.c.h.b16 %v2518
    %v3074 = vunpack.c.l.b16 %v2519
    %v3075 = vunpack.c.l.b16 %v2520
    %v3076 = vunpack.c.h.b16 %v2520
    %v3077 = vunpack.c.l.b16 %v2521
    %v3078 = vunpack.c.h.b16 %v2521
    %v3079 = vunpack.c.l.b16 %v2522
    %v3080 = vunpack.c.h.b16 %v2522
    %v3081 = vunpack.c.l.b16 %v2523
    %v3082 = vunpack.c.l.b16 %v2524
    %v3083 = vunpack.c.h.b16 %v2524
    %v3084 = vunpack.c.l.b16 %v2525
    %v3085 = vunpack.c.h.b16 %v2525
    %v3086 = vunpack.c.l.b16 %v2526
    %v3087 = vunpack.c.h.b16 %v2526
    %v3088 = vunpack.c.l.b16 %v2527
    %v3089 = vunpack.c.l.b16 %v2528
    %v3090 = vunpack.c.h.b16 %v2528
    %v3091 = vunpack.c.l.b16 %v2529
    %v3092 = vunpack.c.h.b16 %v2529
    %v3093 = vunpack.c.l.b16 %v2530
    %v3094 = vunpack.c.h.b16 %v2530
    %v3095 = vunpack.c.l.b16 %v2531
    %v3096 = vunpack.c.l.b16 %v2532
    %v3097 = vunpack.c.h.b16 %v2532
    %v3098 = vunpack.c.l.b16 %v2533
    %v3099 = vunpack.c.h.b16 %v2533
    %v3100 = vunpack.c.l.b16 %v2534
    %v3101 = vunpack.c.h.b16 %v2534
    %v3102 = vunpack.c.l.b16 %v2535
    %v3103 = vunpack.c.l.b16 %v2536
    %v3104 = vunpack.c.h.b16 %v2536
    %v3105 = vunpack.c.l.b16 %v2537
    %v3106 = vunpack.c.h.b16 %v2537
    %v3107 = vunpack.c.l.b16 %v2538
    %v3108 = vunpack.c.h.b16 %v2538
    %v3109 = vunpack.c.l.b16 %v2539
    %v3110 = vunpack.c.l.b16 %v2540
    %v3111 = vunpack.c.h.b16 %v2540
    %v3112 = vunpack.c.l.b16 %v2541
    %v3113 = vunpack.c.h.b16 %v2541
    %v3114 = vunpack.c.l.b16 %v2542
    %v3115 = vunpack.c.h.b16 %v2542
    %v3116 = vunpack.c.l.b16 %v2543
    %v3117 = vunpack.c.l.b16 %v2544
    %v3118 = vunpack.c.h.b16 %v2544
    %v3119 = vunpack.c.l.b16 %v2545
    %v3120 = vunpack.c.h.b16 %v2545
    %v3121 = vunpack.c.l.b16 %v2546
    %v3122 = vunpack.c.h.b16 %v2546
    %v3123 = vunpack.c.l.b16 %v2547
    %v3124 = vunpack.c.l.b16 %v2548
    %v3125 = vunpack.c.h.b16 %v2548
    %v3126 = vunpack.c.l.b16 %v2549
    %v3127 = vunpack.c.h.b16 %v2549
    %v3128 = vunpack.c.l.b16 %v2550
    %v3129 = vunpack.c.h.b16 %v2550
    %v3130 = vunpack.c.l.b16 %v2551
    %v3131 = vunpack.c.l.b16 %v2552
    %v3132 = vunpack.c.h.b16 %v2552
    %v3133 = vunpack.c.l.b16 %v2553
    %v3134 = vunpack.c.h.b16 %v2553
    %v3135 = vunpack.c.l.b16 %v2554
    %v3136 = vunpack.c.h.b16 %v2554
    %v3137 = vunpack.c.l.b16 %v2555
    %v3138 = vunpack.c.l.b16 %v2556
    %v3139 = vunpack.c.h.b16 %v2556
    %v3140 = vunpack.c.l.b16 %v2557
    %v3141 = vunpack.c.h.b16 %v2557
    %v3142 = vunpack.c.l.b16 %v2558
    %v3143 = vunpack.c.h.b16 %v2558
    %v3144 = vunpack.c.l.b16 %v2559
    %v3145 = vunpack.c.l.b16 %v2560
    %v3146 = vunpack.c.h.b16 %v2560
    %v3147 = vunpack.c.l.b16 %v2561
    %v3148 = vunpack.c.h.b16 %v2561
    %v3149 = vunpack.c.l.b16 %v2562
    %v3150 = vunpack.c.h.b16 %v2562
    %v3151 = vunpack.c.l.b16 %v2563
    %v3152 = vunpack.c.l.b16 %v2564
    %v3153 = vunpack.c.h.b16 %v2564
    %v3154 = vunpack.c.l.b16 %v2565
    %v3155 = vunpack.c.h.b16 %v2565
    %v3156 = vunpack.c.l.b16 %v2566
    %v3157 = vunpack.c.h.b16 %v2566
    %v3158 = vunpack.c.l.b16 %v2567
    %v3159 = vunpack.c.l.b16 %v2568
    %v3160 = vunpack.c.h.b16 %v2568
    %v3161 = vunpack.c.l.b16 %v2569
    %v3162 = vunpack.c.h.b16 %v2569
    %v3163 = vunpack.c.l.b16 %v2570
    %v3164 = vunpack.c.h.b16 %v2570
    %v3165 = vunpack.c.l.b16 %v2571
    %v3166 = vunpack.c.l.b16 %v2572
    %v3167 = vunpack.c.h.b16 %v2572
    %v3168 = vunpack.c.l.b16 %v2573
    %v3169 = vunpack.c.h.b16 %v2573
    %v3170 = vunpack.c.l.b16 %v2574
    %v3171 = vunpack.c.h.b16 %v2574
    %v3172 = vunpack.c.l.b16 %v2575
    %v3173 = vunpack.c.l.b16 %v2576
    %v3174 = vunpack.c.h.b16 %v2576
    %v3175 = vunpack.c.l.b16 %v2577
    %v3176 = vunpack.c.h.b16 %v2577
    %v3177 = vunpack.c.l.b16 %v2578
    %v3178 = vunpack.c.h.b16 %v2578
    %v3179 = vunpack.c.l.b16 %v2579
    %v3180 = vunpack.c.l.b16 %v2580
    %v3181 = vunpack.c.h.b16 %v2580
    %v3182 = vunpack.c.l.b16 %v2581
    %v3183 = vunpack.c.h.b16 %v2581
    %v3184 = vunpack.c.l.b16 %v2582
    %v3185 = vunpack.c.h.b16 %v2582
    %v3186 = vunpack.c.l.b16 %v2583
    %v3187 = vunpack.c.l.b16 %v2584
    %v3188 = vunpack.c.h.b16 %v2584
    %v3189 = vunpack.c.l.b16 %v2585
    %v3190 = vunpack.c.h.b16 %v2585
    %v3191 = vunpack.c.l.b16 %v2586
    %v3192 = vunpack.c.h.b16 %v2586
    %v3193 = vunpack.c.l.b16 %v2587
    %v3194 = vunpack.c.l.b16 %v2588
    %v3195 = vunpack.c.h.b16 %v2588
    %v3196 = vunpack.c.l.b16 %v2589
    %v3197 = vunpack.c.h.b16 %v2589
    %v3198 = vunpack.c.l.b16 %v2590
    %v3199 = vunpack.c.h.b16 %v2590
    %v3200 = vunpack.c.l.b16 %v2591
    %v3201 = vunpack.c.l.b16 %v2592
    %v3202 = vunpack.c.h.b16 %v2592
    %v3203 = vunpack.c.l.b16 %v2593
    %v3204 = vunpack.c.h.b16 %v2593
    %v3205 = vunpack.c.l.b16 %v2594
    %v3206 = vunpack.c.h.b16 %v2594
    %v3207 = vunpack.c.l.b16 %v2595
    %v3208 = vunpack.c.l.b16 %v2596
    %v3209 = vunpack.c.h.b16 %v2596
    %v3210 = vunpack.c.l.b16 %v2597
    %v3211 = vunpack.c.h.b16 %v2597
    %v3212 = vunpack.c.l.b16 %v2598
    %v3213 = vunpack.c.h.b16 %v2598
    %v3214 = vunpack.c.l.b16 %v2599
    %v3215 = vunpack.c.l.b16 %v2600
    %v3216 = vunpack.c.h.b16 %v2600
    %v3217 = vunpack.c.l.b16 %v2601
    %v3218 = vunpack.c.h.b16 %v2601
    %v3219 = vunpack.c.l.b16 %v2602
    %v3220 = vunpack.c.h.b16 %v2602
    %v3221 = vunpack.c.l.b16 %v2603
    %v3222 = vunpack.c.l.b16 %v2604
    %v3223 = vunpack.c.h.b16 %v2604
    %v3224 = vunpack.c.l.b16 %v2605
    %v3225 = vunpack.c.h.b16 %v2605
    %v3226 = vunpack.c.l.b16 %v2606
    %v3227 = vunpack.c.h.b16 %v2606
    %v3228 = vunpack.c.l.b16 %v2607
    %v3229 = vunpack.c.l.b16 %v2608
    %v3230 = vunpack.c.h.b16 %v2608
    %v3231 = vunpack.c.l.b16 %v2609
    %v3232 = vunpack.c.h.b16 %v2609
    %v3233 = vunpack.c.l.b16 %v2610
    %v3234 = vunpack.c.h.b16 %v2610
    %v3235 = vunpack.c.l.b16 %v2611
    %v3236 = vunpack.c.l.b16 %v2612
    %v3237 = vunpack.c.h.b16 %v2612
    %v3238 = vunpack.c.l.b16 %v2613
    %v3239 = vunpack.c.h.b16 %v2613
    %v3240 = vunpack.c.l.b16 %v2614
    %v3241 = vunpack.c.h.b16 %v2614
    %v3242 = vunpack.c.l.b16 %v2615
    %v3243 = vunpack.c.l.b16 %v2616
    %v3244 = vunpack.c.h.b16 %v2616
    %v3245 = vunpack.c.l.b16 %v2617
    %v3246 = vunpack.c.h.b16 %v2617
    %v3247 = vunpack.c.l.b16 %v2618
    %v3248 = vunpack.c.h.b16 %v2618
    %v3249 = vunpack.c.l.b16 %v2619
    %v3250 = vunpack.c.l.b16 %v2620
    %v3251 = vunpack.c.h.b16 %v2620
    %v3252 = vunpack.c.l.b16 %v2621
    %v3253 = vunpack.c.h.b16 %v2621
    %v3254 = vunpack.c.l.b16 %v2622
    %v3255 = vunpack.c.h.b16 %v2622
    %v3256 = vunpack.c.l.b16 %v2623
    %v3257 = vunpack.c.l.b16 %v2624
    %v3258 = vunpack.c.h.b16 %v2624
    %v3259 = vunpack.c.l.b16 %v2625
    %v3260 = vunpack.c.h.b16 %v2625
    %v3261 = vunpack.c.l.b16 %v2626
    %v3262 = vunpack.c.h.b16 %v2626
    %v3263 = vunpack.c.l.b16 %v2627
    %v3264 = vunpack.c.l.b16 %v2628
    %v3265 = vunpack.c.h.b16 %v2628
    %v3266 = vunpack.c.l.b16 %v2629
    %v3267 = vunpack.c.h.b16 %v2629
    %v3268 = vunpack.c.l.b16 %v2630
    %v3269 = vunpack.c.h.b16 %v2630
    %v3270 = vunpack.c.l.b16 %v2631
    %v3271 = vunpack.c.l.b16 %v2632
    %v3272 = vunpack.c.h.b16 %v2632
    %v3273 = vunpack.c.l.b16 %v2633
    %v3274 = vunpack.c.h.b16 %v2633
    %v3275 = vunpack.c.l.b16 %v2634
    %v3276 = vunpack.c.h.b16 %v2634
    %v3277 = vunpack.c.l.b16 %v2635
    %v3278 = vunpack.c.l.b16 %v2636
    %v3279 = vunpack.c.h.b16 %v2636
    %v3280 = vunpack.c.l.b16 %v2637
    %v3281 = vunpack.c.h.b16 %v2637
    %v3282 = vunpack.c.l.b16 %v2638
    %v3283 = vunpack.c.h.b16 %v2638
    %v3284 = vunpack.c.l.b16 %v2639
    %v3285 = vunpack.c.l.b16 %v2640
    %v3286 = vunpack.c.h.b16 %v2640
    %v3287 = vunpack.c.l.b16 %v2641
    %v3288 = vunpack.c.h.b16 %v2641
    %v3289 = vunpack.c.l.b16 %v2642
    %v3290 = vunpack.c.h.b16 %v2642
    %v3291 = vunpack.c.l.b16 %v2643
    %v3292 = vunpack.c.l.b16 %v2644
    %v3293 = vunpack.c.h.b16 %v2644
    %v3294 = vunpack.c.l.b16 %v2645
    %v3295 = vunpack.c.h.b16 %v2645
    %v3296 = vunpack.c.l.b16 %v2646
    %v3297 = vunpack.c.h.b16 %v2646
    %v3298 = vunpack.c.l.b16 %v2647
    %v3299 = vunpack.c.l.b16 %v2648
    %v3300 = vunpack.c.h.b16 %v2648
    %v3301 = vunpack.c.l.b16 %v2649
    %v3302 = vunpack.c.h.b16 %v2649
    %v3303 = vunpack.c.l.b16 %v2650
    %v3304 = vunpack.c.h.b16 %v2650
    %v3305 = vunpack.c.l.b16 %v2651
    %v3306 = vunpack.c.l.b16 %v2652
    %v3307 = vunpack.c.h.b16 %v2652
    %v3308 = vunpack.c.l.b16 %v2653
    %v3309 = vunpack.c.h.b16 %v2653
    %v3310 = vunpack.c.l.b16 %v2654
    %v3311 = vunpack.c.h.b16 %v2654
    %v3312 = vunpack.c.l.b16 %v2655
    %v3313 = vunpack.c.l.b16 %v2656
    %v3314 = vunpack.c.h.b16 %v2656
    %v3315 = vunpack.c.l.b16 %v2657
    %v3316 = vunpack.c.h.b16 %v2657
    %v3317 = vunpack.c.l.b16 %v2658
    %v3318 = vunpack.c.h.b16 %v2658
    %v3319 = vunpack.c.l.b16 %v2659
    %v3320 = vunpack.c.l.b16 %v2660
    %v3321 = vunpack.c.h.b16 %v2660
    %v3322 = vunpack.c.l.b16 %v2661
    %v3323 = vunpack.c.h.b16 %v2661
    %v3324 = vunpack.c.l.b16 %v2662
    %v3325 = vunpack.c.h.b16 %v2662
    %v3326 = vunpack.c.l.b16 %v2663
    %v3327 = vunpack.c.l.b16 %v2664
    %v3328 = vunpack.c.h.b16 %v2664
    %v3329 = vunpack.c.l.b16 %v2665
    %v3330 = vunpack.c.h.b16 %v2665
    %v3331 = vunpack.c.l.b16 %v2666
    %v3332 = vunpack.c.h.b16 %v2666
    %v3333 = vunpack.c.l.b16 %v2667
    %v3334 = vunpack.c.l.b16 %v2668
    %v3335 = vunpack.c.h.b16 %v2668
    %v3336 = vunpack.c.l.b16 %v2669
    %v3337 = vunpack.c.h.b16 %v2669
    %v3338 = vunpack.c.l.b16 %v2670
    %v3339 = vunpack.c.h.b16 %v2670
    %v3340 = vunpack.c.l.b16 %v2671
    %v3341 = vunpack.c.l.b16 %v2672
    %v3342 = vunpack.c.h.b16 %v2672
    %v3343 = vunpack.c.l.b16 %v2673
    %v3344 = vunpack.c.h.b16 %v2673
    %v3345 = vunpack.c.l.b16 %v2674
    %v3346 = vunpack.c.h.b16 %v2674
    %v3347 = vunpack.c.l.b16 %v2675
    %v3348 = vunpack.c.l.b16 %v2676
    %v3349 = vunpack.c.h.b16 %v2676
    %v3350 = vunpack.c.l.b16 %v2677
    %v3351 = vunpack.c.h.b16 %v2677
    %v3352 = vunpack.c.l.b16 %v2678
    %v3353 = vunpack.c.h.b16 %v2678
    %v3354 = vunpack.c.l.b16 %v2679
    %v3355 = vunpack.c.l.b16 %v2680
    %v3356 = vunpack.c.h.b16 %v2680
    %v3357 = vunpack.c.l.b16 %v2681
    %v3358 = vunpack.c.h.b16 %v2681
    %v3359 = vunpack.c.l.b16 %v2682
    %v3360 = vunpack.c.h.b16 %v2682
    %v3361 = vunpack.c.l.b16 %v2683
    %v3362 = vunpack.c.l.b16 %v2684
    %v3363 = vunpack.c.h.b16 %v2684
    %v3364 = vunpack.c.l.b16 %v2685
    %v3365 = vunpack.c.h.b16 %v2685
    %v3366 = vunpack.c.l.b16 %v2686
    %v3367 = vunpack.c.h.b16 %v2686
    %v3368 = vunpack.c.l.b16 %v2687
    %v3369 = vunpack.c.l.b16 %v2688
    %v3370 = vunpack.c.h.b16 %v2688
    %v3371 = vunpack.c.l.b16 %v2689
    %v3372 = vunpack.c.h.b16 %v2689
    %v3373 = vunpack.c.l.b16 %v2690
    %v3374 = vunpack.c.h.b16 %v2690
    %v3375 = vunpack.c.l.b16 %v2691
    %v3376 = vunpack.c.l.b16 %v2692
    %v3377 = vunpack.c.h.b16 %v2692
    %v3378 = vunpack.c.l.b16 %v2693
    %v3379 = vunpack.c.h.b16 %v2693
    %v3380 = vunpack.c.l.b16 %v2694
    %v3381 = vunpack.c.h.b16 %v2694
    %v3382 = vunpack.c.l.b16 %v2695
    %v3383 = vunpack.c.l.b16 %v2696
    %v3384 = vunpack.c.h.b16 %v2696
    %v3385 = vunpack.c.l.b16 %v2697
    %v3386 = vunpack.c.h.b16 %v2697
    %v3387 = vunpack.c.l.b16 %v2698
    %v3388 = vunpack.c.h.b16 %v2698
    %v3389 = vunpack.c.l.b16 %v2699
    %v3390 = vunpack.c.l.b16 %v2700
    %v3391 = vunpack.c.h.b16 %v2700
    %v3392 = vunpack.c.l.b16 %v2701
    %v3393 = vunpack.c.h.b16 %v2701
    %v3394 = vunpack.c.l.b16 %v2702
    %v3395 = vunpack.c.h.b16 %v2702
    %v3396 = vunpack.c.l.b16 %v2703
    %v3397 = vunpack.c.l.b16 %v2704
    %v3398 = vunpack.c.h.b16 %v2704
    %v3399 = vunpack.c.l.b16 %v2705
    %v3400 = vunpack.c.h.b16 %v2705
    %v3401 = vunpack.c.l.b16 %v2706
    %v3402 = vunpack.c.h.b16 %v2706
    %v3403 = vunpack.c.l.b16 %v2707
    %v3404 = vunpack.c.l.b16 %v2708
    %v3405 = vunpack.c.h.b16 %v2708
    %v3406 = vunpack.c.l.b16 %v2709
    %v3407 = vunpack.c.h.b16 %v2709
    %v3408 = vunpack.c.l.b16 %v2710
    %v3409 = vunpack.c.h.b16 %v2710
    %v3410 = vunpack.c.l.b16 %v2711
    %v3411 = vunpack.c.l.b16 %v2712
    %v3412 = vunpack.c.h.b16 %v2712
    %v3413 = vunpack.c.l.b16 %v2713
    %v3414 = vunpack.c.h.b16 %v2713
    %v3415 = vunpack.c.l.b16 %v2714
    %v3416 = vunpack.c.h.b16 %v2714
    %v3417 = vunpack.c.l.b16 %v2715
    %v3418 = vunpack.c.l.b16 %v2716
    %v3419 = vunpack.c.h.b16 %v2716
    %v3420 = vunpack.c.l.b16 %v2717
    %v3421 = vunpack.c.h.b16 %v2717
    %v3422 = vunpack.c.l.b16 %v2718
    %v3423 = vunpack.c.h.b16 %v2718
    %v3424 = vunpack.c.l.b16 %v2719
    %v3425 = vunpack.c.l.b16 %v2720
    %v3426 = vunpack.c.h.b16 %v2720
    %v3427 = vunpack.c.l.b16 %v2721
    %v3428 = vunpack.c.h.b16 %v2721
    %v3429 = vunpack.c.l.b16 %v2722
    %v3430 = vunpack.c.h.b16 %v2722
    %v3431 = vunpack.c.l.b16 %v2723
    %v3432 = vunpack.c.l.b16 %v2724
    %v3433 = vunpack.c.h.b16 %v2724
    %v3434 = vunpack.c.l.b16 %v2725
    %v3435 = vunpack.c.h.b16 %v2725
    %v3436 = vunpack.c.l.b16 %v2726
    %v3437 = vunpack.c.h.b16 %v2726
    %v3438 = vunpack.c.l.b16 %v2727
    %v3439 = vunpack.c.l.b16 %v2728
    %v3440 = vunpack.c.h.b16 %v2728
    %v3441 = vunpack.c.l.b16 %v2729
    %v3442 = vunpack.c.h.b16 %v2729
    %v3443 = vunpack.c.l.b16 %v2730
    %v3444 = vunpack.c.h.b16 %v2730
    %v3445 = vunpack.c.l.b16 %v2731
    %v3446 = vunpack.c.l.b16 %v2732
    %v3447 = vunpack.c.h.b16 %v2732
    %v3448 = vunpack.c.l.b16 %v2733
    %v3449 = vunpack.c.h.b16 %v2733
    %v3450 = vunpack.c.l.b16 %v2734
    %v3451 = vunpack.c.h.b16 %v2734
    %v3452 = vunpack.c.l.b16 %v2735
    %v3453 = vunpack.c.l.b16 %v2736
    %v3454 = vunpack.c.h.b16 %v2736
    %v3455 = vunpack.c.l.b16 %v2737
    %v3456 = vunpack.c.h.b16 %v2737
    %v3457 = vunpack.c.l.b16 %v2738
    %v3458 = vunpack.c.h.b16 %v2738
    %v3459 = vunpack.c.l.b16 %v2739
    %v3460 = vunpack.c.l.b16 %v2740
    %v3461 = vunpack.c.h.b16 %v2740
    %v3462 = vunpack.c.l.b16 %v2741
    %v3463 = vunpack.c.h.b16 %v2741
    %v3464 = vunpack.c.l.b16 %v2742
    %v3465 = vunpack.c.h.b16 %v2742
    %v3466 = vunpack.c.l.b16 %v2743
    %v3467 = vunpack.c.l.b16 %v2744
    %v3468 = vunpack.c.h.b16 %v2744
    %v3469 = vunpack.c.l.b16 %v2745
    %v3470 = vunpack.c.h.b16 %v2745
    %v3471 = vunpack.c.l.b16 %v2746
    %v3472 = vunpack.c.h.b16 %v2746
    %v3473 = vunpack.c.l.b16 %v2747
    %v3474 = vunpack.c.l.b16 %v2748
    %v3475 = vunpack.c.h.b16 %v2748
    %v3476 = vunpack.c.l.b16 %v2749
    %v3477 = vunpack.c.h.b16 %v2749
    %v3478 = vunpack.c.l.b16 %v2750
    %v3479 = vunpack.c.h.b16 %v2750
    %v3480 = vunpack.c.l.b16 %v2751
    %v3481 = vunpack.c.l.b16 %v2752
    %v3482 = vunpack.c.h.b16 %v2752
    %v3483 = vunpack.c.l.b16 %v2753
    %v3484 = vunpack.c.h.b16 %v2753
    %v3485 = vunpack.c.l.b16 %v2754
    %v3486 = vunpack.c.h.b16 %v2754
    %v3487 = vunpack.c.l.b16 %v2755
    %v3488 = vunpack.c.l.b16 %v2756
    %v3489 = vunpack.c.h.b16 %v2756
    %v3490 = vunpack.c.l.b16 %v2757
    %v3491 = vunpack.c.h.b16 %v2757
    %v3492 = vunpack.c.l.b16 %v2758
    %v3493 = vunpack.c.h.b16 %v2758
    %v3494 = vunpack.c.l.b16 %v2759
    %v3495 = vunpack.c.l.b16 %v2760
    %v3496 = vunpack.c.h.b16 %v2760
    %v3497 = vunpack.c.l.b16 %v2761
    %v3498 = vunpack.c.h.b16 %v2761
    %v3499 = vunpack.c.l.b16 %v2762
    %v3500 = vunpack.c.h.b16 %v2762
    %v3501 = vunpack.c.l.b16 %v2763
    %v3502 = vunpack.c.l.b16 %v2764
    %v3503 = vunpack.c.h.b16 %v2764
    %v3504 = vunpack.c.l.b16 %v2765
    %v3505 = vunpack.c.h.b16 %v2765
    %v3506 = vunpack.c.l.b16 %v2766
    %v3507 = vunpack.c.h.b16 %v2766
    %v3508 = vunpack.c.l.b16 %v2767
    %v3509 = vpack.c.b16 %v3068, %v3061
    %v3510 = vpack.c.b16 %v3069, %v3062
    %v3511 = vpack.c.b16 %v3070, %v3063
    %v3512 = vpack.c.b16 %v3071, %v3064
    %v3513 = vpack.c.b16 %v3072, %v3065
    %v3514 = vpack.c.b16 %v3073, %v3066
    %v3515 = vpack.c.b16 %v3074, %v3067
    %v3516 = vpack.c.b16 %v3082, %v3075
    %v3517 = vpack.c.b16 %v3083, %v3076
    %v3518 = vpack.c.b16 %v3084, %v3077
    %v3519 = vpack.c.b16 %v3085, %v3078
    %v3520 = vpack.c.b16 %v3086, %v3079
    %v3521 = vpack.c.b16 %v3087, %v3080
    %v3522 = vpack.c.b16 %v3088, %v3081
    %v3523 = vpack.c.b16 %v3096, %v3089
    %v3524 = vpack.c.b16 %v3097, %v3090
    %v3525 = vpack.c.b16 %v3098, %v3091
    %v3526 = vpack.c.b16 %v3099, %v3092
    %v3527 = vpack.c.b16 %v3100, %v3093
    %v3528 = vpack.c.b16 %v3101, %v3094
    %v3529 = vpack.c.b16 %v3102, %v3095
    %v3530 = vpack.c.b16 %v3110, %v3103
    %v3531 = vpack.c.b16 %v3111, %v3104
    %v3532 = vpack.c.b16 %v3112, %v3105
    %v3533 = vpack.c.b16 %v3113, %v3106
    %v3534 = vpack.c.b16 %v3114, %v3107
    %v3535 = vpack.c.b16 %v3115, %v3108
    %v3536 = vpack.c.b16 %v3116, %v3109
    %v3537 = vpack.c.b16 %v3124, %v3117
    %v3538 = vpack.c.b16 %v3125, %v3118
    %v3539 = vpack.c.b16 %v3126, %v3119
    %v3540 = vpack.c.b16 %v3127, %v3120
    %v3541 = vpack.c.b16 %v3128, %v3121
    %v3542 = vpack.c.b16 %v3129, %v3122
    %v3543 = vpack.c.b16 %v3130, %v3123
    %v3544 = vpack.c.b16 %v3138, %v3131
    %v3545 = vpack.c.b16 %v3139, %v3132
    %v3546 = vpack.c.b16 %v3140, %v3133
    %v3547 = vpack.c.b16 %v3141, %v3134
    %v3548 = vpack.c.b16 %v3142, %v3135
    %v3549 = vpack.c.b16 %v3143, %v3136
    %v3550 = vpack.c.b16 %v3144, %v3137
    %v3551 = vpack.c.b16 %v3152, %v3145
    %v3552 = vpack.c.b16 %v3153, %v3146
    %v3553 = vpack.c.b16 %v3154, %v3147
    %v3554 = vpack.c.b16 %v3155, %v3148
    %v3555 = vpack.c.b16 %v3156, %v3149
    %v3556 = vpack.c.b16 %v3157, %v3150
    %v3557 = vpack.c.b16 %v3158, %v3151
    %v3558 = vpack.c.b16 %v3166, %v3159
    %v3559 = vpack.c.b16 %v3167, %v3160
    %v3560 = vpack.c.b16 %v3168, %v3161
    %v3561 = vpack.c.b16 %v3169, %v3162
    %v3562 = vpack.c.b16 %v3170, %v3163
    %v3563 = vpack.c.b16 %v3171, %v3164
    %v3564 = vpack.c.b16 %v3172, %v3165
    %v3565 = vpack.c.b16 %v3180, %v3173
    %v3566 = vpack.c.b16 %v3181, %v3174
    %v3567 = vpack.c.b16 %v3182, %v3175
    %v3568 = vpack.c.b16 %v3183, %v3176
    %v3569 = vpack.c.b16 %v3184, %v3177
    %v3570 = vpack.c.b16 %v3185, %v3178
    %v3571 = vpack.c.b16 %v3186, %v3179
    %v3572 = vpack.c.b16 %v3194, %v3187
    %v3573 = vpack.c.b16 %v3195, %v3188
    %v3574 = vpack.c.b16 %v3196, %v3189
    %v3575 = vpack.c.b16 %v3197, %v3190
    %v3576 = vpack.c.b16 %v3198, %v3191
    %v3577 = vpack.c.b16 %v3199, %v3192
    %v3578 = vpack.c.b16 %v3200, %v3193
    %v3579 = vpack.c.b16 %v3208, %v3201
    %v3580 = vpack.c.b16 %v3209, %v3202
    %v3581 = vpack.c.b16 %v3210, %v3203
    %v3582 = vpack.c.b16 %v3211, %v3204
    %v3583 = vpack.c.b16 %v3212, %v3205
    %v3584 = vpack.c.b16 %v3213, %v3206
    %v3585 = vpack.c.b16 %v3214, %v3207
    %v3586 = vpack.c.b16 %v3222, %v3215
    %v3587 = vpack.c.b16 %v3223, %v3216
    %v3588 = vpack.c.b16 %v3224, %v3217
    %v3589 = vpack.c.b16 %v3225, %v3218
    %v3590 = vpack.c.b16 %v3226, %v3219
    %v3591 = vpack.c.b16 %v3227, %v3220
    %v3592 = vpack.c.b16 %v3228, %v3221
    %v3593 = vpack.c.b16 %v3236, %v3229
    %v3594 = vpack.c.b16 %v3237, %v3230
    %v3595 = vpack.c.b16 %v3238, %v3231
    %v3596 = vpack.c.b16 %v3239, %v3232
    %v3597 = vpack.c.b16 %v3240, %v3233
    %v3598 = vpack.c.b16 %v3241, %v3234
    %v3599 = vpack.c.b16 %v3242, %v3235
    %v3600 = vpack.c.b16 %v3250, %v3243
    %v3601 = vpack.c.b16 %v3251, %v3244
    %v3602 = vpack.c.b16 %v3252, %v3245
    %v3603 = vpack.c.b16 %v3253, %v3246
    %v3604 = vpack.c.b16 %v3254, %v3247
    %v3605 = vpack.c.b16 %v3255, %v3248
    %v3606 = vpack.c.b16 %v3256, %v3249
    %v3607 = vpack.c.b16 %v3264, %v3257
    %v3608 = vpack.c.b16 %v3265, %v3258
    %v3609 = vpack.c.b16 %v3266, %v3259
    %v3610 = vpack.c.b16 %v3267, %v3260
    %v3611 = vpack.c.b16 %v3268, %v3261
    %v3612 = vpack.c.b16 %v3269, %v3262
    %v3613 = vpack.c.b16 %v3270, %v3263
    %v3614 = vpack.c.b16 %v3278, %v3271
    %v3615 = vpack.c.b16 %v3279, %v3272
    %v3616 = vpack.c.b16 %v3280, %v3273
    %v3617 = vpack.c.b16 %v3281, %v3274
    %v3618 = vpack.c.b16 %v3282, %v3275
    %v3619 = vpack.c.b16 %v3283, %v3276
    %v3620 = vpack.c.b16 %v3284, %v3277
    %v3621 = vpack.c.b16 %v3292, %v3285
    %v3622 = vpack.c.b16 %v3293, %v3286
    %v3623 = vpack.c.b16 %v3294, %v3287
    %v3624 = vpack.c.b16 %v3295, %v3288
    %v3625 = vpack.c.b16 %v3296, %v3289
    %v3626 = vpack.c.b16 %v3297, %v3290
    %v3627 = vpack.c.b16 %v3298, %v3291
    %v3628 = vpack.c.b16 %v3306, %v3299
    %v3629 = vpack.c.b16 %v3307, %v3300
    %v3630 = vpack.c.b16 %v3308, %v3301
    %v3631 = vpack.c.b16 %v3309, %v3302
    %v3632 = vpack.c.b16 %v3310, %v3303
    %v3633 = vpack.c.b16 %v3311, %v3304
    %v3634 = vpack.c.b16 %v3312, %v3305
    %v3635 = vpack.c.b16 %v3320, %v3313
    %v3636 = vpack.c.b16 %v3321, %v3314
    %v3637 = vpack.c.b16 %v3322, %v3315
    %v3638 = vpack.c.b16 %v3323, %v3316
    %v3639 = vpack.c.b16 %v3324, %v3317
    %v3640 = vpack.c.b16 %v3325, %v3318
    %v3641 = vpack.c.b16 %v3326, %v3319
    %v3642 = vpack.c.b16 %v3334, %v3327
    %v3643 = vpack.c.b16 %v3335, %v3328
    %v3644 = vpack.c.b16 %v3336, %v3329
    %v3645 = vpack.c.b16 %v3337, %v3330
    %v3646 = vpack.c.b16 %v3338, %v3331
    %v3647 = vpack.c.b16 %v3339, %v3332
    %v3648 = vpack.c.b16 %v3340, %v3333
    %v3649 = vpack.c.b16 %v3348, %v3341
    %v3650 = vpack.c.b16 %v3349, %v3342
    %v3651 = vpack.c.b16 %v3350, %v3343
    %v3652 = vpack.c.b16 %v3351, %v3344
    %v3653 = vpack.c.b16 %v3352, %v3345
    %v3654 = vpack.c.b16 %v3353, %v3346
    %v3655 = vpack.c.b16 %v3354, %v3347
    %v3656 = vpack.c.b16 %v3362, %v3355
    %v3657 = vpack.c.b16 %v3363, %v3356
    %v3658 = vpack.c.b16 %v3364, %v3357
    %v3659 = vpack.c.b16 %v3365, %v3358
    %v3660 = vpack.c.b16 %v3366, %v3359
    %v3661 = vpack.c.b16 %v3367, %v3360
    %v3662 = vpack.c.b16 %v3368, %v3361
    %v3663 = vpack.c.b16 %v3376, %v3369
    %v3664 = vpack.c.b16 %v3377, %v3370
    %v3665 = vpack.c.b16 %v3378, %v3371
    %v3666 = vpack.c.b16 %v3379, %v3372
    %v3667 = vpack.c.b16 %v3380, %v3373
    %v3668 = vpack.c.b16 %v3381, %v3374
    %v3669 = vpack.c.b16 %v3382, %v3375
    %v3670 = vpack.c.b16 %v3390, %v3383
    %v3671 = vpack.c.b16 %v3391, %v3384
    %v3672 = vpack.c.b16 %v3392, %v3385
    %v3673 = vpack.c.b16 %v3393, %v3386
    %v3674 = vpack.c.b16 %v3394, %v3387
    %v3675 = vpack.c.b16 %v3395, %v3388
    %v3676 = vpack.c.b16 %v3396, %v3389
    %v3677 = vpack.c.b16 %v3404, %v3397
    %v3678 = vpack.c.b16 %v3405, %v3398
    %v3679 = vpack.c.b16 %v3406, %v3399
    %v3680 = vpack.c.b16 %v3407, %v3400
    %v3681 = vpack.c.b16 %v3408, %v3401
    %v3682 = vpack.c.b16 %v3409, %v3402
    %v3683 = vpack.c.b16 %v3410, %v3403
    %v3684 = vpack.c.b16 %v3418, %v3411
    %v3685 = vpack.c.b16 %v3419, %v3412
    %v3686 = vpack.c.b16 %v3420, %v3413
    %v3687 = vpack.c.b16 %v3421, %v3414
    %v3688 = vpack.c.b16 %v3422, %v3415
    %v3689 = vpack.c.b16 %v3423, %v3416
    %v3690 = vpack.c.b16 %v3424, %v3417
    %v3691 = vpack.c.b16 %v3432, %v3425
    %v3692 = vpack.c.b16 %v3433, %v3426
    %v3693 = vpack.c.b16 %v3434, %v3427
    %v3694 = vpack.c.b16 %v3435, %v3428
    %v3695 = vpack.c.b16 %v3436, %v3429
    %v3696 = vpack.c.b16 %v3437, %v3430
    %v3697 = vpack.c.b16 %v3438, %v3431
    %v3698 = vpack.c.b16 %v3446, %v3439
    %v3699 = vpack.c.b16 %v3447, %v3440
    %v3700 = vpack.c.b16 %v3448, %v3441
    %v3701 = vpack.c.b16 %v3449, %v3442
    %v3702 = vpack.c.b16 %v3450, %v3443
    %v3703 = vpack.c.b16 %v3451, %v3444
    %v3704 = vpack.c.b16 %v3452, %v3445
    %v3705 = vpack.c.b16 %v3460, %v3453
    %v3706 = vpack.c.b16 %v3461, %v3454
    %v3707 = vpack.c.b16 %v3462, %v3455
    %v3708 = vpack.c.b16 %v3463, %v3456
    %v3709 = vpack.c.b16 %v3464, %v3457
    %v3710 = vpack.c.b16 %v3465, %v3458
    %v3711 = vpack.c.b16 %v3466, %v3459
    %v3712 = vpack.c.b16 %v3474, %v3467
    %v3713 = vpack.c.b16 %v3475, %v3468
    %v3714 = vpack.c.b16 %v3476, %v3469
    %v3715 = vpack.c.b16 %v3477, %v3470
    %v3716 = vpack.c.b16 %v3478, %v3471
    %v3717 = vpack.c.b16 %v3479, %v3472
    %v3718 = vpack.c.b16 %v3480, %v3473
    %v3719 = vpack.c.b16 %v3488, %v3481
    %v3720 = vpack.c.b16 %v3489, %v3482
    %v3721 = vpack.c.b16 %v3490, %v3483
    %v3722 = vpack.c.b16 %v3491, %v3484
    %v3723 = vpack.c.b16 %v3492, %v3485
    %v3724 = vpack.c.b16 %v3493, %v3486
    %v3725 = vpack.c.b16 %v3494, %v3487
    %v3726 = vpack.c.b16 %v3502, %v3495
    %v3727 = vpack.c.b16 %v3503, %v3496
    %v3728 = vpack.c.b16 %v3504, %v3497
    %v3729 = vpack.c.b16 %v3505, %v3498
    %v3730 = vpack.c.b16 %v3506, %v3499
    %v3731 = vpack.c.b16 %v3507, %v3500
    %v3732 = vpack.c.b16 %v3508, %v3501
    %3957 = vmatprep.subr.bf16.mxu0 %v3510
    %3958 = vmatpush1.bf16.msra.mxu0 %v3509
    %3959 = vmatprep.subr.bf16.mxu0 %v3517
    %3960 = vmatpush1.bf16.msra.mxu0 %v3516
    %3961 = vmatprep.subr.bf16.mxu0 %v3524
    %3962 = vmatpush1.bf16.msra.mxu0 %v3523
    %3963 = vmatprep.subr.bf16.mxu0 %v3531
    %3964 = vmatpush1.bf16.msra.mxu0 %v3530
    %3965 = vmatprep.subr.bf16.mxu0 %v3538
    %3966 = vmatpush1.bf16.msra.mxu0 %v3537
    %3967 = vmatprep.subr.bf16.mxu0 %v3545
    %3968 = vmatpush1.bf16.msra.mxu0 %v3544
    %3969 = vmatprep.subr.bf16.mxu0 %v3552
    %3970 = vmatpush1.bf16.msra.mxu0 %v3551
    %3971 = vmatprep.subr.bf16.mxu0 %v3559
    %3972 = vmatpush1.bf16.msra.mxu0 %v3558
    %3973 = vmatprep.subr.bf16.mxu0 %v3566
    %3974 = vmatpush1.bf16.msra.mxu0 %v3565
    %3975 = vmatprep.subr.bf16.mxu0 %v3573
    %3976 = vmatpush1.bf16.msra.mxu0 %v3572
    %3977 = vmatprep.subr.bf16.mxu0 %v3580
    %3978 = vmatpush1.bf16.msra.mxu0 %v3579
    %3979 = vmatprep.subr.bf16.mxu0 %v3587
    %3980 = vmatpush1.bf16.msra.mxu0 %v3586
    %3981 = vmatprep.subr.bf16.mxu0 %v3594
    %3982 = vmatpush1.bf16.msra.mxu0 %v3593
    %3983 = vmatprep.subr.bf16.mxu0 %v3601
    %3984 = vmatpush1.bf16.msra.mxu0 %v3600
    %3985 = vmatprep.subr.bf16.mxu0 %v3608
    %3986 = vmatpush1.bf16.msra.mxu0 %v3607
    %3987 = vmatprep.subr.bf16.mxu0 %v3615
    %3988 = vmatpush1.bf16.msra.mxu0 %v3614
    %3989 = vmatprep.mubr.bf16.mxu0 %v2509
    %3990 = vmatmul.mubr.bf16.gmra.mrb[0].mxu0 %v2508
    %v3991 = vpop.f32.mrb[0].mxu0
    %v3992 = vadd.f32 %v2773, %v3991
    %v3993 = vpop.f32.mrb[0].mxu0
    %v3994 = vadd.f32 %v2777, %v3993
    %v3995 = vpop.f32.mrb[0].mxu0
    %v3996 = vadd.f32 %v2773, %v3995
    %v3997 = vpop.f32.mrb[0].mxu0
    %v3998 = vadd.f32 %v2777, %v3997
    %3999 = vdwg.mxu0
    %4000 = vmatprep.subr.bf16.mxu0 %v3622
    %4001 = vmatpush1.bf16.msra.mxu0 %v3621
    %4002 = vmatprep.subr.bf16.mxu0 %v3629
    %4003 = vmatpush1.bf16.msra.mxu0 %v3628
    %4004 = vmatprep.subr.bf16.mxu0 %v3636
    %4005 = vmatpush1.bf16.msra.mxu0 %v3635
    %4006 = vmatprep.subr.bf16.mxu0 %v3643
    %4007 = vmatpush1.bf16.msra.mxu0 %v3642
    %4008 = vmatprep.subr.bf16.mxu0 %v3650
    %4009 = vmatpush1.bf16.msra.mxu0 %v3649
    %4010 = vmatprep.subr.bf16.mxu0 %v3657
    %4011 = vmatpush1.bf16.msra.mxu0 %v3656
    %4012 = vmatprep.subr.bf16.mxu0 %v3664
    %4013 = vmatpush1.bf16.msra.mxu0 %v3663
    %4014 = vmatprep.subr.bf16.mxu0 %v3671
    %4015 = vmatpush1.bf16.msra.mxu0 %v3670
    %4016 = vmatprep.subr.bf16.mxu0 %v3678
    %4017 = vmatpush1.bf16.msra.mxu0 %v3677
    %4018 = vmatprep.subr.bf16.mxu0 %v3685
    %4019 = vmatpush1.bf16.msra.mxu0 %v3684
    %4020 = vmatprep.subr.bf16.mxu0 %v3692
    %4021 = vmatpush1.bf16.msra.mxu0 %v3691
    %4022 = vmatprep.subr.bf16.mxu0 %v3699
    %4023 = vmatpush1.bf16.msra.mxu0 %v3698
    %4024 = vmatprep.subr.bf16.mxu0 %v3706
    %4025 = vmatpush1.bf16.msra.mxu0 %v3705
    %4026 = vmatprep.subr.bf16.mxu0 %v3713
    %4027 = vmatpush1.bf16.msra.mxu0 %v3712
    %4028 = vmatprep.subr.bf16.mxu0 %v3720
    %4029 = vmatpush1.bf16.msra.mxu0 %v3719
    %4030 = vmatprep.subr.bf16.mxu0 %v3727
    %4031 = vmatpush1.bf16.msra.mxu0 %v3726
    %4032 = vmatprep.mubr.bf16.mxu0 %v2511
    %4033 = vmatmul.mubr.bf16.gmra.mrb[0].mxu0 %v2510
    %v4034 = vpop.f32.mrb[0].mxu0
    %v4035 = vadd.f32 %v3992, %v4034
    %v4036 = vpop.f32.mrb[0].mxu0
    %v4037 = vadd.f32 %v3994, %v4036
    %v4038 = vpop.f32.mrb[0].mxu0
    %v4039 = vadd.f32 %v3996, %v4038
    %v4040 = vpop.f32.mrb[0].mxu0
    %v4041 = vadd.f32 %v3998, %v4040
    %4042 = vdwg.mxu0
    %4043 = vmatprep.subr.bf16.mxu0 %v3512
    %4044 = vmatpush1.bf16.msra.mxu0 %v3511
    %4045 = vmatprep.subr.bf16.mxu0 %v3519
    %4046 = vmatpush1.bf16.msra.mxu0 %v3518
    %4047 = vmatprep.subr.bf16.mxu0 %v3526
    %4048 = vmatpush1.bf16.msra.mxu0 %v3525
    %4049 = vmatprep.subr.bf16.mxu0 %v3533
    %4050 = vmatpush1.bf16.msra.mxu0 %v3532
    %4051 = vmatprep.subr.bf16.mxu0 %v3540
    %4052 = vmatpush1.bf16.msra.mxu0 %v3539
    %4053 = vmatprep.subr.bf16.mxu0 %v3547
    %4054 = vmatpush1.bf16.msra.mxu0 %v3546
    %4055 = vmatprep.subr.bf16.mxu0 %v3554
    %4056 = vmatpush1.bf16.msra.mxu0 %v3553
    %4057 = vmatprep.subr.bf16.mxu0 %v3561
    %4058 = vmatpush1.bf16.msra.mxu0 %v3560
    %4059 = vmatprep.subr.bf16.mxu0 %v3568
    %4060 = vmatpush1.bf16.msra.mxu0 %v3567
    %4061 = vmatprep.subr.bf16.mxu0 %v3575
    %4062 = vmatpush1.bf16.msra.mxu0 %v3574
    %4063 = vmatprep.subr.bf16.mxu0 %v3582
    %4064 = vmatpush1.bf16.msra.mxu0 %v3581
    %4065 = vmatprep.subr.bf16.mxu0 %v3589
    %4066 = vmatpush1.bf16.msra.mxu0 %v3588
    %4067 = vmatprep.subr.bf16.mxu0 %v3596
    %4068 = vmatpush1.bf16.msra.mxu0 %v3595
    %4069 = vmatprep.subr.bf16.mxu0 %v3603
    %4070 = vmatpush1.bf16.msra.mxu0 %v3602
    %4071 = vmatprep.subr.bf16.mxu0 %v3610
    %4072 = vmatpush1.bf16.msra.mxu0 %v3609
    %4073 = vmatprep.subr.bf16.mxu0 %v3617
    %4074 = vmatpush1.bf16.msra.mxu0 %v3616
    %4075 = vmatprep.mubr.bf16.mxu0 %v2509
    %4076 = vmatmul.mubr.bf16.gmra.mrb[0].mxu0 %v2508
    %v4077 = vpop.f32.mrb[0].mxu0
    %v4078 = vadd.f32 %v2781, %v4077
    %v4079 = vpop.f32.mrb[0].mxu0
    %v4080 = vadd.f32 %v2785, %v4079
    %v4081 = vpop.f32.mrb[0].mxu0
    %v4082 = vadd.f32 %v2781, %v4081
    %v4083 = vpop.f32.mrb[0].mxu0
    %v4084 = vadd.f32 %v2785, %v4083
    %4085 = vdwg.mxu0
    %4086 = vmatprep.subr.bf16.mxu0 %v3624
    %4087 = vmatpush1.bf16.msra.mxu0 %v3623
    %4088 = vmatprep.subr.bf16.mxu0 %v3631
    %4089 = vmatpush1.bf16.msra.mxu0 %v3630
    %4090 = vmatprep.subr.bf16.mxu0 %v3638
    %4091 = vmatpush1.bf16.msra.mxu0 %v3637
    %4092 = vmatprep.subr.bf16.mxu0 %v3645
    %4093 = vmatpush1.bf16.msra.mxu0 %v3644
    %4094 = vmatprep.subr.bf16.mxu0 %v3652
    %4095 = vmatpush1.bf16.msra.mxu0 %v3651
    %4096 = vmatprep.subr.bf16.mxu0 %v3659
    %4097 = vmatpush1.bf16.msra.mxu0 %v3658
    %4098 = vmatprep.subr.bf16.mxu0 %v3666
    %4099 = vmatpush1.bf16.msra.mxu0 %v3665
    %4100 = vmatprep.subr.bf16.mxu0 %v3673
    %4101 = vmatpush1.bf16.msra.mxu0 %v3672
    %4102 = vmatprep.subr.bf16.mxu0 %v3680
    %4103 = vmatpush1.bf16.msra.mxu0 %v3679
    %4104 = vmatprep.subr.bf16.mxu0 %v3687
    %4105 = vmatpush1.bf16.msra.mxu0 %v3686
    %4106 = vmatprep.subr.bf16.mxu0 %v3694
    %4107 = vmatpush1.bf16.msra.mxu0 %v3693
    %4108 = vmatprep.subr.bf16.mxu0 %v3701
    %4109 = vmatpush1.bf16.msra.mxu0 %v3700
    %4110 = vmatprep.subr.bf16.mxu0 %v3708
    %4111 = vmatpush1.bf16.msra.mxu0 %v3707
    %4112 = vmatprep.subr.bf16.mxu0 %v3715
    %4113 = vmatpush1.bf16.msra.mxu0 %v3714
    %4114 = vmatprep.subr.bf16.mxu0 %v3722
    %4115 = vmatpush1.bf16.msra.mxu0 %v3721
    %4116 = vmatprep.subr.bf16.mxu0 %v3729
    %4117 = vmatpush1.bf16.msra.mxu0 %v3728
    %4118 = vmatprep.mubr.bf16.mxu0 %v2511
    %4119 = vmatmul.mubr.bf16.gmra.mrb[0].mxu0 %v2510
    %v4120 = vpop.f32.mrb[0].mxu0
    %v4121 = vadd.f32 %v4078, %v4120
    %v4122 = vpop.f32.mrb[0].mxu0
    %v4123 = vadd.f32 %v4080, %v4122
    %v4124 = vpop.f32.mrb[0].mxu0
    %v4125 = vadd.f32 %v4082, %v4124
    %v4126 = vpop.f32.mrb[0].mxu0
    %v4127 = vadd.f32 %v4084, %v4126
    %4128 = vdwg.mxu0
    %4129 = vmatprep.subr.bf16.mxu0 %v3514
    %4130 = vmatpush1.bf16.msra.mxu0 %v3513
    %4131 = vmatprep.subr.bf16.mxu0 %v3521
    %4132 = vmatpush1.bf16.msra.mxu0 %v3520
    %4133 = vmatprep.subr.bf16.mxu0 %v3528
    %4134 = vmatpush1.bf16.msra.mxu0 %v3527
    %4135 = vmatprep.subr.bf16.mxu0 %v3535
    %4136 = vmatpush1.bf16.msra.mxu0 %v3534
    %4137 = vmatprep.subr.bf16.mxu0 %v3542
    %4138 = vmatpush1.bf16.msra.mxu0 %v3541
    %4139 = vmatprep.subr.bf16.mxu0 %v3549
    %4140 = vmatpush1.bf16.msra.mxu0 %v3548
    %4141 = vmatprep.subr.bf16.mxu0 %v3556
    %4142 = vmatpush1.bf16.msra.mxu0 %v3555
    %4143 = vmatprep.subr.bf16.mxu0 %v3563
    %4144 = vmatpush1.bf16.msra.mxu0 %v3562
    %4145 = vmatprep.subr.bf16.mxu0 %v3570
    %4146 = vmatpush1.bf16.msra.mxu0 %v3569
    %4147 = vmatprep.subr.bf16.mxu0 %v3577
    %4148 = vmatpush1.bf16.msra.mxu0 %v3576
    %4149 = vmatprep.subr.bf16.mxu0 %v3584
    %4150 = vmatpush1.bf16.msra.mxu0 %v3583
    %4151 = vmatprep.subr.bf16.mxu0 %v3591
    %4152 = vmatpush1.bf16.msra.mxu0 %v3590
    %4153 = vmatprep.subr.bf16.mxu0 %v3598
    %4154 = vmatpush1.bf16.msra.mxu0 %v3597
    %4155 = vmatprep.subr.bf16.mxu0 %v3605
    %4156 = vmatpush1.bf16.msra.mxu0 %v3604
    %4157 = vmatprep.subr.bf16.mxu0 %v3612
    %4158 = vmatpush1.bf16.msra.mxu0 %v3611
    %4159 = vmatprep.subr.bf16.mxu0 %v3619
    %4160 = vmatpush1.bf16.msra.mxu0 %v3618
    %4161 = vmatprep.mubr.bf16.mxu0 %v2509
    %4162 = vmatmul.mubr.bf16.gmra.mrb[0].mxu0 %v2508
    %v4163 = vpop.f32.mrb[0].mxu0
    %v4164 = vadd.f32 %v2789, %v4163
    %v4165 = vpop.f32.mrb[0].mxu0
    %v4166 = vadd.f32 %v2793, %v4165
    %v4167 = vpop.f32.mrb[0].mxu0
    %v4168 = vadd.f32 %v2789, %v4167
    %v4169 = vpop.f32.mrb[0].mxu0
    %v4170 = vadd.f32 %v2793, %v4169
    %4171 = vdwg.mxu0
    %4172 = vmatprep.subr.bf16.mxu0 %v3626
    %4173 = vmatpush1.bf16.msra.mxu0 %v3625
    %4174 = vmatprep.subr.bf16.mxu0 %v3633
    %4175 = vmatpush1.bf16.msra.mxu0 %v3632
    %4176 = vmatprep.subr.bf16.mxu0 %v3640
    %4177 = vmatpush1.bf16.msra.mxu0 %v3639
    %4178 = vmatprep.subr.bf16.mxu0 %v3647
    %4179 = vmatpush1.bf16.msra.mxu0 %v3646
    %4180 = vmatprep.subr.bf16.mxu0 %v3654
    %4181 = vmatpush1.bf16.msra.mxu0 %v3653
    %4182 = vmatprep.subr.bf16.mxu0 %v3661
    %4183 = vmatpush1.bf16.msra.mxu0 %v3660
    %4184 = vmatprep.subr.bf16.mxu0 %v3668
    %4185 = vmatpush1.bf16.msra.mxu0 %v3667
    %4186 = vmatprep.subr.bf16.mxu0 %v3675
    %4187 = vmatpush1.bf16.msra.mxu0 %v3674
    %4188 = vmatprep.subr.bf16.mxu0 %v3682
    %4189 = vmatpush1.bf16.msra.mxu0 %v3681
    %4190 = vmatprep.subr.bf16.mxu0 %v3689
    %4191 = vmatpush1.bf16.msra.mxu0 %v3688
    %4192 = vmatprep.subr.bf16.mxu0 %v3696
    %4193 = vmatpush1.bf16.msra.mxu0 %v3695
    %4194 = vmatprep.subr.bf16.mxu0 %v3703
    %4195 = vmatpush1.bf16.msra.mxu0 %v3702
    %4196 = vmatprep.subr.bf16.mxu0 %v3710
    %4197 = vmatpush1.bf16.msra.mxu0 %v3709
    %4198 = vmatprep.subr.bf16.mxu0 %v3717
    %4199 = vmatpush1.bf16.msra.mxu0 %v3716
    %4200 = vmatprep.subr.bf16.mxu0 %v3724
    %4201 = vmatpush1.bf16.msra.mxu0 %v3723
    %4202 = vmatprep.subr.bf16.mxu0 %v3731
    %4203 = vmatpush1.bf16.msra.mxu0 %v3730
    %4204 = vmatprep.mubr.bf16.mxu0 %v2511
    %4205 = vmatmul.mubr.bf16.gmra.mrb[0].mxu0 %v2510
    %v4206 = vpop.f32.mrb[0].mxu0
    %v4207 = vadd.f32 %v4164, %v4206
    %v4208 = vpop.f32.mrb[0].mxu0
    %v4209 = vadd.f32 %v4166, %v4208
    %v4210 = vpop.f32.mrb[0].mxu0
    %v4211 = vadd.f32 %v4168, %v4210
    %v4212 = vpop.f32.mrb[0].mxu0
    %v4213 = vadd.f32 %v4170, %v4212
    %4214 = vdwg.mxu0
    %4215 = vmatprep.subr.bf16.mxu0 0
    %4216 = vmatpush1.bf16.msra.mxu0 %v3515
    %4217 = vmatprep.subr.bf16.mxu0 0
    %4218 = vmatpush1.bf16.msra.mxu0 %v3522
    %4219 = vmatprep.subr.bf16.mxu0 0
    %4220 = vmatpush1.bf16.msra.mxu0 %v3529
    %4221 = vmatprep.subr.bf16.mxu0 0
    %4222 = vmatpush1.bf16.msra.mxu0 %v3536
    %4223 = vmatprep.subr.bf16.mxu0 0
    %4224 = vmatpush1.bf16.msra.mxu0 %v3543
    %4225 = vmatprep.subr.bf16.mxu0 0
    %4226 = vmatpush1.bf16.msra.mxu0 %v3550
    %4227 = vmatprep.subr.bf16.mxu0 0
    %4228 = vmatpush1.bf16.msra.mxu0 %v3557
    %4229 = vmatprep.subr.bf16.mxu0 0
    %4230 = vmatpush1.bf16.msra.mxu0 %v3564
    %4231 = vmatprep.subr.bf16.mxu0 0
    %4232 = vmatpush1.bf16.msra.mxu0 %v3571
    %4233 = vmatprep.subr.bf16.mxu0 0
    %4234 = vmatpush1.bf16.msra.mxu0 %v3578
    %4235 = vmatprep.subr.bf16.mxu0 0
    %4236 = vmatpush1.bf16.msra.mxu0 %v3585
    %4237 = vmatprep.subr.bf16.mxu0 0
    %4238 = vmatpush1.bf16.msra.mxu0 %v3592
    %4239 = vmatprep.subr.bf16.mxu0 0
    %4240 = vmatpush1.bf16.msra.mxu0 %v3599
    %4241 = vmatprep.subr.bf16.mxu0 0
    %4242 = vmatpush1.bf16.msra.mxu0 %v3606
    %4243 = vmatprep.subr.bf16.mxu0 0
    %4244 = vmatpush1.bf16.msra.mxu0 %v3613
    %4245 = vmatprep.subr.bf16.mxu0 0
    %4246 = vmatpush1.bf16.msra.mxu0 %v3620
    %4247 = vmatprep.mubr.bf16.mxu0 %v2509
    %4248 = vmatmul.mubr.bf16.gmra.mrb[0].mxu0 %v2508
    %v4249 = vpop.f32.mrb[0].mxu0
    %v4250 = vadd.f32 %v2797, %v4249
    %v4251 = vpop.f32.mrb[0].mxu0
    %v4252 = vpop.f32.mrb[0].mxu0
    %v4253 = vadd.f32 %v2797, %v4252
    %v4254 = vpop.f32.mrb[0].mxu0
    %4255 = vdwg.mxu0
    %4256 = vmatprep.subr.bf16.mxu0 0
    %4257 = vmatpush1.bf16.msra.mxu0 %v3627
    %4258 = vmatprep.subr.bf16.mxu0 0
    %4259 = vmatpush1.bf16.msra.mxu0 %v3634
    %4260 = vmatprep.subr.bf16.mxu0 0
    %4261 = vmatpush1.bf16.msra.mxu0 %v3641
    %4262 = vmatprep.subr.bf16.mxu0 0
    %4263 = vmatpush1.bf16.msra.mxu0 %v3648
    %4264 = vmatprep.subr.bf16.mxu0 0
    %4265 = vmatpush1.bf16.msra.mxu0 %v3655
    %4266 = vmatprep.subr.bf16.mxu0 0
    %4267 = vmatpush1.bf16.msra.mxu0 %v3662
    %4268 = vmatprep.subr.bf16.mxu0 0
    %4269 = vmatpush1.bf16.msra.mxu0 %v3669
    %4270 = vmatprep.subr.bf16.mxu0 0
    %4271 = vmatpush1.bf16.msra.mxu0 %v3676
    %4272 = vmatprep.subr.bf16.mxu0 0
    %4273 = vmatpush1.bf16.msra.mxu0 %v3683
    %4274 = vmatprep.subr.bf16.mxu0 0
    %4275 = vmatpush1.bf16.msra.mxu0 %v3690
    %4276 = vmatprep.subr.bf16.mxu0 0
    %4277 = vmatpush1.bf16.msra.mxu0 %v3697
    %4278 = vmatprep.subr.bf16.mxu0 0
    %4279 = vmatpush1.bf16.msra.mxu0 %v3704
    %4280 = vmatprep.subr.bf16.mxu0 0
    %4281 = vmatpush1.bf16.msra.mxu0 %v3711
    %4282 = vmatprep.subr.bf16.mxu0 0
    %4283 = vmatpush1.bf16.msra.mxu0 %v3718
    %4284 = vmatprep.subr.bf16.mxu0 0
    %4285 = vmatpush1.bf16.msra.mxu0 %v3725
    %4286 = vmatprep.subr.bf16.mxu0 0
    %4287 = vmatpush1.bf16.msra.mxu0 %v3732
    %4288 = vmatprep.mubr.bf16.mxu0 %v2511
    %4289 = vmatmul.mubr.bf16.gmra.mrb[0].mxu0 %v2510
    %v4290 = vpop.f32.mrb[0].mxu0
    %v4291 = vadd.f32 %v4250, %v4290
    %v4292 = vpop.f32.mrb[0].mxu0
    %v4293 = vpop.f32.mrb[0].mxu0
    %v4294 = vadd.f32 %v4253, %v4293
    %v4295 = vpop.f32.mrb[0].mxu0
    %4296 = vdwg.mxu0
    %v4297 = vxor.u32 %v4035, 2147483648
    %v4298 = vxor.u32 %v4037, 2147483648
    %v4299 = vxor.u32 %v4121, 2147483648
    %v4300 = vxor.u32 %v4123, 2147483648
    %v4301 = vxor.u32 %v4207, 2147483648
    %v4302 = vxor.u32 %v4209, 2147483648
    %v4303 = vxor.u32 %v4291, 2147483648
    %v4304 = vxor.u32 %v4039, 2147483648
    %v4305 = vxor.u32 %v4041, 2147483648
    %v4306 = vxor.u32 %v4125, 2147483648
    %v4307 = vxor.u32 %v4127, 2147483648
    %v4308 = vxor.u32 %v4211, 2147483648
    %v4309 = vxor.u32 %v4213, 2147483648
    %v4310 = vxor.u32 %v4294, 2147483648
    %v4311 = vmul.f32 %v4297, 1.442695
    %v4312 = vpow.pop %v4311
    %v4313 = vmul.f32 %v4298, 1.442695
    %v4314 = vpow.pop %v4313
    %v4315 = vmul.f32 %v4299, 1.442695
    %v4316 = vpow.pop %v4315
    %v4317 = vmul.f32 %v4300, 1.442695
    %v4318 = vpow.pop %v4317
    %v4319 = vmul.f32 %v4301, 1.442695
    %v4320 = vpow.pop %v4319
    %v4321 = vmul.f32 %v4302, 1.442695
    %v4322 = vpow.pop %v4321
    %v4323 = vmul.f32 %v4303, 1.442695
    %v4324 = vpow.pop %v4323
    %v4325 = vmul.f32 %v4304, 1.442695
    %v4326 = vpow.pop %v4325
    %v4327 = vmul.f32 %v4305, 1.442695
    %v4328 = vpow.pop %v4327
    %v4329 = vmul.f32 %v4306, 1.442695
    %v4330 = vpow.pop %v4329
    %v4331 = vmul.f32 %v4307, 1.442695
    %v4332 = vpow.pop %v4331
    %v4333 = vmul.f32 %v4308, 1.442695
    %v4334 = vpow.pop %v4333
    %v4335 = vmul.f32 %v4309, 1.442695
    %v4336 = vpow.pop %v4335
    %v4337 = vmul.f32 %v4310, 1.442695
    %v4338 = vpow.pop %v4337
    %v4339 = vadd.f32 %v4312, 1.0
    %v4340 = vadd.f32 %v4314, 1.0
    %v4341 = vadd.f32 %v4316, 1.0
    %v4342 = vadd.f32 %v4318, 1.0
    %v4343 = vadd.f32 %v4320, 1.0
    %v4344 = vadd.f32 %v4322, 1.0
    %v4345 = vadd.f32 %v4324, 1.0
    %v4346 = vadd.f32 %v4326, 1.0
    %v4347 = vadd.f32 %v4328, 1.0
    %v4348 = vadd.f32 %v4330, 1.0
    %v4349 = vadd.f32 %v4332, 1.0
    %v4350 = vadd.f32 %v4334, 1.0
    %v4351 = vadd.f32 %v4336, 1.0
    %v4352 = vadd.f32 %v4338, 1.0
    %v4353 = vrcp.pop %v4339
    %v4354 = vmul.f32 1.0, %v4353
    %v4355 = vrcp.pop %v4340
    %v4356 = vmul.f32 1.0, %v4355
    %v4357 = vrcp.pop %v4341
    %v4358 = vmul.f32 1.0, %v4357
    %v4359 = vrcp.pop %v4342
    %v4360 = vmul.f32 1.0, %v4359
    %v4361 = vrcp.pop %v4343
    %v4362 = vmul.f32 1.0, %v4361
    %v4363 = vrcp.pop %v4344
    %v4364 = vmul.f32 1.0, %v4363
    %v4365 = vrcp.pop %v4345
    %v4366 = vmul.f32 1.0, %v4365
    %v4367 = vrcp.pop %v4346
    %v4368 = vmul.f32 1.0, %v4367
    %v4369 = vrcp.pop %v4347
    %v4370 = vmul.f32 1.0, %v4369
    %v4371 = vrcp.pop %v4348
    %v4372 = vmul.f32 1.0, %v4371
    %v4373 = vrcp.pop %v4349
    %v4374 = vmul.f32 1.0, %v4373
    %v4375 = vrcp.pop %v4350
    %v4376 = vmul.f32 1.0, %v4375
    %v4377 = vrcp.pop %v4351
    %v4378 = vmul.f32 1.0, %v4377
    %v4379 = vrcp.pop %v4352
    %v4380 = vmul.f32 1.0, %v4379
    %v4381 = vpack.c.bf16 %v4368, %v4354
    %v4382 = vpack.c.bf16 %v4370, %v4356
    %v4383 = vpack.c.bf16 %v4372, %v4358
    %v4384 = vpack.c.bf16 %v4374, %v4360
    %v4385 = vpack.c.bf16 %v4376, %v4362
    %v4386 = vpack.c.bf16 %v4378, %v4364
    %v4387 = vpack.c.bf16 %v4380, %v4366
    %v4395 = vunpack.c.l.b16 %v4381
    %v4396 = vunpack.c.l.b16 %v4382
    %v4397 = vunpack.c.l.b16 %v4383
    %v4398 = vunpack.c.l.b16 %v4384
    %v4399 = vunpack.c.l.b16 %v4385
    %v4400 = vunpack.c.l.b16 %v4386
    %v4401 = vunpack.c.l.b16 %v4387
    %v4402 = vunpack.c.h.b16 %v4381
    %v4403 = vunpack.c.h.b16 %v4382
    %v4404 = vunpack.c.h.b16 %v4383
    %v4405 = vunpack.c.h.b16 %v4384
    %v4406 = vunpack.c.h.b16 %v4385
    %v4407 = vunpack.c.h.b16 %v4386
    %v4408 = vunpack.c.h.b16 %v4387
    %v4409 = vpack.c.b16 %v4396, %v4395
    %v4410 = vpack.c.b16 %v4398, %v4397
    %v4411 = vpack.c.b16 %v4400, %v4399
    %v4412 = vpack.c.b16 %v4401, %v4401
    %v4413 = vpack.c.b16 %v4403, %v4402
    %v4414 = vpack.c.b16 %v4405, %v4404
    %v4415 = vpack.c.b16 %v4407, %v4406
    %v4416 = vpack.c.b16 %v4408, %v4408
    %4425 = vst [vmem:[#allocation13] sm:$0xff] %v4409
    %4426 = vst [vmem:[#allocation13 + $0x8] sm:$0xff] %v4410
    %4427 = vst [vmem:[#allocation13 + $0x10] sm:$0xff] %v4411
    %4428 = vst [vmem:[#allocation13 + $0x18] sm:$0xf] %v4412
    %4429 = vst [vmem:[#allocation13 + $0x1c] sm:$0xff] %v4413
    %4430 = vst [vmem:[#allocation13 + $0x24] sm:$0xff] %v4414
    %4431 = vst [vmem:[#allocation13 + $0x2c] sm:$0xff] %v4415
    %4432 = vst [vmem:[#allocation13 + $0x34] sm:$0xf] %v4416
    // Predicated region
    $region66: #{tpu_custom_call.1} parent=1 // pred_check
      _
    $region67: #{tpu_custom_call.1} parent=1 // pred_check_branch
      %4434 = sbr.rel (0) target = $region69
    $region68: #{tpu_custom_call.1} parent=1 // pred_region
      %s4436 = ssub.s32 896, 896
      %4437 = vsyncadd [#allocation4], %s4436
      %s4438 = sshll.u32 [#allocation13], 4
      %s4439 = int_to_ptr.vmem [resolvable:$true] %s4438
      %4444 = dma.vmem_to_hbm [thread:$0]  %s4439, 896, %s10, [#allocation4], 448, 448, 28
    $region69: #{tpu_custom_call.1} parent=1 // pred_fallthru
      _
    // Predicated region
    $region70: #{tpu_custom_call.1} parent=1 // pred_check
      _
    $region71: #{tpu_custom_call.1} parent=1 // pred_check_branch
      %4446 = sbr.rel (0) target = $region73
    $region72: #{tpu_custom_call.1} parent=1 // pred_region
      %s4448 = ssub.s32 512, 512
      %4449 = vsyncadd [#allocation15], %s4448
      %s4450 = sshll.u32 [#allocation14], 4
      %s4451 = int_to_ptr.vmem [resolvable:$true] %s4450
      %4456 = dma.vmem_to_hbm [thread:$0]  %s4451, 512, %s11, [#allocation15], 256, 256, 16
    $region73: #{tpu_custom_call.1} parent=1 // pred_fallthru
      _
    // Predicated region
    $region74: #{tpu_custom_call.1} parent=1 // pred_check
      _
    $region75: #{tpu_custom_call.1} parent=1 // pred_check_branch
      %4458 = sbr.rel (0) target = $region77
    $region76: #{tpu_custom_call.1} parent=1 // pred_region
      %4459 = dma.done [#allocation4], 896
    $region77: #{tpu_custom_call.1} parent=1 // pred_fallthru
      _
    // Predicated region
    $region78: #{tpu_custom_call.1} parent=1 // pred_check
      _
    $region79: #{tpu_custom_call.1} parent=1 // pred_check_branch
      %4461 = sbr.rel (0) target = $region81
    $region80: #{tpu_custom_call.1} parent=1 // pred_region
      %4462 = dma.done [#allocation15], 512
    $region81: #{tpu_custom_call.1} parent=1 // pred_fallthru
      _
    %4463 = vsyncpa [#allocation3], 1
    %4464 = vsyncpa [#allocation6], 1
    %4465 = vsyncpa [#allocation9], 1
    %4466 = vsyncpa [#allocation12], 1
    %4467 = vsyncpa [#allocation4], 1
    %4468 = vsyncpa [#allocation15], 1

</llo_original>
